<compile_context>
chip_gen: v7x
topology: tpu7x:2x2x1
jax: 0.10.0
libtpu: 0.0.40
codegen_flags: <defaults>
</compile_context>

<pallas_src>
import functools
import math

import jax
import jax.numpy as jnp
import numpy as np
from jax.experimental import pallas as pl
from jax.experimental.pallas import tpu as pltpu


def _layer_norm(z, gamma, beta, eps=1e-5):
    mu = jnp.mean(z, axis=-1, keepdims=True)
    var = jnp.mean((z - mu) ** 2, axis=-1, keepdims=True)
    return (z - mu) * jax.lax.rsqrt(var + eps) * gamma + beta


def transformer_block_kernel(
        x_q_ref, x_full_ref,
        ln1_g, ln1_b,
        wq, bq, wk, bk, wv, bv, wo, bo,
        ln2_g, ln2_b,
        w1, b1, w2, b2,
        o_ref,
        xres_ref, xn2_ref, acc_ref,
        *, num_heads):
    """Grid = (batch, seq_tile, expand_tile).  Attention + LN2 run once per
    (batch, seq_tile) at e == 0; the FFN is accumulated over expand tiles."""
    e = pl.program_id(2)
    f32, bf16 = jnp.float32, jnp.bfloat16

    # ---------------- attention + residual1 + LayerNorm2 (once per seq tile) --
    @pl.when(e == 0)
    def _attention():
        x = x_q_ref[...].astype(f32)        # (TS, H)  rows owned by this tile
        xf = x_full_ref[...].astype(f32)    # (S, H)   full sequence (keys/vals)
        TS, H = x.shape
        hd = H // num_heads
        scale = 1.0 / math.sqrt(hd)

        # LayerNorm 1 in f32, matmul operands cast to bf16.
        xn_q = _layer_norm(x, ln1_g[...], ln1_b[...]).astype(bf16)
        xn_f = _layer_norm(xf, ln1_g[...], ln1_b[...]).astype(bf16)

        attn = jnp.zeros((TS, H), f32)
        for h in range(num_heads):          # static unroll; weights indexed on
            # leading ref dim -> no lane-dim slicing, no concatenation.
            qh = jnp.dot(xn_q, wq[h], preferred_element_type=f32) + bq[h]  # (TS, hd)
            kh = jnp.dot(xn_f, wk[h], preferred_element_type=f32) + bk[h]  # (S, hd)
            vh = jnp.dot(xn_f, wv[h], preferred_element_type=f32) + bv[h]  # (S, hd)

            # q·k^T via dot_general contracting the head dim (no explicit .T).
            s = jax.lax.dot_general(
                qh.astype(bf16), kh.astype(bf16),
                dimension_numbers=(((1,), (1,)), ((), ())),
                preferred_element_type=f32) * scale                        # (TS, S)

            s = s - jnp.max(s, axis=-1, keepdims=True)
            p = jnp.exp(s)
            p = p * pl.reciprocal(jnp.sum(p, axis=-1, keepdims=True), approx=True)

            oh = jnp.dot(p.astype(bf16), vh.astype(bf16),
                         preferred_element_type=f32)                       # (TS, hd)
            # per-head slice of the output projection, accumulated
            # (== concat(heads) @ Wo).
            attn = attn + jnp.dot(oh.astype(bf16), wo[h],
                                  preferred_element_type=f32)
        attn = attn + bo[...]

        xres = x + attn                                   # residual 1 (f32)
        xres_ref[...] = xres
        xn2_ref[...] = _layer_norm(xres, ln2_g[...], ln2_b[...]).astype(bf16)
        acc_ref[...] = jnp.zeros_like(acc_ref)

    # ---------------- FFN, streamed over expand-dim tiles ---------------------
    h1 = jnp.dot(xn2_ref[...], w1[...], preferred_element_type=f32) + b1[...]
    h1 = 0.5 * h1 * (1.0 + jax.lax.erf(h1 * (1.0 / math.sqrt(2.0))))  # exact GELU
    acc_ref[...] += jnp.dot(h1.astype(bf16), w2[...], preferred_element_type=f32)

    @pl.when(e == pl.num_programs(2) - 1)
    def _finalize():
        o_ref[...] = (xres_ref[...] + acc_ref[...] + b2[...]).astype(o_ref.dtype)


def _prep_params(params, num_heads):
    """Cast matmul weights to bf16, keep LN params / biases f32, and pre-split
    attention weights per head (free, done once in plain JAX outside kernel)."""
    H = params['wq'].shape[0]
    E = params['w1'].shape[1]
    hd = H // num_heads
    f32, bf16 = jnp.float32, jnp.bfloat16

    def split_w_out(w):     # (H, H) -> (nh, H, hd)   (output columns per head)
        return w.reshape(H, num_heads, hd).transpose(1, 0, 2)

    def split_b_out(b):     # (1, H) -> (nh, 1, hd)
        return b.reshape(1, num_heads, hd).transpose(1, 0, 2)

    weights = [
        params['ln1_g'].astype(f32), params['ln1_b'].astype(f32),
        split_w_out(params['wq']).astype(bf16), split_b_out(params['bq']).astype(f32),
        split_w_out(params['wk']).astype(bf16), split_b_out(params['bk']).astype(f32),
        split_w_out(params['wv']).astype(bf16), split_b_out(params['bv']).astype(f32),
        params['wo'].reshape(num_heads, hd, H).astype(bf16),   # (nh, hd, H)
        params['bo'].astype(f32),
        params['ln2_g'].astype(f32), params['ln2_b'].astype(f32),
        params['w1'].astype(bf16), params['b1'].astype(f32),
        params['w2'].astype(bf16), params['b2'].astype(f32),
    ]
    return weights, E


def transformer_block(x, params, num_heads, *, seq_tile=256, expand_tile=512):
    B, S, H = x.shape
    assert H % num_heads == 0, "hidden_size must be divisible by num_heads"
    weights, E = _prep_params(params, num_heads)

    TS = S if S <= seq_tile else seq_tile
    assert S % TS == 0, "seq length must be divisible by the sequence tile"
    TE = E if E <= expand_tile else expand_tile
    assert E % TE == 0, "expand_size must be divisible by the expand tile"

    (ln1_g, ln1_b, wq, bq, wk, bk, wv, bv, wo, bo,
     ln2_g, ln2_b, w1, b1, w2, b2) = weights

    def resident(w):
        nd = w.ndim
        return pl.BlockSpec(w.shape, lambda b, s, e, _nd=nd: (0,) * _nd)

    in_specs = [
        pl.BlockSpec((None, TS, H), lambda b, s, e: (b, s, 0)),   # x (query rows)
        pl.BlockSpec((None, S, H), lambda b, s, e: (b, 0, 0)),    # x (full seq, K/V)
        resident(ln1_g), resident(ln1_b),
        resident(wq), resident(bq),
        resident(wk), resident(bk),
        resident(wv), resident(bv),
        resident(wo), resident(bo),
        resident(ln2_g), resident(ln2_b),
        pl.BlockSpec((H, TE), lambda b, s, e: (0, e)),            # w1 E-tile
        pl.BlockSpec((1, TE), lambda b, s, e: (0, e)),            # b1 E-tile
        pl.BlockSpec((TE, H), lambda b, s, e: (e, 0)),            # w2 E-tile
        resident(b2),
    ]

    kernel = functools.partial(transformer_block_kernel, num_heads=num_heads)
    return pl.pallas_call(
        kernel,
        out_shape=jax.ShapeDtypeStruct((B, S, H), x.dtype),
        grid=(B, S // TS, E // TE),
        in_specs=in_specs,
        out_specs=pl.BlockSpec((None, TS, H), lambda b, s, e: (b, s, 0)),
        scratch_shapes=[
            pltpu.VMEM((TS, H), jnp.float32),    # x + attn residual
            pltpu.VMEM((TS, H), jnp.bfloat16),   # LayerNorm2 output (FFN operand)
            pltpu.VMEM((TS, H), jnp.float32),    # FFN accumulator
        ],
        compiler_params=pltpu.CompilerParams(
            dimension_semantics=("parallel", "parallel", "arbitrary"),
            vmem_limit_bytes=48 * 1024 * 1024),
    )(x, x, *weights)


def reference_block(x, params, num_heads):
    """Pure-JAX f32 reference for correctness checking."""
    B, S, H = x.shape
    hd = H // num_heads
    eps = 1e-5

    def ln(z, g, b):
        mu = jnp.mean(z, axis=-1, keepdims=True)
        var = jnp.mean((z - mu) ** 2, axis=-1, keepdims=True)
        return (z - mu) * jax.lax.rsqrt(var + eps) * g + b

    xn = ln(x, params['ln1_g'], params['ln1_b'])
    q = xn @ params['wq'] + params['bq']
    k = xn @ params['wk'] + params['bk']
    v = xn @ params['wv'] + params['bv']
    q = q.reshape(B, S, num_heads, hd).transpose(0, 2, 1, 3)
    k = k.reshape(B, S, num_heads, hd).transpose(0, 2, 1, 3)
    v = v.reshape(B, S, num_heads, hd).transpose(0, 2, 1, 3)
    s = jnp.einsum('bhqd,bhkd->bhqk', q, k) / math.sqrt(hd)
    p = jax.nn.softmax(s, axis=-1)
    o = jnp.einsum('bhqk,bhkd->bhqd', p, v).transpose(0, 2, 1, 3).reshape(B, S, H)
    o = o @ params['wo'] + params['bo']
    x = x + o
    xn2 = ln(x, params['ln2_g'], params['ln2_b'])
    h1 = xn2 @ params['w1'] + params['b1']
    h1 = 0.5 * h1 * (1.0 + jax.lax.erf(h1 / math.sqrt(2.0)))
    h2 = h1 @ params['w2'] + params['b2']
    return x + h2


def init_params(key, hidden_size, expand_size):
    ks = jax.random.split(key, 8)

    def lin(k, fan_in, fan_out):
        bound = 1.0 / math.sqrt(fan_in)
        return jax.random.uniform(k, (fan_in, fan_out), jnp.float32, -bound, bound)

    H, E = hidden_size, expand_size
    return {
        'ln1_g': jnp.ones((1, H), jnp.float32),
        'ln1_b': jnp.zeros((1, H), jnp.float32),
        'wq': lin(ks[0], H, H), 'bq': jnp.zeros((1, H), jnp.float32),
        'wk': lin(ks[1], H, H), 'bk': jnp.zeros((1, H), jnp.float32),
        'wv': lin(ks[2], H, H), 'bv': jnp.zeros((1, H), jnp.float32),
        'wo': lin(ks[3], H, H), 'bo': jnp.zeros((1, H), jnp.float32),
        'ln2_g': jnp.ones((1, H), jnp.float32),
        'ln2_b': jnp.zeros((1, H), jnp.float32),
        'w1': lin(ks[4], H, E),
        'b1': 0.01 * jax.random.normal(ks[5], (1, E), jnp.float32),
        'w2': lin(ks[6], E, H),
        'b2': 0.01 * jax.random.normal(ks[7], (1, H), jnp.float32),
    }


if __name__ == "__main__":
    B, S, H = 2, 8, 32        # batch, seq, hidden
    num_heads = 4
    expand = 64

    key = jax.random.PRNGKey(0)
    kx, kp = jax.random.split(key)
    x = jax.random.normal(kx, (B, S, H), jnp.float32)
    params = init_params(kp, H, expand)

    out = transformer_block(x, params, num_heads)
    out = jax.block_until_ready(out)

    ref = reference_block(x, params, num_heads)
    np.testing.assert_allclose(np.asarray(out), np.asarray(ref),
                               rtol=3e-2, atol=3e-2)
    print("KERNEL_OK")
</pallas_src>

<mosaic_0001>
module attributes {stable_mosaic.version = 11 : i64} {
  func.func @transformer_block_kernel(%arg0: i32, %arg1: i32, %arg2: i32, %arg3: memref<1x8x32xf32, #tpu.memory_space<vmem>>, %arg4: memref<1x8x32xf32, #tpu.memory_space<vmem>>, %arg5: memref<1x32xf32, #tpu.memory_space<vmem>>, %arg6: memref<1x32xf32, #tpu.memory_space<vmem>>, %arg7: memref<4x32x8xbf16, #tpu.memory_space<vmem>>, %arg8: memref<4x1x8xf32, #tpu.memory_space<vmem>>, %arg9: memref<4x32x8xbf16, #tpu.memory_space<vmem>>, %arg10: memref<4x1x8xf32, #tpu.memory_space<vmem>>, %arg11: memref<4x32x8xbf16, #tpu.memory_space<vmem>>, %arg12: memref<4x1x8xf32, #tpu.memory_space<vmem>>, %arg13: memref<4x8x32xbf16, #tpu.memory_space<vmem>>, %arg14: memref<1x32xf32, #tpu.memory_space<vmem>>, %arg15: memref<1x32xf32, #tpu.memory_space<vmem>>, %arg16: memref<1x32xf32, #tpu.memory_space<vmem>>, %arg17: memref<32x64xbf16, #tpu.memory_space<vmem>>, %arg18: memref<1x64xf32, #tpu.memory_space<vmem>>, %arg19: memref<64x32xbf16, #tpu.memory_space<vmem>>, %arg20: memref<1x32xf32, #tpu.memory_space<vmem>>, %arg21: memref<1x8x32xf32, #tpu.memory_space<vmem>>, %arg22: memref<8x32xf32, #tpu.memory_space<vmem>>, %arg23: memref<8x32xbf16, #tpu.memory_space<vmem>>, %arg24: memref<8x32xf32, #tpu.memory_space<vmem>>) attributes {dimension_semantics = [#tpu.dimension_semantics<parallel>, #tpu.dimension_semantics<parallel>, #tpu.dimension_semantics<arbitrary>], iteration_bounds = array<i64: 2, 1, 1>, scalar_prefetch = 0 : i64, scratch_operands = 3 : i64, tpu.core_type = #tpu.core_type<tc>, window_params = [{transform_indices = @transform_0, window_bounds = array<i64: 1, 8, 32>}, {transform_indices = @transform_1, window_bounds = array<i64: 1, 8, 32>}, {pipeline_mode = #tpu.pipeline_mode<synchronous>, transform_indices = @transform_2, window_bounds = array<i64: 1, 32>}, {pipeline_mode = #tpu.pipeline_mode<synchronous>, transform_indices = @transform_3, window_bounds = array<i64: 1, 32>}, {pipeline_mode = #tpu.pipeline_mode<synchronous>, transform_indices = @transform_4, window_bounds = array<i64: 4, 32, 8>}, {pipeline_mode = #tpu.pipeline_mode<synchronous>, transform_indices = @transform_5, window_bounds = array<i64: 4, 1, 8>}, {pipeline_mode = #tpu.pipeline_mode<synchronous>, transform_indices = @transform_6, window_bounds = array<i64: 4, 32, 8>}, {pipeline_mode = #tpu.pipeline_mode<synchronous>, transform_indices = @transform_7, window_bounds = array<i64: 4, 1, 8>}, {pipeline_mode = #tpu.pipeline_mode<synchronous>, transform_indices = @transform_8, window_bounds = array<i64: 4, 32, 8>}, {pipeline_mode = #tpu.pipeline_mode<synchronous>, transform_indices = @transform_9, window_bounds = array<i64: 4, 1, 8>}, {pipeline_mode = #tpu.pipeline_mode<synchronous>, transform_indices = @transform_10, window_bounds = array<i64: 4, 8, 32>}, {pipeline_mode = #tpu.pipeline_mode<synchronous>, transform_indices = @transform_11, window_bounds = array<i64: 1, 32>}, {pipeline_mode = #tpu.pipeline_mode<synchronous>, transform_indices = @transform_12, window_bounds = array<i64: 1, 32>}, {pipeline_mode = #tpu.pipeline_mode<synchronous>, transform_indices = @transform_13, window_bounds = array<i64: 1, 32>}, {transform_indices = @transform_14, window_bounds = array<i64: 32, 64>}, {transform_indices = @transform_15, window_bounds = array<i64: 1, 64>}, {transform_indices = @transform_16, window_bounds = array<i64: 64, 32>}, {pipeline_mode = #tpu.pipeline_mode<synchronous>, transform_indices = @transform_17, window_bounds = array<i64: 1, 32>}, {transform_indices = @transform_18, window_bounds = array<i64: 1, 8, 32>}]} {
    %c0_i32 = arith.constant 0 : i32
    %0 = arith.cmpi eq, %arg2, %c0_i32 : i32
    %1 = arith.extui %0 : i1 to i32
    %c0_i32_0 = arith.constant 0 : i32
    %2 = arith.cmpi ne, %1, %c0_i32_0 : i32
    scf.if %2 {
      %c0_18 = arith.constant 0 : index
      %c0_19 = arith.constant 0 : index
      %c0_20 = arith.constant 0 : index
      %26 = vector.load %arg3[%c0_18, %c0_19, %c0_20] : memref<1x8x32xf32, #tpu.memory_space<vmem>>, vector<1x8x32xf32>
      %27 = vector.shape_cast %26 : vector<1x8x32xf32> to vector<8x32xf32>
      %c0_21 = arith.constant 0 : index
      %c0_22 = arith.constant 0 : index
      %c0_23 = arith.constant 0 : index
      %28 = vector.load %arg4[%c0_21, %c0_22, %c0_23] : memref<1x8x32xf32, #tpu.memory_space<vmem>>, vector<1x8x32xf32>
      %29 = vector.shape_cast %28 : vector<1x8x32xf32> to vector<8x32xf32>
      %c0_24 = arith.constant 0 : index
      %c0_25 = arith.constant 0 : index
      %30 = vector.load %arg5[%c0_24, %c0_25] : memref<1x32xf32, #tpu.memory_space<vmem>>, vector<1x32xf32>
      %c0_26 = arith.constant 0 : index
      %c0_27 = arith.constant 0 : index
      %31 = vector.load %arg6[%c0_26, %c0_27] : memref<1x32xf32, #tpu.memory_space<vmem>>, vector<1x32xf32>
      %cst_28 = arith.constant dense<0.000000e+00> : vector<8xf32>
      %32 = vector.multi_reduction <add>, %27, %cst_28 [1] : vector<8x32xf32> to vector<8xf32>
      %33 = vector.shape_cast %32 : vector<8xf32> to vector<8x1xf32>
      %cst_29 = arith.constant 3.200000e+01 : f32
      %34 = vector.broadcast %cst_29 : f32 to vector<8x1xf32>
      %35 = arith.divf %33, %34 : vector<8x1xf32>
      %36 = vector.broadcast %35 : vector<8x1xf32> to vector<8x32xf32>
      %37 = arith.subf %27, %36 : vector<8x32xf32>
      %38 = arith.mulf %37, %37 : vector<8x32xf32>
      %cst_30 = arith.constant dense<0.000000e+00> : vector<8xf32>
      %39 = vector.multi_reduction <add>, %38, %cst_30 [1] : vector<8x32xf32> to vector<8xf32>
      %40 = vector.shape_cast %39 : vector<8xf32> to vector<8x1xf32>
      %cst_31 = arith.constant 3.200000e+01 : f32
      %41 = vector.broadcast %cst_31 : f32 to vector<8x1xf32>
      %42 = arith.divf %40, %41 : vector<8x1xf32>
      %43 = vector.broadcast %35 : vector<8x1xf32> to vector<8x32xf32>
      %44 = arith.subf %27, %43 : vector<8x32xf32>
      %cst_32 = arith.constant 9.99999974E-6 : f32
      %45 = vector.broadcast %cst_32 : f32 to vector<8x1xf32>
      %46 = arith.addf %42, %45 : vector<8x1xf32>
      %47 = math.rsqrt %46 : vector<8x1xf32>
      %48 = vector.broadcast %47 : vector<8x1xf32> to vector<8x32xf32>
      %49 = arith.mulf %44, %48 : vector<8x32xf32>
      %50 = vector.broadcast %30 : vector<1x32xf32> to vector<8x32xf32>
      %51 = arith.mulf %49, %50 : vector<8x32xf32>
      %52 = vector.broadcast %31 : vector<1x32xf32> to vector<8x32xf32>
      %53 = arith.addf %51, %52 : vector<8x32xf32>
      %54 = arith.truncf %53 : vector<8x32xf32> to vector<8x32xbf16>
      %c0_33 = arith.constant 0 : index
      %c0_34 = arith.constant 0 : index
      %55 = vector.load %arg5[%c0_33, %c0_34] : memref<1x32xf32, #tpu.memory_space<vmem>>, vector<1x32xf32>
      %c0_35 = arith.constant 0 : index
      %c0_36 = arith.constant 0 : index
      %56 = vector.load %arg6[%c0_35, %c0_36] : memref<1x32xf32, #tpu.memory_space<vmem>>, vector<1x32xf32>
      %cst_37 = arith.constant dense<0.000000e+00> : vector<8xf32>
      %57 = vector.multi_reduction <add>, %29, %cst_37 [1] : vector<8x32xf32> to vector<8xf32>
      %58 = vector.shape_cast %57 : vector<8xf32> to vector<8x1xf32>
      %cst_38 = arith.constant 3.200000e+01 : f32
      %59 = vector.broadcast %cst_38 : f32 to vector<8x1xf32>
      %60 = arith.divf %58, %59 : vector<8x1xf32>
      %61 = vector.broadcast %60 : vector<8x1xf32> to vector<8x32xf32>
      %62 = arith.subf %29, %61 : vector<8x32xf32>
      %63 = arith.mulf %62, %62 : vector<8x32xf32>
      %cst_39 = arith.constant dense<0.000000e+00> : vector<8xf32>
      %64 = vector.multi_reduction <add>, %63, %cst_39 [1] : vector<8x32xf32> to vector<8xf32>
      %65 = vector.shape_cast %64 : vector<8xf32> to vector<8x1xf32>
      %cst_40 = arith.constant 3.200000e+01 : f32
      %66 = vector.broadcast %cst_40 : f32 to vector<8x1xf32>
      %67 = arith.divf %65, %66 : vector<8x1xf32>
      %68 = vector.broadcast %60 : vector<8x1xf32> to vector<8x32xf32>
      %69 = arith.subf %29, %68 : vector<8x32xf32>
      %cst_41 = arith.constant 9.99999974E-6 : f32
      %70 = vector.broadcast %cst_41 : f32 to vector<8x1xf32>
      %71 = arith.addf %67, %70 : vector<8x1xf32>
      %72 = math.rsqrt %71 : vector<8x1xf32>
      %73 = vector.broadcast %72 : vector<8x1xf32> to vector<8x32xf32>
      %74 = arith.mulf %69, %73 : vector<8x32xf32>
      %75 = vector.broadcast %55 : vector<1x32xf32> to vector<8x32xf32>
      %76 = arith.mulf %74, %75 : vector<8x32xf32>
      %77 = vector.broadcast %56 : vector<1x32xf32> to vector<8x32xf32>
      %78 = arith.addf %76, %77 : vector<8x32xf32>
      %79 = arith.truncf %78 : vector<8x32xf32> to vector<8x32xbf16>
      %cst_42 = arith.constant 0.000000e+00 : f32
      %80 = vector.broadcast %cst_42 : f32 to vector<8x32xf32>
      %c0_43 = arith.constant 0 : index
      %c0_44 = arith.constant 0 : index
      %c0_45 = arith.constant 0 : index
      %81 = vector.load %arg7[%c0_43, %c0_44, %c0_45] : memref<4x32x8xbf16, #tpu.memory_space<vmem>>, vector<1x32x8xbf16>
      %82 = vector.shape_cast %81 : vector<1x32x8xbf16> to vector<32x8xbf16>
      %cst_46 = arith.constant dense<0.000000e+00> : vector<8x8xf32>
      %83 = tpu.matmul %54, %82, %cst_46 {dimension_numbers = #tpu.dot_dimension_numbers<[1], [0], [0], [1], [0, 0, 1, 1], [], []>} : vector<8x32xbf16>, vector<32x8xbf16>, vector<8x8xf32> -> vector<8x8xf32>
      %c0_47 = arith.constant 0 : index
      %c0_48 = arith.constant 0 : index
      %c0_49 = arith.constant 0 : index
      %84 = vector.load %arg8[%c0_47, %c0_48, %c0_49] : memref<4x1x8xf32, #tpu.memory_space<vmem>>, vector<1x1x8xf32>
      %85 = vector.shape_cast %84 : vector<1x1x8xf32> to vector<1x8xf32>
      %86 = vector.broadcast %85 : vector<1x8xf32> to vector<8x8xf32>
      %87 = arith.addf %83, %86 : vector<8x8xf32>
      %c0_50 = arith.constant 0 : index
      %c0_51 = arith.constant 0 : index
      %c0_52 = arith.constant 0 : index
      %88 = vector.load %arg9[%c0_50, %c0_51, %c0_52] : memref<4x32x8xbf16, #tpu.memory_space<vmem>>, vector<1x32x8xbf16>
      %89 = vector.shape_cast %88 : vector<1x32x8xbf16> to vector<32x8xbf16>
      %cst_53 = arith.constant dense<0.000000e+00> : vector<8x8xf32>
      %90 = tpu.matmul %79, %89, %cst_53 {dimension_numbers = #tpu.dot_dimension_numbers<[1], [0], [0], [1], [0, 0, 1, 1], [], []>} : vector<8x32xbf16>, vector<32x8xbf16>, vector<8x8xf32> -> vector<8x8xf32>
      %c0_54 = arith.constant 0 : index
      %c0_55 = arith.constant 0 : index
      %c0_56 = arith.constant 0 : index
      %91 = vector.load %arg10[%c0_54, %c0_55, %c0_56] : memref<4x1x8xf32, #tpu.memory_space<vmem>>, vector<1x1x8xf32>
      %92 = vector.shape_cast %91 : vector<1x1x8xf32> to vector<1x8xf32>
      %93 = vector.broadcast %92 : vector<1x8xf32> to vector<8x8xf32>
      %94 = arith.addf %90, %93 : vector<8x8xf32>
      %c0_57 = arith.constant 0 : index
      %c0_58 = arith.constant 0 : index
      %c0_59 = arith.constant 0 : index
      %95 = vector.load %arg11[%c0_57, %c0_58, %c0_59] : memref<4x32x8xbf16, #tpu.memory_space<vmem>>, vector<1x32x8xbf16>
      %96 = vector.shape_cast %95 : vector<1x32x8xbf16> to vector<32x8xbf16>
      %cst_60 = arith.constant dense<0.000000e+00> : vector<8x8xf32>
      %97 = tpu.matmul %79, %96, %cst_60 {dimension_numbers = #tpu.dot_dimension_numbers<[1], [0], [0], [1], [0, 0, 1, 1], [], []>} : vector<8x32xbf16>, vector<32x8xbf16>, vector<8x8xf32> -> vector<8x8xf32>
      %c0_61 = arith.constant 0 : index
      %c0_62 = arith.constant 0 : index
      %c0_63 = arith.constant 0 : index
      %98 = vector.load %arg12[%c0_61, %c0_62, %c0_63] : memref<4x1x8xf32, #tpu.memory_space<vmem>>, vector<1x1x8xf32>
      %99 = vector.shape_cast %98 : vector<1x1x8xf32> to vector<1x8xf32>
      %100 = vector.broadcast %99 : vector<1x8xf32> to vector<8x8xf32>
      %101 = arith.addf %97, %100 : vector<8x8xf32>
      %102 = arith.truncf %87 : vector<8x8xf32> to vector<8x8xbf16>
      %103 = arith.truncf %94 : vector<8x8xf32> to vector<8x8xbf16>
      %cst_64 = arith.constant dense<0.000000e+00> : vector<8x8xf32>
      %104 = tpu.matmul %102, %103, %cst_64 {dimension_numbers = #tpu.dot_dimension_numbers<[1], [1], [0], [0], [0, 0, 1, 0], [], []>} : vector<8x8xbf16>, vector<8x8xbf16>, vector<8x8xf32> -> vector<8x8xf32>
      %cst_65 = arith.constant 0.353553385 : f32
      %105 = vector.broadcast %cst_65 : f32 to vector<8x8xf32>
      %106 = arith.mulf %104, %105 : vector<8x8xf32>
      %cst_66 = arith.constant dense<0xFF800000> : vector<8xf32>
      %107 = vector.multi_reduction <maximumf>, %106, %cst_66 [1] : vector<8x8xf32> to vector<8xf32>
      %108 = vector.shape_cast %107 : vector<8xf32> to vector<8x1xf32>
      %109 = vector.broadcast %108 : vector<8x1xf32> to vector<8x8xf32>
      %110 = arith.subf %106, %109 : vector<8x8xf32>
      %111 = math.exp %110 : vector<8x8xf32>
      %cst_67 = arith.constant dense<0.000000e+00> : vector<8xf32>
      %112 = vector.multi_reduction <add>, %111, %cst_67 [1] : vector<8x8xf32> to vector<8xf32>
      %113 = vector.shape_cast %112 : vector<8xf32> to vector<8x1xf32>
      %114 = tpu.reciprocal %113 {approx = true} : vector<8x1xf32> -> vector<8x1xf32>
      %115 = vector.broadcast %114 : vector<8x1xf32> to vector<8x8xf32>
      %116 = arith.mulf %111, %115 : vector<8x8xf32>
      %117 = arith.truncf %116 : vector<8x8xf32> to vector<8x8xbf16>
      %118 = arith.truncf %101 : vector<8x8xf32> to vector<8x8xbf16>
      %cst_68 = arith.constant dense<0.000000e+00> : vector<8x8xf32>
      %119 = tpu.matmul %117, %118, %cst_68 {dimension_numbers = #tpu.dot_dimension_numbers<[1], [0], [0], [1], [0, 0, 1, 1], [], []>} : vector<8x8xbf16>, vector<8x8xbf16>, vector<8x8xf32> -> vector<8x8xf32>
      %120 = arith.truncf %119 : vector<8x8xf32> to vector<8x8xbf16>
      %c0_69 = arith.constant 0 : index
      %c0_70 = arith.constant 0 : index
      %c0_71 = arith.constant 0 : index
      %121 = vector.load %arg13[%c0_69, %c0_70, %c0_71] : memref<4x8x32xbf16, #tpu.memory_space<vmem>>, vector<1x8x32xbf16>
      %122 = vector.shape_cast %121 : vector<1x8x32xbf16> to vector<8x32xbf16>
      %cst_72 = arith.constant dense<0.000000e+00> : vector<8x32xf32>
      %123 = tpu.matmul %120, %122, %cst_72 {dimension_numbers = #tpu.dot_dimension_numbers<[1], [0], [0], [1], [0, 0, 1, 1], [], []>} : vector<8x8xbf16>, vector<8x32xbf16>, vector<8x32xf32> -> vector<8x32xf32>
      %124 = arith.addf %80, %123 : vector<8x32xf32>
      %c1 = arith.constant 1 : index
      %c0_73 = arith.constant 0 : index
      %c0_74 = arith.constant 0 : index
      %125 = vector.load %arg7[%c1, %c0_73, %c0_74] : memref<4x32x8xbf16, #tpu.memory_space<vmem>>, vector<1x32x8xbf16>
      %126 = vector.shape_cast %125 : vector<1x32x8xbf16> to vector<32x8xbf16>
      %cst_75 = arith.constant dense<0.000000e+00> : vector<8x8xf32>
      %127 = tpu.matmul %54, %126, %cst_75 {dimension_numbers = #tpu.dot_dimension_numbers<[1], [0], [0], [1], [0, 0, 1, 1], [], []>} : vector<8x32xbf16>, vector<32x8xbf16>, vector<8x8xf32> -> vector<8x8xf32>
      %c1_76 = arith.constant 1 : index
      %c0_77 = arith.constant 0 : index
      %c0_78 = arith.constant 0 : index
      %128 = vector.load %arg8[%c1_76, %c0_77, %c0_78] : memref<4x1x8xf32, #tpu.memory_space<vmem>>, vector<1x1x8xf32>
      %129 = vector.shape_cast %128 : vector<1x1x8xf32> to vector<1x8xf32>
      %130 = vector.broadcast %129 : vector<1x8xf32> to vector<8x8xf32>
      %131 = arith.addf %127, %130 : vector<8x8xf32>
      %c1_79 = arith.constant 1 : index
      %c0_80 = arith.constant 0 : index
      %c0_81 = arith.constant 0 : index
      %132 = vector.load %arg9[%c1_79, %c0_80, %c0_81] : memref<4x32x8xbf16, #tpu.memory_space<vmem>>, vector<1x32x8xbf16>
      %133 = vector.shape_cast %132 : vector<1x32x8xbf16> to vector<32x8xbf16>
      %cst_82 = arith.constant dense<0.000000e+00> : vector<8x8xf32>
      %134 = tpu.matmul %79, %133, %cst_82 {dimension_numbers = #tpu.dot_dimension_numbers<[1], [0], [0], [1], [0, 0, 1, 1], [], []>} : vector<8x32xbf16>, vector<32x8xbf16>, vector<8x8xf32> -> vector<8x8xf32>
      %c1_83 = arith.constant 1 : index
      %c0_84 = arith.constant 0 : index
      %c0_85 = arith.constant 0 : index
      %135 = vector.load %arg10[%c1_83, %c0_84, %c0_85] : memref<4x1x8xf32, #tpu.memory_space<vmem>>, vector<1x1x8xf32>
      %136 = vector.shape_cast %135 : vector<1x1x8xf32> to vector<1x8xf32>
      %137 = vector.broadcast %136 : vector<1x8xf32> to vector<8x8xf32>
      %138 = arith.addf %134, %137 : vector<8x8xf32>
      %c1_86 = arith.constant 1 : index
      %c0_87 = arith.constant 0 : index
      %c0_88 = arith.constant 0 : index
      %139 = vector.load %arg11[%c1_86, %c0_87, %c0_88] : memref<4x32x8xbf16, #tpu.memory_space<vmem>>, vector<1x32x8xbf16>
      %140 = vector.shape_cast %139 : vector<1x32x8xbf16> to vector<32x8xbf16>
      %cst_89 = arith.constant dense<0.000000e+00> : vector<8x8xf32>
      %141 = tpu.matmul %79, %140, %cst_89 {dimension_numbers = #tpu.dot_dimension_numbers<[1], [0], [0], [1], [0, 0, 1, 1], [], []>} : vector<8x32xbf16>, vector<32x8xbf16>, vector<8x8xf32> -> vector<8x8xf32>
      %c1_90 = arith.constant 1 : index
      %c0_91 = arith.constant 0 : index
      %c0_92 = arith.constant 0 : index
      %142 = vector.load %arg12[%c1_90, %c0_91, %c0_92] : memref<4x1x8xf32, #tpu.memory_space<vmem>>, vector<1x1x8xf32>
      %143 = vector.shape_cast %142 : vector<1x1x8xf32> to vector<1x8xf32>
      %144 = vector.broadcast %143 : vector<1x8xf32> to vector<8x8xf32>
      %145 = arith.addf %141, %144 : vector<8x8xf32>
      %146 = arith.truncf %131 : vector<8x8xf32> to vector<8x8xbf16>
      %147 = arith.truncf %138 : vector<8x8xf32> to vector<8x8xbf16>
      %cst_93 = arith.constant dense<0.000000e+00> : vector<8x8xf32>
      %148 = tpu.matmul %146, %147, %cst_93 {dimension_numbers = #tpu.dot_dimension_numbers<[1], [1], [0], [0], [0, 0, 1, 0], [], []>} : vector<8x8xbf16>, vector<8x8xbf16>, vector<8x8xf32> -> vector<8x8xf32>
      %cst_94 = arith.constant 0.353553385 : f32
      %149 = vector.broadcast %cst_94 : f32 to vector<8x8xf32>
      %150 = arith.mulf %148, %149 : vector<8x8xf32>
      %cst_95 = arith.constant dense<0xFF800000> : vector<8xf32>
      %151 = vector.multi_reduction <maximumf>, %150, %cst_95 [1] : vector<8x8xf32> to vector<8xf32>
      %152 = vector.shape_cast %151 : vector<8xf32> to vector<8x1xf32>
      %153 = vector.broadcast %152 : vector<8x1xf32> to vector<8x8xf32>
      %154 = arith.subf %150, %153 : vector<8x8xf32>
      %155 = math.exp %154 : vector<8x8xf32>
      %cst_96 = arith.constant dense<0.000000e+00> : vector<8xf32>
      %156 = vector.multi_reduction <add>, %155, %cst_96 [1] : vector<8x8xf32> to vector<8xf32>
      %157 = vector.shape_cast %156 : vector<8xf32> to vector<8x1xf32>
      %158 = tpu.reciprocal %157 {approx = true} : vector<8x1xf32> -> vector<8x1xf32>
      %159 = vector.broadcast %158 : vector<8x1xf32> to vector<8x8xf32>
      %160 = arith.mulf %155, %159 : vector<8x8xf32>
      %161 = arith.truncf %160 : vector<8x8xf32> to vector<8x8xbf16>
      %162 = arith.truncf %145 : vector<8x8xf32> to vector<8x8xbf16>
      %cst_97 = arith.constant dense<0.000000e+00> : vector<8x8xf32>
      %163 = tpu.matmul %161, %162, %cst_97 {dimension_numbers = #tpu.dot_dimension_numbers<[1], [0], [0], [1], [0, 0, 1, 1], [], []>} : vector<8x8xbf16>, vector<8x8xbf16>, vector<8x8xf32> -> vector<8x8xf32>
      %164 = arith.truncf %163 : vector<8x8xf32> to vector<8x8xbf16>
      %c1_98 = arith.constant 1 : index
      %c0_99 = arith.constant 0 : index
      %c0_100 = arith.constant 0 : index
      %165 = vector.load %arg13[%c1_98, %c0_99, %c0_100] : memref<4x8x32xbf16, #tpu.memory_space<vmem>>, vector<1x8x32xbf16>
      %166 = vector.shape_cast %165 : vector<1x8x32xbf16> to vector<8x32xbf16>
      %cst_101 = arith.constant dense<0.000000e+00> : vector<8x32xf32>
      %167 = tpu.matmul %164, %166, %cst_101 {dimension_numbers = #tpu.dot_dimension_numbers<[1], [0], [0], [1], [0, 0, 1, 1], [], []>} : vector<8x8xbf16>, vector<8x32xbf16>, vector<8x32xf32> -> vector<8x32xf32>
      %168 = arith.addf %124, %167 : vector<8x32xf32>
      %c2 = arith.constant 2 : index
      %c0_102 = arith.constant 0 : index
      %c0_103 = arith.constant 0 : index
      %169 = vector.load %arg7[%c2, %c0_102, %c0_103] : memref<4x32x8xbf16, #tpu.memory_space<vmem>>, vector<1x32x8xbf16>
      %170 = vector.shape_cast %169 : vector<1x32x8xbf16> to vector<32x8xbf16>
      %cst_104 = arith.constant dense<0.000000e+00> : vector<8x8xf32>
      %171 = tpu.matmul %54, %170, %cst_104 {dimension_numbers = #tpu.dot_dimension_numbers<[1], [0], [0], [1], [0, 0, 1, 1], [], []>} : vector<8x32xbf16>, vector<32x8xbf16>, vector<8x8xf32> -> vector<8x8xf32>
      %c2_105 = arith.constant 2 : index
      %c0_106 = arith.constant 0 : index
      %c0_107 = arith.constant 0 : index
      %172 = vector.load %arg8[%c2_105, %c0_106, %c0_107] : memref<4x1x8xf32, #tpu.memory_space<vmem>>, vector<1x1x8xf32>
      %173 = vector.shape_cast %172 : vector<1x1x8xf32> to vector<1x8xf32>
      %174 = vector.broadcast %173 : vector<1x8xf32> to vector<8x8xf32>
      %175 = arith.addf %171, %174 : vector<8x8xf32>
      %c2_108 = arith.constant 2 : index
      %c0_109 = arith.constant 0 : index
      %c0_110 = arith.constant 0 : index
      %176 = vector.load %arg9[%c2_108, %c0_109, %c0_110] : memref<4x32x8xbf16, #tpu.memory_space<vmem>>, vector<1x32x8xbf16>
      %177 = vector.shape_cast %176 : vector<1x32x8xbf16> to vector<32x8xbf16>
      %cst_111 = arith.constant dense<0.000000e+00> : vector<8x8xf32>
      %178 = tpu.matmul %79, %177, %cst_111 {dimension_numbers = #tpu.dot_dimension_numbers<[1], [0], [0], [1], [0, 0, 1, 1], [], []>} : vector<8x32xbf16>, vector<32x8xbf16>, vector<8x8xf32> -> vector<8x8xf32>
      %c2_112 = arith.constant 2 : index
      %c0_113 = arith.constant 0 : index
      %c0_114 = arith.constant 0 : index
      %179 = vector.load %arg10[%c2_112, %c0_113, %c0_114] : memref<4x1x8xf32, #tpu.memory_space<vmem>>, vector<1x1x8xf32>
      %180 = vector.shape_cast %179 : vector<1x1x8xf32> to vector<1x8xf32>
      %181 = vector.broadcast %180 : vector<1x8xf32> to vector<8x8xf32>
      %182 = arith.addf %178, %181 : vector<8x8xf32>
      %c2_115 = arith.constant 2 : index
      %c0_116 = arith.constant 0 : index
      %c0_117 = arith.constant 0 : index
      %183 = vector.load %arg11[%c2_115, %c0_116, %c0_117] : memref<4x32x8xbf16, #tpu.memory_space<vmem>>, vector<1x32x8xbf16>
      %184 = vector.shape_cast %183 : vector<1x32x8xbf16> to vector<32x8xbf16>
      %cst_118 = arith.constant dense<0.000000e+00> : vector<8x8xf32>
      %185 = tpu.matmul %79, %184, %cst_118 {dimension_numbers = #tpu.dot_dimension_numbers<[1], [0], [0], [1], [0, 0, 1, 1], [], []>} : vector<8x32xbf16>, vector<32x8xbf16>, vector<8x8xf32> -> vector<8x8xf32>
      %c2_119 = arith.constant 2 : index
      %c0_120 = arith.constant 0 : index
      %c0_121 = arith.constant 0 : index
      %186 = vector.load %arg12[%c2_119, %c0_120, %c0_121] : memref<4x1x8xf32, #tpu.memory_space<vmem>>, vector<1x1x8xf32>
      %187 = vector.shape_cast %186 : vector<1x1x8xf32> to vector<1x8xf32>
      %188 = vector.broadcast %187 : vector<1x8xf32> to vector<8x8xf32>
      %189 = arith.addf %185, %188 : vector<8x8xf32>
      %190 = arith.truncf %175 : vector<8x8xf32> to vector<8x8xbf16>
      %191 = arith.truncf %182 : vector<8x8xf32> to vector<8x8xbf16>
      %cst_122 = arith.constant dense<0.000000e+00> : vector<8x8xf32>
      %192 = tpu.matmul %190, %191, %cst_122 {dimension_numbers = #tpu.dot_dimension_numbers<[1], [1], [0], [0], [0, 0, 1, 0], [], []>} : vector<8x8xbf16>, vector<8x8xbf16>, vector<8x8xf32> -> vector<8x8xf32>
      %cst_123 = arith.constant 0.353553385 : f32
      %193 = vector.broadcast %cst_123 : f32 to vector<8x8xf32>
      %194 = arith.mulf %192, %193 : vector<8x8xf32>
      %cst_124 = arith.constant dense<0xFF800000> : vector<8xf32>
      %195 = vector.multi_reduction <maximumf>, %194, %cst_124 [1] : vector<8x8xf32> to vector<8xf32>
      %196 = vector.shape_cast %195 : vector<8xf32> to vector<8x1xf32>
      %197 = vector.broadcast %196 : vector<8x1xf32> to vector<8x8xf32>
      %198 = arith.subf %194, %197 : vector<8x8xf32>
      %199 = math.exp %198 : vector<8x8xf32>
      %cst_125 = arith.constant dense<0.000000e+00> : vector<8xf32>
      %200 = vector.multi_reduction <add>, %199, %cst_125 [1] : vector<8x8xf32> to vector<8xf32>
      %201 = vector.shape_cast %200 : vector<8xf32> to vector<8x1xf32>
      %202 = tpu.reciprocal %201 {approx = true} : vector<8x1xf32> -> vector<8x1xf32>
      %203 = vector.broadcast %202 : vector<8x1xf32> to vector<8x8xf32>
      %204 = arith.mulf %199, %203 : vector<8x8xf32>
      %205 = arith.truncf %204 : vector<8x8xf32> to vector<8x8xbf16>
      %206 = arith.truncf %189 : vector<8x8xf32> to vector<8x8xbf16>
      %cst_126 = arith.constant dense<0.000000e+00> : vector<8x8xf32>
      %207 = tpu.matmul %205, %206, %cst_126 {dimension_numbers = #tpu.dot_dimension_numbers<[1], [0], [0], [1], [0, 0, 1, 1], [], []>} : vector<8x8xbf16>, vector<8x8xbf16>, vector<8x8xf32> -> vector<8x8xf32>
      %208 = arith.truncf %207 : vector<8x8xf32> to vector<8x8xbf16>
      %c2_127 = arith.constant 2 : index
      %c0_128 = arith.constant 0 : index
      %c0_129 = arith.constant 0 : index
      %209 = vector.load %arg13[%c2_127, %c0_128, %c0_129] : memref<4x8x32xbf16, #tpu.memory_space<vmem>>, vector<1x8x32xbf16>
      %210 = vector.shape_cast %209 : vector<1x8x32xbf16> to vector<8x32xbf16>
      %cst_130 = arith.constant dense<0.000000e+00> : vector<8x32xf32>
      %211 = tpu.matmul %208, %210, %cst_130 {dimension_numbers = #tpu.dot_dimension_numbers<[1], [0], [0], [1], [0, 0, 1, 1], [], []>} : vector<8x8xbf16>, vector<8x32xbf16>, vector<8x32xf32> -> vector<8x32xf32>
      %212 = arith.addf %168, %211 : vector<8x32xf32>
      %c3 = arith.constant 3 : index
      %c0_131 = arith.constant 0 : index
      %c0_132 = arith.constant 0 : index
      %213 = vector.load %arg7[%c3, %c0_131, %c0_132] : memref<4x32x8xbf16, #tpu.memory_space<vmem>>, vector<1x32x8xbf16>
      %214 = vector.shape_cast %213 : vector<1x32x8xbf16> to vector<32x8xbf16>
      %cst_133 = arith.constant dense<0.000000e+00> : vector<8x8xf32>
      %215 = tpu.matmul %54, %214, %cst_133 {dimension_numbers = #tpu.dot_dimension_numbers<[1], [0], [0], [1], [0, 0, 1, 1], [], []>} : vector<8x32xbf16>, vector<32x8xbf16>, vector<8x8xf32> -> vector<8x8xf32>
      %c3_134 = arith.constant 3 : index
      %c0_135 = arith.constant 0 : index
      %c0_136 = arith.constant 0 : index
      %216 = vector.load %arg8[%c3_134, %c0_135, %c0_136] : memref<4x1x8xf32, #tpu.memory_space<vmem>>, vector<1x1x8xf32>
      %217 = vector.shape_cast %216 : vector<1x1x8xf32> to vector<1x8xf32>
      %218 = vector.broadcast %217 : vector<1x8xf32> to vector<8x8xf32>
      %219 = arith.addf %215, %218 : vector<8x8xf32>
      %c3_137 = arith.constant 3 : index
      %c0_138 = arith.constant 0 : index
      %c0_139 = arith.constant 0 : index
      %220 = vector.load %arg9[%c3_137, %c0_138, %c0_139] : memref<4x32x8xbf16, #tpu.memory_space<vmem>>, vector<1x32x8xbf16>
      %221 = vector.shape_cast %220 : vector<1x32x8xbf16> to vector<32x8xbf16>
      %cst_140 = arith.constant dense<0.000000e+00> : vector<8x8xf32>
      %222 = tpu.matmul %79, %221, %cst_140 {dimension_numbers = #tpu.dot_dimension_numbers<[1], [0], [0], [1], [0, 0, 1, 1], [], []>} : vector<8x32xbf16>, vector<32x8xbf16>, vector<8x8xf32> -> vector<8x8xf32>
      %c3_141 = arith.constant 3 : index
      %c0_142 = arith.constant 0 : index
      %c0_143 = arith.constant 0 : index
      %223 = vector.load %arg10[%c3_141, %c0_142, %c0_143] : memref<4x1x8xf32, #tpu.memory_space<vmem>>, vector<1x1x8xf32>
      %224 = vector.shape_cast %223 : vector<1x1x8xf32> to vector<1x8xf32>
      %225 = vector.broadcast %224 : vector<1x8xf32> to vector<8x8xf32>
      %226 = arith.addf %222, %225 : vector<8x8xf32>
      %c3_144 = arith.constant 3 : index
      %c0_145 = arith.constant 0 : index
      %c0_146 = arith.constant 0 : index
      %227 = vector.load %arg11[%c3_144, %c0_145, %c0_146] : memref<4x32x8xbf16, #tpu.memory_space<vmem>>, vector<1x32x8xbf16>
      %228 = vector.shape_cast %227 : vector<1x32x8xbf16> to vector<32x8xbf16>
      %cst_147 = arith.constant dense<0.000000e+00> : vector<8x8xf32>
      %229 = tpu.matmul %79, %228, %cst_147 {dimension_numbers = #tpu.dot_dimension_numbers<[1], [0], [0], [1], [0, 0, 1, 1], [], []>} : vector<8x32xbf16>, vector<32x8xbf16>, vector<8x8xf32> -> vector<8x8xf32>
      %c3_148 = arith.constant 3 : index
      %c0_149 = arith.constant 0 : index
      %c0_150 = arith.constant 0 : index
      %230 = vector.load %arg12[%c3_148, %c0_149, %c0_150] : memref<4x1x8xf32, #tpu.memory_space<vmem>>, vector<1x1x8xf32>
      %231 = vector.shape_cast %230 : vector<1x1x8xf32> to vector<1x8xf32>
      %232 = vector.broadcast %231 : vector<1x8xf32> to vector<8x8xf32>
      %233 = arith.addf %229, %232 : vector<8x8xf32>
      %234 = arith.truncf %219 : vector<8x8xf32> to vector<8x8xbf16>
      %235 = arith.truncf %226 : vector<8x8xf32> to vector<8x8xbf16>
      %cst_151 = arith.constant dense<0.000000e+00> : vector<8x8xf32>
      %236 = tpu.matmul %234, %235, %cst_151 {dimension_numbers = #tpu.dot_dimension_numbers<[1], [1], [0], [0], [0, 0, 1, 0], [], []>} : vector<8x8xbf16>, vector<8x8xbf16>, vector<8x8xf32> -> vector<8x8xf32>
      %cst_152 = arith.constant 0.353553385 : f32
      %237 = vector.broadcast %cst_152 : f32 to vector<8x8xf32>
      %238 = arith.mulf %236, %237 : vector<8x8xf32>
      %cst_153 = arith.constant dense<0xFF800000> : vector<8xf32>
      %239 = vector.multi_reduction <maximumf>, %238, %cst_153 [1] : vector<8x8xf32> to vector<8xf32>
      %240 = vector.shape_cast %239 : vector<8xf32> to vector<8x1xf32>
      %241 = vector.broadcast %240 : vector<8x1xf32> to vector<8x8xf32>
      %242 = arith.subf %238, %241 : vector<8x8xf32>
      %243 = math.exp %242 : vector<8x8xf32>
      %cst_154 = arith.constant dense<0.000000e+00> : vector<8xf32>
      %244 = vector.multi_reduction <add>, %243, %cst_154 [1] : vector<8x8xf32> to vector<8xf32>
      %245 = vector.shape_cast %244 : vector<8xf32> to vector<8x1xf32>
      %246 = tpu.reciprocal %245 {approx = true} : vector<8x1xf32> -> vector<8x1xf32>
      %247 = vector.broadcast %246 : vector<8x1xf32> to vector<8x8xf32>
      %248 = arith.mulf %243, %247 : vector<8x8xf32>
      %249 = arith.truncf %248 : vector<8x8xf32> to vector<8x8xbf16>
      %250 = arith.truncf %233 : vector<8x8xf32> to vector<8x8xbf16>
      %cst_155 = arith.constant dense<0.000000e+00> : vector<8x8xf32>
      %251 = tpu.matmul %249, %250, %cst_155 {dimension_numbers = #tpu.dot_dimension_numbers<[1], [0], [0], [1], [0, 0, 1, 1], [], []>} : vector<8x8xbf16>, vector<8x8xbf16>, vector<8x8xf32> -> vector<8x8xf32>
      %252 = arith.truncf %251 : vector<8x8xf32> to vector<8x8xbf16>
      %c3_156 = arith.constant 3 : index
      %c0_157 = arith.constant 0 : index
      %c0_158 = arith.constant 0 : index
      %253 = vector.load %arg13[%c3_156, %c0_157, %c0_158] : memref<4x8x32xbf16, #tpu.memory_space<vmem>>, vector<1x8x32xbf16>
      %254 = vector.shape_cast %253 : vector<1x8x32xbf16> to vector<8x32xbf16>
      %cst_159 = arith.constant dense<0.000000e+00> : vector<8x32xf32>
      %255 = tpu.matmul %252, %254, %cst_159 {dimension_numbers = #tpu.dot_dimension_numbers<[1], [0], [0], [1], [0, 0, 1, 1], [], []>} : vector<8x8xbf16>, vector<8x32xbf16>, vector<8x32xf32> -> vector<8x32xf32>
      %256 = arith.addf %212, %255 : vector<8x32xf32>
      %c0_160 = arith.constant 0 : index
      %c0_161 = arith.constant 0 : index
      %257 = vector.load %arg14[%c0_160, %c0_161] : memref<1x32xf32, #tpu.memory_space<vmem>>, vector<1x32xf32>
      %258 = vector.broadcast %257 : vector<1x32xf32> to vector<8x32xf32>
      %259 = arith.addf %256, %258 : vector<8x32xf32>
      %260 = arith.addf %27, %259 : vector<8x32xf32>
      %c0_162 = arith.constant 0 : index
      %c0_163 = arith.constant 0 : index
      %261 = vector.load %arg22[%c0_162, %c0_163] : memref<8x32xf32, #tpu.memory_space<vmem>>, vector<8x32xf32>
      tpu.vector_store %arg22[%c0_162, %c0_163], %260 {strides = array<i32>} : memref<8x32xf32, #tpu.memory_space<vmem>>, vector<8x32xf32>,
      %c0_164 = arith.constant 0 : index
      %c0_165 = arith.constant 0 : index
      %262 = vector.load %arg15[%c0_164, %c0_165] : memref<1x32xf32, #tpu.memory_space<vmem>>, vector<1x32xf32>
      %c0_166 = arith.constant 0 : index
      %c0_167 = arith.constant 0 : index
      %263 = vector.load %arg16[%c0_166, %c0_167] : memref<1x32xf32, #tpu.memory_space<vmem>>, vector<1x32xf32>
      %cst_168 = arith.constant dense<0.000000e+00> : vector<8xf32>
      %264 = vector.multi_reduction <add>, %260, %cst_168 [1] : vector<8x32xf32> to vector<8xf32>
      %265 = vector.shape_cast %264 : vector<8xf32> to vector<8x1xf32>
      %cst_169 = arith.constant 3.200000e+01 : f32
      %266 = vector.broadcast %cst_169 : f32 to vector<8x1xf32>
      %267 = arith.divf %265, %266 : vector<8x1xf32>
      %268 = vector.broadcast %267 : vector<8x1xf32> to vector<8x32xf32>
      %269 = arith.subf %260, %268 : vector<8x32xf32>
      %270 = arith.mulf %269, %269 : vector<8x32xf32>
      %cst_170 = arith.constant dense<0.000000e+00> : vector<8xf32>
      %271 = vector.multi_reduction <add>, %270, %cst_170 [1] : vector<8x32xf32> to vector<8xf32>
      %272 = vector.shape_cast %271 : vector<8xf32> to vector<8x1xf32>
      %cst_171 = arith.constant 3.200000e+01 : f32
      %273 = vector.broadcast %cst_171 : f32 to vector<8x1xf32>
      %274 = arith.divf %272, %273 : vector<8x1xf32>
      %275 = vector.broadcast %267 : vector<8x1xf32> to vector<8x32xf32>
      %276 = arith.subf %260, %275 : vector<8x32xf32>
      %cst_172 = arith.constant 9.99999974E-6 : f32
      %277 = vector.broadcast %cst_172 : f32 to vector<8x1xf32>
      %278 = arith.addf %274, %277 : vector<8x1xf32>
      %279 = math.rsqrt %278 : vector<8x1xf32>
      %280 = vector.broadcast %279 : vector<8x1xf32> to vector<8x32xf32>
      %281 = arith.mulf %276, %280 : vector<8x32xf32>
      %282 = vector.broadcast %262 : vector<1x32xf32> to vector<8x32xf32>
      %283 = arith.mulf %281, %282 : vector<8x32xf32>
      %284 = vector.broadcast %263 : vector<1x32xf32> to vector<8x32xf32>
      %285 = arith.addf %283, %284 : vector<8x32xf32>
      %286 = arith.truncf %285 : vector<8x32xf32> to vector<8x32xbf16>
      %c0_173 = arith.constant 0 : index
      %c0_174 = arith.constant 0 : index
      %287 = vector.load %arg23[%c0_173, %c0_174] : memref<8x32xbf16, #tpu.memory_space<vmem>>, vector<8x32xbf16>
      tpu.vector_store %arg23[%c0_173, %c0_174], %286 {strides = array<i32>} : memref<8x32xbf16, #tpu.memory_space<vmem>>, vector<8x32xbf16>,
      %cst_175 = arith.constant 0.000000e+00 : f32
      %288 = vector.broadcast %cst_175 : f32 to vector<8x32xf32>
      %c0_176 = arith.constant 0 : index
      %c0_177 = arith.constant 0 : index
      %289 = vector.load %arg24[%c0_176, %c0_177] : memref<8x32xf32, #tpu.memory_space<vmem>>, vector<8x32xf32>
      tpu.vector_store %arg24[%c0_176, %c0_177], %288 {strides = array<i32>} : memref<8x32xf32, #tpu.memory_space<vmem>>, vector<8x32xf32>,
    } else {
    }
    %c0 = arith.constant 0 : index
    %c0_1 = arith.constant 0 : index
    %3 = vector.load %arg23[%c0, %c0_1] : memref<8x32xbf16, #tpu.memory_space<vmem>>, vector<8x32xbf16>
    %c0_2 = arith.constant 0 : index
    %c0_3 = arith.constant 0 : index
    %4 = vector.load %arg17[%c0_2, %c0_3] : memref<32x64xbf16, #tpu.memory_space<vmem>>, vector<32x64xbf16>
    %cst = arith.constant dense<0.000000e+00> : vector<8x64xf32>
    %5 = tpu.matmul %3, %4, %cst {dimension_numbers = #tpu.dot_dimension_numbers<[1], [0], [0], [1], [0, 0, 1, 1], [], []>} : vector<8x32xbf16>, vector<32x64xbf16>, vector<8x64xf32> -> vector<8x64xf32>
    %c0_4 = arith.constant 0 : index
    %c0_5 = arith.constant 0 : index
    %6 = vector.load %arg18[%c0_4, %c0_5] : memref<1x64xf32, #tpu.memory_space<vmem>>, vector<1x64xf32>
    %7 = vector.broadcast %6 : vector<1x64xf32> to vector<8x64xf32>
    %8 = arith.addf %5, %7 : vector<8x64xf32>
    %cst_6 = arith.constant 5.000000e-01 : f32
    %9 = vector.broadcast %cst_6 : f32 to vector<8x64xf32>
    %10 = arith.mulf %9, %8 : vector<8x64xf32>
    %cst_7 = arith.constant 0.707106769 : f32
    %11 = vector.broadcast %cst_7 : f32 to vector<8x64xf32>
    %12 = arith.mulf %8, %11 : vector<8x64xf32>
    %13 = math.erf %12 : vector<8x64xf32>
    %cst_8 = arith.constant 1.000000e+00 : f32
    %14 = vector.broadcast %cst_8 : f32 to vector<8x64xf32>
    %15 = arith.addf %14, %13 : vector<8x64xf32>
    %16 = arith.mulf %10, %15 : vector<8x64xf32>
    %c0_9 = arith.constant 0 : index
    %c0_10 = arith.constant 0 : index
    %17 = vector.load %arg24[%c0_9, %c0_10] : memref<8x32xf32, #tpu.memory_space<vmem>>, vector<8x32xf32>
    %18 = arith.truncf %16 : vector<8x64xf32> to vector<8x64xbf16>
    %c0_11 = arith.constant 0 : index
    %c0_12 = arith.constant 0 : index
    %19 = vector.load %arg19[%c0_11, %c0_12] : memref<64x32xbf16, #tpu.memory_space<vmem>>, vector<64x32xbf16>
    %cst_13 = arith.constant dense<0.000000e+00> : vector<8x32xf32>
    %20 = tpu.matmul %18, %19, %cst_13 {dimension_numbers = #tpu.dot_dimension_numbers<[1], [0], [0], [1], [0, 0, 1, 1], [], []>} : vector<8x64xbf16>, vector<64x32xbf16>, vector<8x32xf32> -> vector<8x32xf32>
    %21 = arith.addf %17, %20 : vector<8x32xf32>
    %c0_14 = arith.constant 0 : index
    %c0_15 = arith.constant 0 : index
    %22 = vector.load %arg24[%c0_14, %c0_15] : memref<8x32xf32, #tpu.memory_space<vmem>>, vector<8x32xf32>
    tpu.vector_store %arg24[%c0_14, %c0_15], %21 {strides = array<i32>} : memref<8x32xf32, #tpu.memory_space<vmem>>, vector<8x32xf32>,
    %c0_i32_16 = arith.constant 0 : i32
    %23 = arith.cmpi eq, %arg2, %c0_i32_16 : i32
    %24 = arith.extui %23 : i1 to i32
    %c0_i32_17 = arith.constant 0 : i32
    %25 = arith.cmpi ne, %24, %c0_i32_17 : i32
    scf.if %25 {
      %c0_18 = arith.constant 0 : index
      %c0_19 = arith.constant 0 : index
      %26 = vector.load %arg22[%c0_18, %c0_19] : memref<8x32xf32, #tpu.memory_space<vmem>>, vector<8x32xf32>
      %c0_20 = arith.constant 0 : index
      %c0_21 = arith.constant 0 : index
      %27 = vector.load %arg24[%c0_20, %c0_21] : memref<8x32xf32, #tpu.memory_space<vmem>>, vector<8x32xf32>
      %28 = arith.addf %26, %27 : vector<8x32xf32>
      %c0_22 = arith.constant 0 : index
      %c0_23 = arith.constant 0 : index
      %29 = vector.load %arg20[%c0_22, %c0_23] : memref<1x32xf32, #tpu.memory_space<vmem>>, vector<1x32xf32>
      %30 = vector.broadcast %29 : vector<1x32xf32> to vector<8x32xf32>
      %31 = arith.addf %28, %30 : vector<8x32xf32>
      %c0_24 = arith.constant 0 : index
      %c0_25 = arith.constant 0 : index
      %c0_26 = arith.constant 0 : index
      %32 = vector.load %arg21[%c0_24, %c0_25, %c0_26] : memref<1x8x32xf32, #tpu.memory_space<vmem>>, vector<1x8x32xf32>
      %33 = vector.shape_cast %32 : vector<1x8x32xf32> to vector<8x32xf32>
      %34 = vector.shape_cast %31 : vector<8x32xf32> to vector<1x8x32xf32>
      tpu.vector_store %arg21[%c0_24, %c0_25, %c0_26], %34 {strides = array<i32>} : memref<1x8x32xf32, #tpu.memory_space<vmem>>, vector<1x8x32xf32>,
    } else {
    }
    return
  }
  func.func @transform_0(%arg0: i32, %arg1: i32, %arg2: i32) -> (i32, i32, i32) {
    %c0_i32 = arith.constant 0 : i32
    %c0_i32_0 = arith.constant 0 : i32
    return %arg0, %arg1, %c0_i32 : i32, i32, i32
  }
  func.func @transform_1(%arg0: i32, %arg1: i32, %arg2: i32) -> (i32, i32, i32) {
    %c0_i32 = arith.constant 0 : i32
    %c0_i32_0 = arith.constant 0 : i32
    %c0_i32_1 = arith.constant 0 : i32
    return %arg0, %c0_i32, %c0_i32_0 : i32, i32, i32
  }
  func.func @transform_2(%arg0: i32, %arg1: i32, %arg2: i32) -> (i32, i32) {
    %c0_i32 = arith.constant 0 : i32
    %c0_i32_0 = arith.constant 0 : i32
    %c0_i32_1 = arith.constant 0 : i32
    return %c0_i32, %c0_i32_0 : i32, i32
  }
  func.func @transform_3(%arg0: i32, %arg1: i32, %arg2: i32) -> (i32, i32) {
    %c0_i32 = arith.constant 0 : i32
    %c0_i32_0 = arith.constant 0 : i32
    %c0_i32_1 = arith.constant 0 : i32
    return %c0_i32, %c0_i32_0 : i32, i32
  }
  func.func @transform_4(%arg0: i32, %arg1: i32, %arg2: i32) -> (i32, i32, i32) {
    %c0_i32 = arith.constant 0 : i32
    %c0_i32_0 = arith.constant 0 : i32
    %c0_i32_1 = arith.constant 0 : i32
    %c0_i32_2 = arith.constant 0 : i32
    return %c0_i32, %c0_i32_0, %c0_i32_1 : i32, i32, i32
  }
  func.func @transform_5(%arg0: i32, %arg1: i32, %arg2: i32) -> (i32, i32, i32) {
    %c0_i32 = arith.constant 0 : i32
    %c0_i32_0 = arith.constant 0 : i32
    %c0_i32_1 = arith.constant 0 : i32
    %c0_i32_2 = arith.constant 0 : i32
    return %c0_i32, %c0_i32_0, %c0_i32_1 : i32, i32, i32
  }
  func.func @transform_6(%arg0: i32, %arg1: i32, %arg2: i32) -> (i32, i32, i32) {
    %c0_i32 = arith.constant 0 : i32
    %c0_i32_0 = arith.constant 0 : i32
    %c0_i32_1 = arith.constant 0 : i32
    %c0_i32_2 = arith.constant 0 : i32
    return %c0_i32, %c0_i32_0, %c0_i32_1 : i32, i32, i32
  }
  func.func @transform_7(%arg0: i32, %arg1: i32, %arg2: i32) -> (i32, i32, i32) {
    %c0_i32 = arith.constant 0 : i32
    %c0_i32_0 = arith.constant 0 : i32
    %c0_i32_1 = arith.constant 0 : i32
    %c0_i32_2 = arith.constant 0 : i32
    return %c0_i32, %c0_i32_0, %c0_i32_1 : i32, i32, i32
  }
  func.func @transform_8(%arg0: i32, %arg1: i32, %arg2: i32) -> (i32, i32, i32) {
    %c0_i32 = arith.constant 0 : i32
    %c0_i32_0 = arith.constant 0 : i32
    %c0_i32_1 = arith.constant 0 : i32
    %c0_i32_2 = arith.constant 0 : i32
    return %c0_i32, %c0_i32_0, %c0_i32_1 : i32, i32, i32
  }
  func.func @transform_9(%arg0: i32, %arg1: i32, %arg2: i32) -> (i32, i32, i32) {
    %c0_i32 = arith.constant 0 : i32
    %c0_i32_0 = arith.constant 0 : i32
    %c0_i32_1 = arith.constant 0 : i32
    %c0_i32_2 = arith.constant 0 : i32
    return %c0_i32, %c0_i32_0, %c0_i32_1 : i32, i32, i32
  }
  func.func @transform_10(%arg0: i32, %arg1: i32, %arg2: i32) -> (i32, i32, i32) {
    %c0_i32 = arith.constant 0 : i32
    %c0_i32_0 = arith.constant 0 : i32
    %c0_i32_1 = arith.constant 0 : i32
    %c0_i32_2 = arith.constant 0 : i32
    return %c0_i32, %c0_i32_0, %c0_i32_1 : i32, i32, i32
  }
  func.func @transform_11(%arg0: i32, %arg1: i32, %arg2: i32) -> (i32, i32) {
    %c0_i32 = arith.constant 0 : i32
    %c0_i32_0 = arith.constant 0 : i32
    %c0_i32_1 = arith.constant 0 : i32
    return %c0_i32, %c0_i32_0 : i32, i32
  }
  func.func @transform_12(%arg0: i32, %arg1: i32, %arg2: i32) -> (i32, i32) {
    %c0_i32 = arith.constant 0 : i32
    %c0_i32_0 = arith.constant 0 : i32
    %c0_i32_1 = arith.constant 0 : i32
    return %c0_i32, %c0_i32_0 : i32, i32
  }
  func.func @transform_13(%arg0: i32, %arg1: i32, %arg2: i32) -> (i32, i32) {
    %c0_i32 = arith.constant 0 : i32
    %c0_i32_0 = arith.constant 0 : i32
    %c0_i32_1 = arith.constant 0 : i32
    return %c0_i32, %c0_i32_0 : i32, i32
  }
  func.func @transform_14(%arg0: i32, %arg1: i32, %arg2: i32) -> (i32, i32) {
    %c0_i32 = arith.constant 0 : i32
    %c0_i32_0 = arith.constant 0 : i32
    return %c0_i32, %arg2 : i32, i32
  }
  func.func @transform_15(%arg0: i32, %arg1: i32, %arg2: i32) -> (i32, i32) {
    %c0_i32 = arith.constant 0 : i32
    %c0_i32_0 = arith.constant 0 : i32
    return %c0_i32, %arg2 : i32, i32
  }
  func.func @transform_16(%arg0: i32, %arg1: i32, %arg2: i32) -> (i32, i32) {
    %c0_i32 = arith.constant 0 : i32
    %c0_i32_0 = arith.constant 0 : i32
    return %arg2, %c0_i32 : i32, i32
  }
  func.func @transform_17(%arg0: i32, %arg1: i32, %arg2: i32) -> (i32, i32) {
    %c0_i32 = arith.constant 0 : i32
    %c0_i32_0 = arith.constant 0 : i32
    %c0_i32_1 = arith.constant 0 : i32
    return %c0_i32, %c0_i32_0 : i32, i32
  }
  func.func @transform_18(%arg0: i32, %arg1: i32, %arg2: i32) -> (i32, i32, i32) {
    %c0_i32 = arith.constant 0 : i32
    %c0_i32_0 = arith.constant 0 : i32
    return %arg0, %arg1, %c0_i32 : i32, i32, i32
  }
}

</mosaic_0001>

<llo_original>
// kernel: tpu_custom_call.1
$region0: #{tpu_custom_call.1}
  #allocation0 [shape = 'u32[]', space=smem, size = 0x4, offset = 0x4, fixed_abs, tag = 'smem constant byte address 0x4 - core index']
  #allocation1 [shape = 'u32[144,128]{1,0:T(1,128)}', space=vmem, size = 0x12000, scoped, tag = 'internal scratch']
  #allocation2 [shape = 'f32[8,32]{1,0:T(8,128)}', space=vmem, size = 0x1000, scoped, tag = 'scratch operand']
  #allocation3 [shape = 'bf16[8,32]{1,0:T(8,128)(2,1)}', space=vmem, size = 0x800, scoped, tag = 'scratch operand']
  #allocation4 [shape = 'f32[8,32]{1,0:T(8,128)}', space=vmem, size = 0x1000, scoped, tag = 'scratch operand']
  %s0 = inlined_call_operand.vmem [shape: f32[2,8,32], index: 0, kind: input, shape index: {}]
  %s1 = inlined_call_operand.vmem [shape: f32[2,8,32], index: 1, kind: input, shape index: {}]
  %s2 = inlined_call_operand.vmem [shape: f32[1,32], index: 2, kind: input, shape index: {}]
  %s3 = inlined_call_operand.vmem [shape: f32[1,32], index: 3, kind: input, shape index: {}]
  %s4 = inlined_call_operand.vmem [shape: bf16[4,32,8], index: 4, kind: input, shape index: {}]
  %s5 = inlined_call_operand.vmem [shape: f32[4,1,8], index: 5, kind: input, shape index: {}]
  %s6 = inlined_call_operand.vmem [shape: bf16[4,32,8], index: 6, kind: input, shape index: {}]
  %s7 = inlined_call_operand.vmem [shape: f32[4,1,8], index: 7, kind: input, shape index: {}]
  %s8 = inlined_call_operand.vmem [shape: bf16[4,32,8], index: 8, kind: input, shape index: {}]
  %s9 = inlined_call_operand.vmem [shape: f32[4,1,8], index: 9, kind: input, shape index: {}]
  %s10 = inlined_call_operand.vmem [shape: bf16[4,8,32], index: 10, kind: input, shape index: {}]
  %s11 = inlined_call_operand.vmem [shape: f32[1,32], index: 11, kind: input, shape index: {}]
  %s12 = inlined_call_operand.vmem [shape: f32[1,32], index: 12, kind: input, shape index: {}]
  %s13 = inlined_call_operand.vmem [shape: f32[1,32], index: 13, kind: input, shape index: {}]
  %s14 = inlined_call_operand.vmem [shape: bf16[32,64], index: 14, kind: input, shape index: {}]
  %s15 = inlined_call_operand.vmem [shape: f32[1,64], index: 15, kind: input, shape index: {}]
  %s16 = inlined_call_operand.vmem [shape: bf16[64,32], index: 16, kind: input, shape index: {}]
  %s17 = inlined_call_operand.vmem [shape: f32[1,32], index: 17, kind: input, shape index: {}]
  %s18 = inlined_call_operand.hbm [shape: f32[2,8,32], index: 18, kind: output, shape index: {}]
  %s19 = sld [smem:[#allocation0]]
  $region113: #{tpu_custom_call.1} parent=0
    _
  %s21 = ssub.s32 1, %s19
  %s22 = scalar_select 0, %s21, %s19
  $region1: #{tpu_custom_call.1} parent=0
    #allocation5 [shape = 'u8[8192]{0}', space=vmem, size = 0x2000, scoped, tag = 'output window, operand 0']
    #allocation6 [shape = 's32[2]{0}', space=sflag, size = 0x8, scoped, tag = 'scoped memory for tpu_custom_call.1']
    %23 = vsyncpa [#allocation6], 0
    %s24 = scalar_lea.sflag [#allocation6], 1
    %25 = vsyncpa %s24, 0
    loop: start=0, step=1, limit=4
    $region2: #{tpu_custom_call.1} parent=1 // loop_pre_header
      _
    $region3: #{tpu_custom_call.1} parent=1 // loop_header
      %s27 = sphi 0, %s31
      %p28 = scmp.ge.s32.totalorder %s27, 4
      %s34 = sphi 0, %s53
      %s35 = sphi 0, %s49
      %s36 = sphi 0, %s45
      %s37 = sphi 0, %s34
      %s38 = sphi 0, %s35
      %s39 = sphi 0, %s36
      %s40 = sphi 0, %s37
      %s41 = sphi 0, %s38
      %s42 = sphi 0, %s39
      %s58 = sphi 0, %s60
      %s61 = sphi 0, %s58
      %s62 = sphi 0, %s61
      %s78 = sphi 0, %s62
      %s84 = sphi 0, %s86
      %s87 = sphi 0, %s84
      %s88 = sphi 0, %s87
      %s104 = sphi 0, %s88
      %s108 = sphi 0, %s108
      %s110 = sphi 0, %s108
      %s111 = sphi 0, %s110
      %s125 = sphi 0, %s111
      %s129 = sphi 0, %s129
      %s131 = sphi 0, %s129
      %s132 = sphi 0, %s131
      %s146 = sphi 0, %s132
      %s150 = sphi 0, %s150
      %s152 = sphi 0, %s150
      %s153 = sphi 0, %s152
      %s167 = sphi 0, %s153
      %s171 = sphi 0, %s171
      %s173 = sphi 0, %s171
      %s174 = sphi 0, %s173
      %s188 = sphi 0, %s174
      %s192 = sphi 0, %s192
      %s194 = sphi 0, %s192
      %s195 = sphi 0, %s194
      %s209 = sphi 0, %s195
      %s213 = sphi 0, %s213
      %s215 = sphi 0, %s213
      %s216 = sphi 0, %s215
      %s230 = sphi 0, %s216
      %s234 = sphi 0, %s234
      %s236 = sphi 0, %s234
      %s237 = sphi 0, %s236
      %s251 = sphi 0, %s237
      %s255 = sphi 0, %s255
      %s257 = sphi 0, %s255
      %s258 = sphi 0, %s257
      %s272 = sphi 0, %s258
      %s276 = sphi 0, %s276
      %s278 = sphi 0, %s276
      %s279 = sphi 0, %s278
      %s293 = sphi 0, %s279
      %s297 = sphi 0, %s297
      %s299 = sphi 0, %s297
      %s300 = sphi 0, %s299
      %s314 = sphi 0, %s300
      %s318 = sphi 0, %s318
      %s320 = sphi 0, %s318
      %s321 = sphi 0, %s320
      %s335 = sphi 0, %s321
      %s339 = sphi 0, %s339
      %s341 = sphi 0, %s339
      %s342 = sphi 0, %s341
      %s356 = sphi 0, %s342
      %s362 = sphi 0, %s364
      %s365 = sphi 0, %s362
      %s366 = sphi 0, %s365
      %s382 = sphi 0, %s366
      %s388 = sphi 0, %s390
      %s391 = sphi 0, %s388
      %s392 = sphi 0, %s391
      %s408 = sphi 0, %s392
      %s414 = sphi 0, %s416
      %s417 = sphi 0, %s414
      %s418 = sphi 0, %s417
      %s434 = sphi 0, %s418
      %s438 = sphi 0, %s438
      %s440 = sphi 0, %s438
      %s441 = sphi 0, %s440
      %s455 = sphi 0, %s441
      %s463 = sphi 0, %s465
      %s466 = sphi 0, %s463
      %s467 = sphi 0, %s466
      %s483 = sphi 0, %s467
    $region4: #{tpu_custom_call.1} parent=1 // loop_header_branch
      %30 = sbr.rel (%p28) target = $region8
    $region5: #{tpu_custom_call.1} parent=1 // loop_body
      %s32 = ssub.s32 %s27, 1
      %s33 = ssub.s32 %s27, 2
      %s43 = sadd.s32 1, %s36
      %p44 = scmp.ge.s32.totalorder %s43, 1
      %s45 = scalar_select %p44, 0, %s43
      %s46 = sadd.s32 1, %s35
      %s47 = scalar_select %p44, %s46, %s35
      %p48 = scmp.ge.s32.totalorder %s47, 1
      %s49 = scalar_select %p48, 0, %s47
      %s50 = sadd.s32 1, %s34
      %s51 = scalar_select %p48, %s50, %s34
      %p52 = scmp.ge.s32.totalorder %s51, 2
      %s53 = scalar_select %p52, 0, %s51
      %s54 = ssub.s32 %s34, %s53
      %s55 = ssub.s32 %s35, %s49
      %s56 = sor.u32 %s54, %s55
      %p57 = scmp.eq.s32.totalorder %s56, 0
      %s59 = sadd.s32 %s58, 1
      %s60 = scalar_select %p57, %s58, %s59
      %p63 = pneg %p57
      %p64 = scmp.eq.s32.totalorder %s27, 1
      %p65 = por %p63, %p64
      %p66 = scmp.ne.s32.totalorder %s58, %s61
      %p67 = scmp.eq.s32.totalorder %s27, 0
      %p68 = por %p66, %p67
      %p69 = scmp.ne.s32.totalorder %s58, %s61
      %p70 = scmp.eq.s32.totalorder %s32, 1
      %p71 = por %p69, %p70
      %p72 = scmp.ne.s32.totalorder %s61, %s62
      %p73 = scmp.eq.s32.totalorder %s32, 0
      %p74 = por %p72, %p73
      %p75 = scmp.ne.s32.totalorder %s61, %s62
      %p76 = scmp.eq.s32.totalorder %s33, 1
      %p77 = por %p75, %p76
      %p79 = scmp.ne.s32.totalorder %s62, %s78
      %p80 = scmp.eq.s32.totalorder %s33, 0
      %p81 = por %p79, %p80
      %s82 = ssub.s32 %s34, %s53
      %p83 = scmp.eq.s32.totalorder %s82, 0
      %s85 = sadd.s32 %s84, 1
      %s86 = scalar_select %p83, %s84, %s85
      %p89 = pneg %p83
      %p90 = scmp.eq.s32.totalorder %s27, 1
      %p91 = por %p89, %p90
      %p92 = scmp.ne.s32.totalorder %s84, %s87
      %p93 = scmp.eq.s32.totalorder %s27, 0
      %p94 = por %p92, %p93
      %p95 = scmp.ne.s32.totalorder %s84, %s87
      %p96 = scmp.eq.s32.totalorder %s32, 1
      %p97 = por %p95, %p96
      %p98 = scmp.ne.s32.totalorder %s87, %s88
      %p99 = scmp.eq.s32.totalorder %s32, 0
      %p100 = por %p98, %p99
      %p101 = scmp.ne.s32.totalorder %s87, %s88
      %p102 = scmp.eq.s32.totalorder %s33, 1
      %p103 = por %p101, %p102
      %p105 = scmp.ne.s32.totalorder %s88, %s104
      %p106 = scmp.eq.s32.totalorder %s33, 0
      %p107 = por %p105, %p106
      %s109 = sadd.s32 %s108, 1
      %p112 = scmp.eq.s32.totalorder %s27, 1
      %p113 = scmp.ne.s32.totalorder %s108, %s110
      %p114 = scmp.eq.s32.totalorder %s27, 0
      %p115 = por %p113, %p114
      %p116 = scmp.ne.s32.totalorder %s108, %s110
      %p117 = scmp.eq.s32.totalorder %s32, 1
      %p118 = por %p116, %p117
      %p119 = scmp.ne.s32.totalorder %s110, %s111
      %p120 = scmp.eq.s32.totalorder %s32, 0
      %p121 = por %p119, %p120
      %p122 = scmp.ne.s32.totalorder %s110, %s111
      %p123 = scmp.eq.s32.totalorder %s33, 1
      %p124 = por %p122, %p123
      %p126 = scmp.ne.s32.totalorder %s111, %s125
      %p127 = scmp.eq.s32.totalorder %s33, 0
      %p128 = por %p126, %p127
      %s130 = sadd.s32 %s129, 1
      %p133 = scmp.eq.s32.totalorder %s27, 1
      %p134 = scmp.ne.s32.totalorder %s129, %s131
      %p135 = scmp.eq.s32.totalorder %s27, 0
      %p136 = por %p134, %p135
      %p137 = scmp.ne.s32.totalorder %s129, %s131
      %p138 = scmp.eq.s32.totalorder %s32, 1
      %p139 = por %p137, %p138
      %p140 = scmp.ne.s32.totalorder %s131, %s132
      %p141 = scmp.eq.s32.totalorder %s32, 0
      %p142 = por %p140, %p141
      %p143 = scmp.ne.s32.totalorder %s131, %s132
      %p144 = scmp.eq.s32.totalorder %s33, 1
      %p145 = por %p143, %p144
      %p147 = scmp.ne.s32.totalorder %s132, %s146
      %p148 = scmp.eq.s32.totalorder %s33, 0
      %p149 = por %p147, %p148
      %s151 = sadd.s32 %s150, 1
      %p154 = scmp.eq.s32.totalorder %s27, 1
      %p155 = scmp.ne.s32.totalorder %s150, %s152
      %p156 = scmp.eq.s32.totalorder %s27, 0
      %p157 = por %p155, %p156
      %p158 = scmp.ne.s32.totalorder %s150, %s152
      %p159 = scmp.eq.s32.totalorder %s32, 1
      %p160 = por %p158, %p159
      %p161 = scmp.ne.s32.totalorder %s152, %s153
      %p162 = scmp.eq.s32.totalorder %s32, 0
      %p163 = por %p161, %p162
      %p164 = scmp.ne.s32.totalorder %s152, %s153
      %p165 = scmp.eq.s32.totalorder %s33, 1
      %p166 = por %p164, %p165
      %p168 = scmp.ne.s32.totalorder %s153, %s167
      %p169 = scmp.eq.s32.totalorder %s33, 0
      %p170 = por %p168, %p169
      %s172 = sadd.s32 %s171, 1
      %p175 = scmp.eq.s32.totalorder %s27, 1
      %p176 = scmp.ne.s32.totalorder %s171, %s173
      %p177 = scmp.eq.s32.totalorder %s27, 0
      %p178 = por %p176, %p177
      %p179 = scmp.ne.s32.totalorder %s171, %s173
      %p180 = scmp.eq.s32.totalorder %s32, 1
      %p181 = por %p179, %p180
      %p182 = scmp.ne.s32.totalorder %s173, %s174
      %p183 = scmp.eq.s32.totalorder %s32, 0
      %p184 = por %p182, %p183
      %p185 = scmp.ne.s32.totalorder %s173, %s174
      %p186 = scmp.eq.s32.totalorder %s33, 1
      %p187 = por %p185, %p186
      %p189 = scmp.ne.s32.totalorder %s174, %s188
      %p190 = scmp.eq.s32.totalorder %s33, 0
      %p191 = por %p189, %p190
      %s193 = sadd.s32 %s192, 1
      %p196 = scmp.eq.s32.totalorder %s27, 1
      %p197 = scmp.ne.s32.totalorder %s192, %s194
      %p198 = scmp.eq.s32.totalorder %s27, 0
      %p199 = por %p197, %p198
      %p200 = scmp.ne.s32.totalorder %s192, %s194
      %p201 = scmp.eq.s32.totalorder %s32, 1
      %p202 = por %p200, %p201
      %p203 = scmp.ne.s32.totalorder %s194, %s195
      %p204 = scmp.eq.s32.totalorder %s32, 0
      %p205 = por %p203, %p204
      %p206 = scmp.ne.s32.totalorder %s194, %s195
      %p207 = scmp.eq.s32.totalorder %s33, 1
      %p208 = por %p206, %p207
      %p210 = scmp.ne.s32.totalorder %s195, %s209
      %p211 = scmp.eq.s32.totalorder %s33, 0
      %p212 = por %p210, %p211
      %s214 = sadd.s32 %s213, 1
      %p217 = scmp.eq.s32.totalorder %s27, 1
      %p218 = scmp.ne.s32.totalorder %s213, %s215
      %p219 = scmp.eq.s32.totalorder %s27, 0
      %p220 = por %p218, %p219
      %p221 = scmp.ne.s32.totalorder %s213, %s215
      %p222 = scmp.eq.s32.totalorder %s32, 1
      %p223 = por %p221, %p222
      %p224 = scmp.ne.s32.totalorder %s215, %s216
      %p225 = scmp.eq.s32.totalorder %s32, 0
      %p226 = por %p224, %p225
      %p227 = scmp.ne.s32.totalorder %s215, %s216
      %p228 = scmp.eq.s32.totalorder %s33, 1
      %p229 = por %p227, %p228
      %p231 = scmp.ne.s32.totalorder %s216, %s230
      %p232 = scmp.eq.s32.totalorder %s33, 0
      %p233 = por %p231, %p232
      %s235 = sadd.s32 %s234, 1
      %p238 = scmp.eq.s32.totalorder %s27, 1
      %p239 = scmp.ne.s32.totalorder %s234, %s236
      %p240 = scmp.eq.s32.totalorder %s27, 0
      %p241 = por %p239, %p240
      %p242 = scmp.ne.s32.totalorder %s234, %s236
      %p243 = scmp.eq.s32.totalorder %s32, 1
      %p244 = por %p242, %p243
      %p245 = scmp.ne.s32.totalorder %s236, %s237
      %p246 = scmp.eq.s32.totalorder %s32, 0
      %p247 = por %p245, %p246
      %p248 = scmp.ne.s32.totalorder %s236, %s237
      %p249 = scmp.eq.s32.totalorder %s33, 1
      %p250 = por %p248, %p249
      %p252 = scmp.ne.s32.totalorder %s237, %s251
      %p253 = scmp.eq.s32.totalorder %s33, 0
      %p254 = por %p252, %p253
      %s256 = sadd.s32 %s255, 1
      %p259 = scmp.eq.s32.totalorder %s27, 1
      %p260 = scmp.ne.s32.totalorder %s255, %s257
      %p261 = scmp.eq.s32.totalorder %s27, 0
      %p262 = por %p260, %p261
      %p263 = scmp.ne.s32.totalorder %s255, %s257
      %p264 = scmp.eq.s32.totalorder %s32, 1
      %p265 = por %p263, %p264
      %p266 = scmp.ne.s32.totalorder %s257, %s258
      %p267 = scmp.eq.s32.totalorder %s32, 0
      %p268 = por %p266, %p267
      %p269 = scmp.ne.s32.totalorder %s257, %s258
      %p270 = scmp.eq.s32.totalorder %s33, 1
      %p271 = por %p269, %p270
      %p273 = scmp.ne.s32.totalorder %s258, %s272
      %p274 = scmp.eq.s32.totalorder %s33, 0
      %p275 = por %p273, %p274
      %s277 = sadd.s32 %s276, 1
      %p280 = scmp.eq.s32.totalorder %s27, 1
      %p281 = scmp.ne.s32.totalorder %s276, %s278
      %p282 = scmp.eq.s32.totalorder %s27, 0
      %p283 = por %p281, %p282
      %p284 = scmp.ne.s32.totalorder %s276, %s278
      %p285 = scmp.eq.s32.totalorder %s32, 1
      %p286 = por %p284, %p285
      %p287 = scmp.ne.s32.totalorder %s278, %s279
      %p288 = scmp.eq.s32.totalorder %s32, 0
      %p289 = por %p287, %p288
      %p290 = scmp.ne.s32.totalorder %s278, %s279
      %p291 = scmp.eq.s32.totalorder %s33, 1
      %p292 = por %p290, %p291
      %p294 = scmp.ne.s32.totalorder %s279, %s293
      %p295 = scmp.eq.s32.totalorder %s33, 0
      %p296 = por %p294, %p295
      %s298 = sadd.s32 %s297, 1
      %p301 = scmp.eq.s32.totalorder %s27, 1
      %p302 = scmp.ne.s32.totalorder %s297, %s299
      %p303 = scmp.eq.s32.totalorder %s27, 0
      %p304 = por %p302, %p303
      %p305 = scmp.ne.s32.totalorder %s297, %s299
      %p306 = scmp.eq.s32.totalorder %s32, 1
      %p307 = por %p305, %p306
      %p308 = scmp.ne.s32.totalorder %s299, %s300
      %p309 = scmp.eq.s32.totalorder %s32, 0
      %p310 = por %p308, %p309
      %p311 = scmp.ne.s32.totalorder %s299, %s300
      %p312 = scmp.eq.s32.totalorder %s33, 1
      %p313 = por %p311, %p312
      %p315 = scmp.ne.s32.totalorder %s300, %s314
      %p316 = scmp.eq.s32.totalorder %s33, 0
      %p317 = por %p315, %p316
      %s319 = sadd.s32 %s318, 1
      %p322 = scmp.eq.s32.totalorder %s27, 1
      %p323 = scmp.ne.s32.totalorder %s318, %s320
      %p324 = scmp.eq.s32.totalorder %s27, 0
      %p325 = por %p323, %p324
      %p326 = scmp.ne.s32.totalorder %s318, %s320
      %p327 = scmp.eq.s32.totalorder %s32, 1
      %p328 = por %p326, %p327
      %p329 = scmp.ne.s32.totalorder %s320, %s321
      %p330 = scmp.eq.s32.totalorder %s32, 0
      %p331 = por %p329, %p330
      %p332 = scmp.ne.s32.totalorder %s320, %s321
      %p333 = scmp.eq.s32.totalorder %s33, 1
      %p334 = por %p332, %p333
      %p336 = scmp.ne.s32.totalorder %s321, %s335
      %p337 = scmp.eq.s32.totalorder %s33, 0
      %p338 = por %p336, %p337
      %s340 = sadd.s32 %s339, 1
      %p343 = scmp.eq.s32.totalorder %s27, 1
      %p344 = scmp.ne.s32.totalorder %s339, %s341
      %p345 = scmp.eq.s32.totalorder %s27, 0
      %p346 = por %p344, %p345
      %p347 = scmp.ne.s32.totalorder %s339, %s341
      %p348 = scmp.eq.s32.totalorder %s32, 1
      %p349 = por %p347, %p348
      %p350 = scmp.ne.s32.totalorder %s341, %s342
      %p351 = scmp.eq.s32.totalorder %s32, 0
      %p352 = por %p350, %p351
      %p353 = scmp.ne.s32.totalorder %s341, %s342
      %p354 = scmp.eq.s32.totalorder %s33, 1
      %p355 = por %p353, %p354
      %p357 = scmp.ne.s32.totalorder %s342, %s356
      %p358 = scmp.eq.s32.totalorder %s33, 0
      %p359 = por %p357, %p358
      %s360 = ssub.s32 %s36, %s45
      %p361 = scmp.eq.s32.totalorder %s360, 0
      %s363 = sadd.s32 %s362, 1
      %s364 = scalar_select %p361, %s362, %s363
      %p367 = pneg %p361
      %p368 = scmp.eq.s32.totalorder %s27, 1
      %p369 = por %p367, %p368
      %p370 = scmp.ne.s32.totalorder %s362, %s365
      %p371 = scmp.eq.s32.totalorder %s27, 0
      %p372 = por %p370, %p371
      %p373 = scmp.ne.s32.totalorder %s362, %s365
      %p374 = scmp.eq.s32.totalorder %s32, 1
      %p375 = por %p373, %p374
      %p376 = scmp.ne.s32.totalorder %s365, %s366
      %p377 = scmp.eq.s32.totalorder %s32, 0
      %p378 = por %p376, %p377
      %p379 = scmp.ne.s32.totalorder %s365, %s366
      %p380 = scmp.eq.s32.totalorder %s33, 1
      %p381 = por %p379, %p380
      %p383 = scmp.ne.s32.totalorder %s366, %s382
      %p384 = scmp.eq.s32.totalorder %s33, 0
      %p385 = por %p383, %p384
      %s386 = ssub.s32 %s36, %s45
      %p387 = scmp.eq.s32.totalorder %s386, 0
      %s389 = sadd.s32 %s388, 1
      %s390 = scalar_select %p387, %s388, %s389
      %p393 = pneg %p387
      %p394 = scmp.eq.s32.totalorder %s27, 1
      %p395 = por %p393, %p394
      %p396 = scmp.ne.s32.totalorder %s388, %s391
      %p397 = scmp.eq.s32.totalorder %s27, 0
      %p398 = por %p396, %p397
      %p399 = scmp.ne.s32.totalorder %s388, %s391
      %p400 = scmp.eq.s32.totalorder %s32, 1
      %p401 = por %p399, %p400
      %p402 = scmp.ne.s32.totalorder %s391, %s392
      %p403 = scmp.eq.s32.totalorder %s32, 0
      %p404 = por %p402, %p403
      %p405 = scmp.ne.s32.totalorder %s391, %s392
      %p406 = scmp.eq.s32.totalorder %s33, 1
      %p407 = por %p405, %p406
      %p409 = scmp.ne.s32.totalorder %s392, %s408
      %p410 = scmp.eq.s32.totalorder %s33, 0
      %p411 = por %p409, %p410
      %s412 = ssub.s32 %s36, %s45
      %p413 = scmp.eq.s32.totalorder %s412, 0
      %s415 = sadd.s32 %s414, 1
      %s416 = scalar_select %p413, %s414, %s415
      %p419 = pneg %p413
      %p420 = scmp.eq.s32.totalorder %s27, 1
      %p421 = por %p419, %p420
      %p422 = scmp.ne.s32.totalorder %s414, %s417
      %p423 = scmp.eq.s32.totalorder %s27, 0
      %p424 = por %p422, %p423
      %p425 = scmp.ne.s32.totalorder %s414, %s417
      %p426 = scmp.eq.s32.totalorder %s32, 1
      %p427 = por %p425, %p426
      %p428 = scmp.ne.s32.totalorder %s417, %s418
      %p429 = scmp.eq.s32.totalorder %s32, 0
      %p430 = por %p428, %p429
      %p431 = scmp.ne.s32.totalorder %s417, %s418
      %p432 = scmp.eq.s32.totalorder %s33, 1
      %p433 = por %p431, %p432
      %p435 = scmp.ne.s32.totalorder %s418, %s434
      %p436 = scmp.eq.s32.totalorder %s33, 0
      %p437 = por %p435, %p436
      %s439 = sadd.s32 %s438, 1
      %p442 = scmp.eq.s32.totalorder %s27, 1
      %p443 = scmp.ne.s32.totalorder %s438, %s440
      %p444 = scmp.eq.s32.totalorder %s27, 0
      %p445 = por %p443, %p444
      %p446 = scmp.ne.s32.totalorder %s438, %s440
      %p447 = scmp.eq.s32.totalorder %s32, 1
      %p448 = por %p446, %p447
      %p449 = scmp.ne.s32.totalorder %s440, %s441
      %p450 = scmp.eq.s32.totalorder %s32, 0
      %p451 = por %p449, %p450
      %p452 = scmp.ne.s32.totalorder %s440, %s441
      %p453 = scmp.eq.s32.totalorder %s33, 1
      %p454 = por %p452, %p453
      %p456 = scmp.ne.s32.totalorder %s441, %s455
      %p457 = scmp.eq.s32.totalorder %s33, 0
      %p458 = por %p456, %p457
      %s459 = ssub.s32 %s34, %s53
      %s460 = ssub.s32 %s35, %s49
      %s461 = sor.u32 %s459, %s460
      %p462 = scmp.eq.s32.totalorder %s461, 0
      %s464 = sadd.s32 %s463, 1
      %s465 = scalar_select %p462, %s463, %s464
      %p468 = pneg %p462
      %p469 = scmp.eq.s32.totalorder %s27, 1
      %p470 = por %p468, %p469
      %p471 = scmp.ne.s32.totalorder %s463, %s466
      %p472 = scmp.eq.s32.totalorder %s27, 0
      %p473 = por %p471, %p472
      %p474 = scmp.ne.s32.totalorder %s463, %s466
      %p475 = scmp.eq.s32.totalorder %s32, 1
      %p476 = por %p474, %p475
      %p477 = scmp.ne.s32.totalorder %s466, %s467
      %p478 = scmp.eq.s32.totalorder %s32, 0
      %p479 = por %p477, %p478
      %p480 = scmp.ne.s32.totalorder %s466, %s467
      %p481 = scmp.eq.s32.totalorder %s33, 1
      %p482 = por %p480, %p481
      %p484 = scmp.ne.s32.totalorder %s467, %s483
      %p485 = scmp.eq.s32.totalorder %s33, 0
      %p486 = por %p484, %p485
      %p487 = scmp.le.s32.totalorder 1, %s27
      %p488 = scmp.lt.s32.totalorder %s27, 3
      %p489 = pnand %p487, %p488
      %p490 = pneg %p489
      // Predicated region
      $region9: #{tpu_custom_call.1} parent=5 // pred_check
        _
      $region10: #{tpu_custom_call.1} parent=5 // pred_check_branch
        %492 = sbr.rel (%p489) target = $region12
      $region11: #{tpu_custom_call.1} parent=5 // pred_region
        %s493 = ssub.s32 %s27, 1
        // Predicated region
        $region13: #{tpu_custom_call.1} parent=11 // pred_check
          %p494 = pneg %p121
        $region14: #{tpu_custom_call.1} parent=11 // pred_check_branch
          %496 = sbr.rel (%p494) target = $region16
        $region15: #{tpu_custom_call.1} parent=11 // pred_region
          _
        $region16: #{tpu_custom_call.1} parent=11 // pred_fallthru
          _
        // Predicated region
        $region17: #{tpu_custom_call.1} parent=11 // pred_check
          %p497 = pneg %p142
        $region18: #{tpu_custom_call.1} parent=11 // pred_check_branch
          %499 = sbr.rel (%p497) target = $region20
        $region19: #{tpu_custom_call.1} parent=11 // pred_region
          _
        $region20: #{tpu_custom_call.1} parent=11 // pred_fallthru
          _
        // Predicated region
        $region21: #{tpu_custom_call.1} parent=11 // pred_check
          %p500 = pneg %p163
        $region22: #{tpu_custom_call.1} parent=11 // pred_check_branch
          %502 = sbr.rel (%p500) target = $region24
        $region23: #{tpu_custom_call.1} parent=11 // pred_region
          _
        $region24: #{tpu_custom_call.1} parent=11 // pred_fallthru
          _
        // Predicated region
        $region25: #{tpu_custom_call.1} parent=11 // pred_check
          %p503 = pneg %p184
        $region26: #{tpu_custom_call.1} parent=11 // pred_check_branch
          %505 = sbr.rel (%p503) target = $region28
        $region27: #{tpu_custom_call.1} parent=11 // pred_region
          _
        $region28: #{tpu_custom_call.1} parent=11 // pred_fallthru
          _
        // Predicated region
        $region29: #{tpu_custom_call.1} parent=11 // pred_check
          %p506 = pneg %p205
        $region30: #{tpu_custom_call.1} parent=11 // pred_check_branch
          %508 = sbr.rel (%p506) target = $region32
        $region31: #{tpu_custom_call.1} parent=11 // pred_region
          _
        $region32: #{tpu_custom_call.1} parent=11 // pred_fallthru
          _
        // Predicated region
        $region33: #{tpu_custom_call.1} parent=11 // pred_check
          %p509 = pneg %p226
        $region34: #{tpu_custom_call.1} parent=11 // pred_check_branch
          %511 = sbr.rel (%p509) target = $region36
        $region35: #{tpu_custom_call.1} parent=11 // pred_region
          _
        $region36: #{tpu_custom_call.1} parent=11 // pred_fallthru
          _
        // Predicated region
        $region37: #{tpu_custom_call.1} parent=11 // pred_check
          %p512 = pneg %p247
        $region38: #{tpu_custom_call.1} parent=11 // pred_check_branch
          %514 = sbr.rel (%p512) target = $region40
        $region39: #{tpu_custom_call.1} parent=11 // pred_region
          _
        $region40: #{tpu_custom_call.1} parent=11 // pred_fallthru
          _
        // Predicated region
        $region41: #{tpu_custom_call.1} parent=11 // pred_check
          %p515 = pneg %p268
        $region42: #{tpu_custom_call.1} parent=11 // pred_check_branch
          %517 = sbr.rel (%p515) target = $region44
        $region43: #{tpu_custom_call.1} parent=11 // pred_region
          _
        $region44: #{tpu_custom_call.1} parent=11 // pred_fallthru
          _
        // Predicated region
        $region45: #{tpu_custom_call.1} parent=11 // pred_check
          %p518 = pneg %p289
        $region46: #{tpu_custom_call.1} parent=11 // pred_check_branch
          %520 = sbr.rel (%p518) target = $region48
        $region47: #{tpu_custom_call.1} parent=11 // pred_region
          _
        $region48: #{tpu_custom_call.1} parent=11 // pred_fallthru
          _
        // Predicated region
        $region49: #{tpu_custom_call.1} parent=11 // pred_check
          %p521 = pneg %p310
        $region50: #{tpu_custom_call.1} parent=11 // pred_check_branch
          %523 = sbr.rel (%p521) target = $region52
        $region51: #{tpu_custom_call.1} parent=11 // pred_region
          _
        $region52: #{tpu_custom_call.1} parent=11 // pred_fallthru
          _
        // Predicated region
        $region53: #{tpu_custom_call.1} parent=11 // pred_check
          %p524 = pneg %p331
        $region54: #{tpu_custom_call.1} parent=11 // pred_check_branch
          %526 = sbr.rel (%p524) target = $region56
        $region55: #{tpu_custom_call.1} parent=11 // pred_region
          _
        $region56: #{tpu_custom_call.1} parent=11 // pred_fallthru
          _
        // Predicated region
        $region57: #{tpu_custom_call.1} parent=11 // pred_check
          %p527 = pneg %p352
        $region58: #{tpu_custom_call.1} parent=11 // pred_check_branch
          %529 = sbr.rel (%p527) target = $region60
        $region59: #{tpu_custom_call.1} parent=11 // pred_region
          _
        $region60: #{tpu_custom_call.1} parent=11 // pred_fallthru
          _
        // Predicated region
        $region61: #{tpu_custom_call.1} parent=11 // pred_check
          %p530 = pneg %p378
        $region62: #{tpu_custom_call.1} parent=11 // pred_check_branch
          %532 = sbr.rel (%p530) target = $region64
        $region63: #{tpu_custom_call.1} parent=11 // pred_region
          %p533 = scmp.lt.s32.totalorder %s39, 0
          %s534 = scalar_select %p533, %s39, 0
          %s535 = smul.addr %s534, 4
          %s536 = scalar_lea.vmem %s14, %s535
        $region64: #{tpu_custom_call.1} parent=11 // pred_fallthru
          _
        // Predicated region
        $region65: #{tpu_custom_call.1} parent=11 // pred_check
          %p537 = pneg %p404
        $region66: #{tpu_custom_call.1} parent=11 // pred_check_branch
          %539 = sbr.rel (%p537) target = $region68
        $region67: #{tpu_custom_call.1} parent=11 // pred_region
          %p540 = scmp.lt.s32.totalorder %s39, 0
          %s541 = scalar_select %p540, %s39, 0
          %s542 = scalar_lea.vmem %s15, %s541
        $region68: #{tpu_custom_call.1} parent=11 // pred_fallthru
          _
        // Predicated region
        $region69: #{tpu_custom_call.1} parent=11 // pred_check
          %p543 = pneg %p430
        $region70: #{tpu_custom_call.1} parent=11 // pred_check_branch
          %545 = sbr.rel (%p543) target = $region72
        $region71: #{tpu_custom_call.1} parent=11 // pred_region
          %s546 = smul.u32 8, %s39
          %p547 = scmp.lt.s32.totalorder %s546, 7
          %s548 = scalar_select %p547, %s546, 7
          %s549 = smul.addr %s548, 4
          %s550 = scalar_lea.vmem %s16, %s549
          %s551 = smul.u32 8, %s39
        $region72: #{tpu_custom_call.1} parent=11 // pred_fallthru
          _
        // Predicated region
        $region73: #{tpu_custom_call.1} parent=11 // pred_check
          %p552 = pneg %p451
        $region74: #{tpu_custom_call.1} parent=11 // pred_check_branch
          %554 = sbr.rel (%p552) target = $region76
        $region75: #{tpu_custom_call.1} parent=11 // pred_region
          _
        $region76: #{tpu_custom_call.1} parent=11 // pred_fallthru
          _
      $region12: #{tpu_custom_call.1} parent=5 // pred_fallthru
        _
      %p555 = scmp.lt.s32.totalorder %s27, 2
      // Predicated region
      $region77: #{tpu_custom_call.1} parent=5 // pred_check
        %p556 = pneg %p555
      $region78: #{tpu_custom_call.1} parent=5 // pred_check_branch
        %558 = sbr.rel (%p556) target = $region80
      $region79: #{tpu_custom_call.1} parent=5 // pred_region
        // Predicated region
        $region81: #{tpu_custom_call.1} parent=79 // pred_check
          %p559 = pneg %p68
        $region82: #{tpu_custom_call.1} parent=79 // pred_check_branch
          %561 = sbr.rel (%p559) target = $region84
        $region83: #{tpu_custom_call.1} parent=79 // pred_region
          %p562 = scmp.lt.s32.totalorder %s34, 1
          %s563 = scalar_select %p562, %s34, 1
          %p564 = scmp.lt.s32.totalorder %s35, 0
          %s565 = scalar_select %p564, %s35, 0
          %s566 = sadd.s32 %s565, %s563
          %s567 = smul.addr %s566, 8
          %s568 = scalar_lea.vmem %s0, %s567
        $region84: #{tpu_custom_call.1} parent=79 // pred_fallthru
          _
        // Predicated region
        $region85: #{tpu_custom_call.1} parent=79 // pred_check
          %p569 = pneg %p94
        $region86: #{tpu_custom_call.1} parent=79 // pred_check_branch
          %571 = sbr.rel (%p569) target = $region88
        $region87: #{tpu_custom_call.1} parent=79 // pred_region
          %p572 = scmp.lt.s32.totalorder %s34, 1
          %s573 = scalar_select %p572, %s34, 1
          %s574 = smul.addr %s573, 8
          %s575 = scalar_lea.vmem %s1, %s574
        $region88: #{tpu_custom_call.1} parent=79 // pred_fallthru
          _
      $region80: #{tpu_custom_call.1} parent=5 // pred_fallthru
        _
      %p576 = scmp.le.s32.totalorder 1, %s27
      %p577 = scmp.lt.s32.totalorder %s27, 3
      %p578 = pnand %p576, %p577
      %p579 = pneg %p578
      // Predicated region
      $region89: #{tpu_custom_call.1} parent=5 // pred_check
        _
      $region90: #{tpu_custom_call.1} parent=5 // pred_check_branch
        %581 = sbr.rel (%p578) target = $region92
      $region91: #{tpu_custom_call.1} parent=5 // pred_region
        %s582 = ssub.s32 %s27, 1
        %p583 = scmp.lt.s32.totalorder %s37, 1
        %s584 = scalar_select %p583, %s37, 1
        %p585 = scmp.lt.s32.totalorder %s38, 0
        %s586 = scalar_select %p585, %s38, 0
        %s587 = sadd.s32 %s586, %s584
        %s588 = smul.addr %s587, 8
        %s589 = scalar_lea.vmem %s0, %s588
        %p590 = pneg %p74
        %p591 = pneg %p71
        %p592 = scmp.lt.s32.totalorder %s37, 1
        %s593 = scalar_select %p592, %s37, 1
        %s594 = smul.addr %s593, 8
        %s595 = scalar_lea.vmem %s1, %s594
        %p596 = pneg %p100
        %p597 = pneg %p97
        %p598 = pneg %p121
        %p599 = pneg %p118
        %p600 = pneg %p142
        %p601 = pneg %p139
        %p602 = pneg %p163
        %p603 = pneg %p160
        %p604 = pneg %p184
        %p605 = pneg %p181
        %p606 = pneg %p205
        %p607 = pneg %p202
        %p608 = pneg %p226
        %p609 = pneg %p223
        %p610 = pneg %p247
        %p611 = pneg %p244
        %p612 = pneg %p268
        %p613 = pneg %p265
        %p614 = pneg %p289
        %p615 = pneg %p286
        %p616 = pneg %p310
        %p617 = pneg %p307
        %p618 = pneg %p331
        %p619 = pneg %p328
        %p620 = pneg %p352
        %p621 = pneg %p349
        %p622 = scmp.lt.s32.totalorder %s39, 0
        %s623 = scalar_select %p622, %s39, 0
        %s624 = smul.addr %s623, 4
        %s625 = scalar_lea.vmem %s14, %s624
        %p626 = pneg %p378
        %p627 = pneg %p375
        %p628 = scmp.lt.s32.totalorder %s39, 0
        %s629 = scalar_select %p628, %s39, 0
        %s630 = scalar_lea.vmem %s15, %s629
        %p631 = pneg %p404
        %p632 = pneg %p401
        %s633 = smul.u32 8, %s39
        %p634 = scmp.lt.s32.totalorder %s633, 7
        %s635 = scalar_select %p634, %s633, 7
        %s636 = smul.addr %s635, 4
        %s637 = scalar_lea.vmem %s16, %s636
        %p638 = pneg %p430
        %p639 = pneg %p427
        %p640 = pneg %p451
        %p641 = pneg %p448
        %p642 = pneg %p479
        %p643 = pneg %p476
        %s644 = sand.u32 %s466, 1
        %s645 = scalar_lea.sflag [#allocation6], %s644
        %s646 = sand.u32 %s466, 1
        %s647 = smul.addr %s646, 8
        %s648 = scalar_lea.vmem [#allocation5], %s647
        %p649 = scmp.lt.s32.totalorder %s37, 1
        %s650 = scalar_select %p649, %s37, 1
        %p651 = scmp.lt.s32.totalorder %s38, 0
        %s652 = scalar_select %p651, %s38, 0
        %s653 = sadd.s32 %s652, %s650
        %s654 = smul.addr %s653, 8
        %s655 = scalar_lea.vmem %s0, %s654
        %p656 = scmp.lt.s32.totalorder %s37, 1
        %s657 = scalar_select %p656, %s37, 1
        %s658 = smul.addr %s657, 8
        %s659 = scalar_lea.vmem %s1, %s658
        %p660 = scmp.lt.s32.totalorder %s39, 0
        %s661 = scalar_select %p660, %s39, 0
        %s662 = smul.addr %s661, 4
        %s663 = scalar_lea.vmem %s14, %s662
        %p664 = scmp.lt.s32.totalorder %s39, 0
        %s665 = scalar_select %p664, %s39, 0
        %s666 = scalar_lea.vmem %s15, %s665
        %s667 = smul.u32 8, %s39
        %p668 = scmp.lt.s32.totalorder %s667, 7
        %s669 = scalar_select %p668, %s667, 7
        %s670 = smul.addr %s669, 4
        %s671 = scalar_lea.vmem %s16, %s670
        %s672 = smul.u32 8, %s39
        %p674 = scmp.eq.s32.totalorder %s39, 0
        // Predicated region
        $region93: #{tpu_custom_call.1} parent=91 // pred_check
          %p675 = pneg %p674
        $region94: #{tpu_custom_call.1} parent=91 // pred_check_branch
          %677 = sbr.rel (%p675) target = $region96
        $region95: #{tpu_custom_call.1} parent=91 // pred_region
          %v678 = vld [vmem:[%s655] sm:$0xff]
          %v679 = vld [vmem:[%s659] sm:$0xff]
          %v680 = vld [vmem:[%s2] sm:$0x1]
          %v681 = vld [vmem:[%s3] sm:$0x1]
          %vm682 = vcmask 261120
          %v683 = vsel %vm682, %v678, 0.0
          %684 = vadd.xlane.f32.xlu0 %v683
          %v685 = vpop.xlane.xlu0 %684
          %v686 = vrcp.pop 32.0
          %v687 = vmul.f32 %v685, %v686
          %v688 = vsub.f32 %v678, %v687
          %v689 = vmul.f32 %v688, %v688
          %v690 = vsel %vm682, %v689, 0.0
          %691 = vadd.xlane.f32.xlu0 %v690
          %v692 = vpop.xlane.xlu0 %691
          %v693 = vmul.f32 %v692, %v686
          %v694 = vadd.f32 %v693, 1e-05
          %v695 = vrsqrt.pop %v694
          %v696 = vmul.f32 %v688, %v695
          %v698 = vlaneseq
          %v699 = vshrl.u32 %v698, 7
          %v700 = vsub.s32 0, %v699
          %v701 = vrot.slane %v680, %v700
          %v703 = vmul.f32 %v696, %v701
          %v705 = vlaneseq
          %v706 = vshrl.u32 %v705, 7
          %v707 = vsub.s32 0, %v706
          %v708 = vrot.slane %v681, %v707
          %v710 = vadd.f32 %v703, %v708
          %v711 = vpack.c.bf16 %v710, %v710
          %v712 = vsel %vm682, %v679, 0.0
          %713 = vadd.xlane.f32.xlu0 %v712
          %v714 = vpop.xlane.xlu0 %713
          %v715 = vmul.f32 %v714, %v686
          %v716 = vsub.f32 %v679, %v715
          %v717 = vmul.f32 %v716, %v716
          %v718 = vsel %vm682, %v717, 0.0
          %719 = vadd.xlane.f32.xlu0 %v718
          %v720 = vpop.xlane.xlu0 %719
          %v721 = vmul.f32 %v720, %v686
          %v722 = vadd.f32 %v721, 1e-05
          %v723 = vrsqrt.pop %v722
          %v724 = vmul.f32 %v716, %v723
          %v725 = vmul.f32 %v724, %v701
          %v726 = vadd.f32 %v725, %v708
          %v727 = vpack.c.bf16 %v726, %v726
          %v728 = vld [vmem:[%s4] sm:$0xf]
          %v729 = vld [vmem:[%s4 + $0x4] sm:$0xf]
          %v730 = vld [vmem:[%s4 + $0x8] sm:$0xf]
          %v731 = vld [vmem:[%s4 + $0xc] sm:$0xf]
          %v732 = vld [vmem:[%s5] sm:$0x1]
          %v734 = vlaneseq
          %v735 = vshrl.u32 %v734, 7
          %v736 = vsub.s32 0, %v735
          %v737 = vrot.slane %v732, %v736
          %v743 = vunpack.c.l.b16 %v728
          %v744 = vunpack.c.l.b16 %v729
          %v745 = vunpack.c.l.b16 %v730
          %v746 = vunpack.c.l.b16 %v731
          %v747 = vpack.c.b16 %v744, %v743
          %v748 = vpack.c.b16 %v746, %v745
          %v752 = vsel %vm682, %v711, 0
          %754 = vmatprep.subr.bf16.mxu0 0
          %755 = vmatpush1.bf16.msra.mxu0 %v747
          %756 = vmatprep.subr.bf16.mxu0 0
          %757 = vmatpush1.bf16.msra.mxu0 %v748
          %758 = vmatprep.subr.bf16.mxu0 0
          %759 = vmatpush1.bf16.msra.mxu0 0
          %760 = vmatprep.subr.bf16.mxu0 0
          %761 = vmatpush1.bf16.msra.mxu0 0
          %762 = vmatprep.subr.bf16.mxu0 0
          %763 = vmatpush1.bf16.msra.mxu0 0
          %764 = vmatprep.subr.bf16.mxu0 0
          %765 = vmatpush1.bf16.msra.mxu0 0
          %766 = vmatprep.subr.bf16.mxu0 0
          %767 = vmatpush1.bf16.msra.mxu0 0
          %768 = vmatprep.subr.bf16.mxu0 0
          %769 = vmatpush1.bf16.msra.mxu0 0
          %770 = vmatprep.subr.bf16.mxu0 0
          %771 = vmatpush1.bf16.msra.mxu0 0
          %772 = vmatprep.subr.bf16.mxu0 0
          %773 = vmatpush1.bf16.msra.mxu0 0
          %774 = vmatprep.subr.bf16.mxu0 0
          %775 = vmatpush1.bf16.msra.mxu0 0
          %776 = vmatprep.subr.bf16.mxu0 0
          %777 = vmatpush1.bf16.msra.mxu0 0
          %778 = vmatprep.subr.bf16.mxu0 0
          %779 = vmatpush1.bf16.msra.mxu0 0
          %780 = vmatprep.subr.bf16.mxu0 0
          %781 = vmatpush1.bf16.msra.mxu0 0
          %782 = vmatprep.subr.bf16.mxu0 0
          %783 = vmatpush1.bf16.msra.mxu0 0
          %784 = vmatprep.subr.bf16.mxu0 0
          %785 = vmatpush1.bf16.msra.mxu0 0
          %786 = vmatprep.mubr.bf16.mxu0 0
          %787 = vmatmul.mubr.bf16.gmra.mrb[0].mxu0 %v752
          %v788 = vpop.f32.mrb[0].mxu0
          %v789 = vadd.f32 %v737, %v788
          %v790 = vpop.f32.mrb[0].mxu0
          %v791 = vpop.f32.mrb[0].mxu0
          %v792 = vpop.f32.mrb[0].mxu0
          %793 = vdwg.mxu0
          %v794 = vld [vmem:[%s6] sm:$0xf]
          %v795 = vld [vmem:[%s6 + $0x4] sm:$0xf]
          %v796 = vld [vmem:[%s6 + $0x8] sm:$0xf]
          %v797 = vld [vmem:[%s6 + $0xc] sm:$0xf]
          %v798 = vld [vmem:[%s7] sm:$0x1]
          %v800 = vlaneseq
          %v801 = vshrl.u32 %v800, 7
          %v802 = vsub.s32 0, %v801
          %v803 = vrot.slane %v798, %v802
          %v809 = vunpack.c.l.b16 %v794
          %v810 = vunpack.c.l.b16 %v795
          %v811 = vunpack.c.l.b16 %v796
          %v812 = vunpack.c.l.b16 %v797
          %v813 = vpack.c.b16 %v810, %v809
          %v814 = vpack.c.b16 %v812, %v811
          %v818 = vsel %vm682, %v727, 0
          %820 = vmatprep.subr.bf16.mxu0 0
          %821 = vmatpush1.bf16.msra.mxu0 %v813
          %822 = vmatprep.subr.bf16.mxu0 0
          %823 = vmatpush1.bf16.msra.mxu0 %v814
          %824 = vmatprep.subr.bf16.mxu0 0
          %825 = vmatpush1.bf16.msra.mxu0 0
          %826 = vmatprep.subr.bf16.mxu0 0
          %827 = vmatpush1.bf16.msra.mxu0 0
          %828 = vmatprep.subr.bf16.mxu0 0
          %829 = vmatpush1.bf16.msra.mxu0 0
          %830 = vmatprep.subr.bf16.mxu0 0
          %831 = vmatpush1.bf16.msra.mxu0 0
          %832 = vmatprep.subr.bf16.mxu0 0
          %833 = vmatpush1.bf16.msra.mxu0 0
          %834 = vmatprep.subr.bf16.mxu0 0
          %835 = vmatpush1.bf16.msra.mxu0 0
          %836 = vmatprep.subr.bf16.mxu0 0
          %837 = vmatpush1.bf16.msra.mxu0 0
          %838 = vmatprep.subr.bf16.mxu0 0
          %839 = vmatpush1.bf16.msra.mxu0 0
          %840 = vmatprep.subr.bf16.mxu0 0
          %841 = vmatpush1.bf16.msra.mxu0 0
          %842 = vmatprep.subr.bf16.mxu0 0
          %843 = vmatpush1.bf16.msra.mxu0 0
          %844 = vmatprep.subr.bf16.mxu0 0
          %845 = vmatpush1.bf16.msra.mxu0 0
          %846 = vmatprep.subr.bf16.mxu0 0
          %847 = vmatpush1.bf16.msra.mxu0 0
          %848 = vmatprep.subr.bf16.mxu0 0
          %849 = vmatpush1.bf16.msra.mxu0 0
          %850 = vmatprep.subr.bf16.mxu0 0
          %851 = vmatpush1.bf16.msra.mxu0 0
          %852 = vmatprep.mubr.bf16.mxu0 0
          %853 = vmatmul.mubr.bf16.gmra.mrb[0].mxu0 %v818
          %v854 = vpop.f32.mrb[0].mxu0
          %v855 = vadd.f32 %v803, %v854
          %v856 = vpop.f32.mrb[0].mxu0
          %v857 = vpop.f32.mrb[0].mxu0
          %v858 = vpop.f32.mrb[0].mxu0
          %859 = vdwg.mxu0
          %v860 = vld [vmem:[%s8] sm:$0xf]
          %v861 = vld [vmem:[%s8 + $0x4] sm:$0xf]
          %v862 = vld [vmem:[%s8 + $0x8] sm:$0xf]
          %v863 = vld [vmem:[%s8 + $0xc] sm:$0xf]
          %v864 = vld [vmem:[%s9] sm:$0x1]
          %v866 = vlaneseq
          %v867 = vshrl.u32 %v866, 7
          %v868 = vsub.s32 0, %v867
          %v869 = vrot.slane %v864, %v868
          %v875 = vunpack.c.l.b16 %v860
          %v876 = vunpack.c.l.b16 %v861
          %v877 = vunpack.c.l.b16 %v862
          %v878 = vunpack.c.l.b16 %v863
          %v879 = vpack.c.b16 %v876, %v875
          %v880 = vpack.c.b16 %v878, %v877
          %883 = vmatprep.subr.bf16.mxu0 0
          %884 = vmatpush1.bf16.msra.mxu0 %v879
          %885 = vmatprep.subr.bf16.mxu0 0
          %886 = vmatpush1.bf16.msra.mxu0 %v880
          %887 = vmatprep.subr.bf16.mxu0 0
          %888 = vmatpush1.bf16.msra.mxu0 0
          %889 = vmatprep.subr.bf16.mxu0 0
          %890 = vmatpush1.bf16.msra.mxu0 0
          %891 = vmatprep.subr.bf16.mxu0 0
          %892 = vmatpush1.bf16.msra.mxu0 0
          %893 = vmatprep.subr.bf16.mxu0 0
          %894 = vmatpush1.bf16.msra.mxu0 0
          %895 = vmatprep.subr.bf16.mxu0 0
          %896 = vmatpush1.bf16.msra.mxu0 0
          %897 = vmatprep.subr.bf16.mxu0 0
          %898 = vmatpush1.bf16.msra.mxu0 0
          %899 = vmatprep.subr.bf16.mxu0 0
          %900 = vmatpush1.bf16.msra.mxu0 0
          %901 = vmatprep.subr.bf16.mxu0 0
          %902 = vmatpush1.bf16.msra.mxu0 0
          %903 = vmatprep.subr.bf16.mxu0 0
          %904 = vmatpush1.bf16.msra.mxu0 0
          %905 = vmatprep.subr.bf16.mxu0 0
          %906 = vmatpush1.bf16.msra.mxu0 0
          %907 = vmatprep.subr.bf16.mxu0 0
          %908 = vmatpush1.bf16.msra.mxu0 0
          %909 = vmatprep.subr.bf16.mxu0 0
          %910 = vmatpush1.bf16.msra.mxu0 0
          %911 = vmatprep.subr.bf16.mxu0 0
          %912 = vmatpush1.bf16.msra.mxu0 0
          %913 = vmatprep.subr.bf16.mxu0 0
          %914 = vmatpush1.bf16.msra.mxu0 0
          %915 = vmatprep.mubr.bf16.mxu0 0
          %916 = vmatmul.mubr.bf16.gmra.mrb[0].mxu0 %v818
          %v917 = vpop.f32.mrb[0].mxu0
          %v918 = vadd.f32 %v869, %v917
          %v919 = vpop.f32.mrb[0].mxu0
          %v920 = vpop.f32.mrb[0].mxu0
          %v921 = vpop.f32.mrb[0].mxu0
          %922 = vdwg.mxu0
          %v923 = vpack.c.bf16 %v789, %v789
          %v924 = vpack.c.bf16 %v855, %v855
          %vm925 = vcmask 64512
          %v927 = vsel %vm925, %v923, 0
          %v930 = vsel %vm925, %v924, 0
          %932 = vmatprep.subr.bf16.mxu0 0
          %933 = vmatpush1.bf16.xpose.msra.mxu0 %v930
          %934 = vmatprep.subr.bf16.mxu0 0
          %935 = vmatpush1.bf16.xpose.msra.mxu0 0
          %936 = vmatprep.subr.bf16.mxu0 0
          %937 = vmatpush1.bf16.xpose.msra.mxu0 0
          %938 = vmatprep.subr.bf16.mxu0 0
          %939 = vmatpush1.bf16.xpose.msra.mxu0 0
          %940 = vmatprep.subr.bf16.mxu0 0
          %941 = vmatpush1.bf16.xpose.msra.mxu0 0
          %942 = vmatprep.subr.bf16.mxu0 0
          %943 = vmatpush1.bf16.xpose.msra.mxu0 0
          %944 = vmatprep.subr.bf16.mxu0 0
          %945 = vmatpush1.bf16.xpose.msra.mxu0 0
          %946 = vmatprep.subr.bf16.mxu0 0
          %947 = vmatpush1.bf16.xpose.msra.mxu0 0
          %948 = vmatprep.subr.bf16.mxu0 0
          %949 = vmatpush1.bf16.xpose.msra.mxu0 0
          %950 = vmatprep.subr.bf16.mxu0 0
          %951 = vmatpush1.bf16.xpose.msra.mxu0 0
          %952 = vmatprep.subr.bf16.mxu0 0
          %953 = vmatpush1.bf16.xpose.msra.mxu0 0
          %954 = vmatprep.subr.bf16.mxu0 0
          %955 = vmatpush1.bf16.xpose.msra.mxu0 0
          %956 = vmatprep.subr.bf16.mxu0 0
          %957 = vmatpush1.bf16.xpose.msra.mxu0 0
          %958 = vmatprep.subr.bf16.mxu0 0
          %959 = vmatpush1.bf16.xpose.msra.mxu0 0
          %960 = vmatprep.subr.bf16.mxu0 0
          %961 = vmatpush1.bf16.xpose.msra.mxu0 0
          %962 = vmatprep.subr.bf16.mxu0 0
          %963 = vmatpush1.bf16.xpose.msra.mxu0 0
          %964 = vmatprep.mubr.bf16.mxu0 0
          %965 = vmatmul.mubr.bf16.gmra.mrb[0].mxu0 %v927
          %v966 = vpop.f32.mrb[0].mxu0
          %v967 = vadd.f32 0.0, %v966
          %v968 = vpop.f32.mrb[0].mxu0
          %v969 = vpop.f32.mrb[0].mxu0
          %v970 = vpop.f32.mrb[0].mxu0
          %971 = vdwg.mxu0
          %v972 = vmul.f32 %v967, 0.35355338
          %v973 = vsel %vm925, %v972, -inf
          %974 = vmax.xlane.f32.xlu0 %v973
          %v975 = vpop.xlane.xlu0 %974
          %v976 = vsub.f32 %v972, %v975
          %v977 = vmul.f32 %v976, 1.442695
          %v978 = vpow.pop %v977
          %v979 = vsel %vm925, %v978, 0.0
          %980 = vadd.xlane.f32.xlu0 %v979
          %v981 = vpop.xlane.xlu0 %980
          %v982 = vrcp.pop %v981
          %v983 = vmul.f32 %v978, %v982
          %v984 = vpack.c.bf16 %v983, %v983
          %v985 = vpack.c.bf16 %v918, %v918
          %v987 = vsel %vm925, %v984, 0
          %vm989 = vcmask 1043456
          %v991 = vsel %vm989, %v985, 0
          %993 = vmatprep.subr.bf16.mxu0 0
          %994 = vmatpush1.bf16.msra.mxu0 %v991
          %995 = vmatprep.subr.bf16.mxu0 0
          %996 = vmatpush1.bf16.msra.mxu0 0
          %997 = vmatprep.subr.bf16.mxu0 0
          %998 = vmatpush1.bf16.msra.mxu0 0
          %999 = vmatprep.subr.bf16.mxu0 0
          %1000 = vmatpush1.bf16.msra.mxu0 0
          %1001 = vmatprep.subr.bf16.mxu0 0
          %1002 = vmatpush1.bf16.msra.mxu0 0
          %1003 = vmatprep.subr.bf16.mxu0 0
          %1004 = vmatpush1.bf16.msra.mxu0 0
          %1005 = vmatprep.subr.bf16.mxu0 0
          %1006 = vmatpush1.bf16.msra.mxu0 0
          %1007 = vmatprep.subr.bf16.mxu0 0
          %1008 = vmatpush1.bf16.msra.mxu0 0
          %1009 = vmatprep.subr.bf16.mxu0 0
          %1010 = vmatpush1.bf16.msra.mxu0 0
          %1011 = vmatprep.subr.bf16.mxu0 0
          %1012 = vmatpush1.bf16.msra.mxu0 0
          %1013 = vmatprep.subr.bf16.mxu0 0
          %1014 = vmatpush1.bf16.msra.mxu0 0
          %1015 = vmatprep.subr.bf16.mxu0 0
          %1016 = vmatpush1.bf16.msra.mxu0 0
          %1017 = vmatprep.subr.bf16.mxu0 0
          %1018 = vmatpush1.bf16.msra.mxu0 0
          %1019 = vmatprep.subr.bf16.mxu0 0
          %1020 = vmatpush1.bf16.msra.mxu0 0
          %1021 = vmatprep.subr.bf16.mxu0 0
          %1022 = vmatpush1.bf16.msra.mxu0 0
          %1023 = vmatprep.subr.bf16.mxu0 0
          %1024 = vmatpush1.bf16.msra.mxu0 0
          %1025 = vmatprep.mubr.bf16.mxu0 0
          %1026 = vmatmul.mubr.bf16.gmra.mrb[0].mxu0 %v987
          %v1027 = vpop.f32.mrb[0].mxu0
          %v1028 = vadd.f32 0.0, %v1027
          %v1029 = vpop.f32.mrb[0].mxu0
          %v1030 = vpop.f32.mrb[0].mxu0
          %v1031 = vpop.f32.mrb[0].mxu0
          %1032 = vdwg.mxu0
          %v1033 = vpack.c.bf16 %v1028, %v1028
          %v1034 = vld [vmem:[%s10] sm:$0xf]
          %s1035 = scalar_lea.vmem %s4, 16
          %v1036 = vld [vmem:[%s1035] sm:$0xf]
          %v1037 = vld [vmem:[%s1035 + $0x4] sm:$0xf]
          %v1038 = vld [vmem:[%s1035 + $0x8] sm:$0xf]
          %v1039 = vld [vmem:[%s1035 + $0xc] sm:$0xf]
          %s1040 = scalar_lea.vmem %s5, 1
          %v1041 = vld [vmem:[%s1040] sm:$0x1]
          %v1043 = vlaneseq
          %v1044 = vshrl.u32 %v1043, 7
          %v1045 = vsub.s32 0, %v1044
          %v1046 = vrot.slane %v1041, %v1045
          %v1052 = vunpack.c.l.b16 %v1036
          %v1053 = vunpack.c.l.b16 %v1037
          %v1054 = vunpack.c.l.b16 %v1038
          %v1055 = vunpack.c.l.b16 %v1039
          %v1056 = vpack.c.b16 %v1053, %v1052
          %v1057 = vpack.c.b16 %v1055, %v1054
          %1060 = vmatprep.subr.bf16.mxu0 0
          %1061 = vmatpush1.bf16.msra.mxu0 %v1056
          %1062 = vmatprep.subr.bf16.mxu0 0
          %1063 = vmatpush1.bf16.msra.mxu0 %v1057
          %1064 = vmatprep.subr.bf16.mxu0 0
          %1065 = vmatpush1.bf16.msra.mxu0 0
          %1066 = vmatprep.subr.bf16.mxu0 0
          %1067 = vmatpush1.bf16.msra.mxu0 0
          %1068 = vmatprep.subr.bf16.mxu0 0
          %1069 = vmatpush1.bf16.msra.mxu0 0
          %1070 = vmatprep.subr.bf16.mxu0 0
          %1071 = vmatpush1.bf16.msra.mxu0 0
          %1072 = vmatprep.subr.bf16.mxu0 0
          %1073 = vmatpush1.bf16.msra.mxu0 0
          %1074 = vmatprep.subr.bf16.mxu0 0
          %1075 = vmatpush1.bf16.msra.mxu0 0
          %1076 = vmatprep.subr.bf16.mxu0 0
          %1077 = vmatpush1.bf16.msra.mxu0 0
          %1078 = vmatprep.subr.bf16.mxu0 0
          %1079 = vmatpush1.bf16.msra.mxu0 0
          %1080 = vmatprep.subr.bf16.mxu0 0
          %1081 = vmatpush1.bf16.msra.mxu0 0
          %1082 = vmatprep.subr.bf16.mxu0 0
          %1083 = vmatpush1.bf16.msra.mxu0 0
          %1084 = vmatprep.subr.bf16.mxu0 0
          %1085 = vmatpush1.bf16.msra.mxu0 0
          %1086 = vmatprep.subr.bf16.mxu0 0
          %1087 = vmatpush1.bf16.msra.mxu0 0
          %1088 = vmatprep.subr.bf16.mxu0 0
          %1089 = vmatpush1.bf16.msra.mxu0 0
          %1090 = vmatprep.subr.bf16.mxu0 0
          %1091 = vmatpush1.bf16.msra.mxu0 0
          %1092 = vmatprep.mubr.bf16.mxu0 0
          %1093 = vmatmul.mubr.bf16.gmra.mrb[0].mxu0 %v752
          %v1094 = vpop.f32.mrb[0].mxu0
          %v1095 = vadd.f32 %v1046, %v1094
          %v1096 = vpop.f32.mrb[0].mxu0
          %v1097 = vpop.f32.mrb[0].mxu0
          %v1098 = vpop.f32.mrb[0].mxu0
          %1099 = vdwg.mxu0
          %s1100 = scalar_lea.vmem %s6, 16
          %v1101 = vld [vmem:[%s1100] sm:$0xf]
          %v1102 = vld [vmem:[%s1100 + $0x4] sm:$0xf]
          %v1103 = vld [vmem:[%s1100 + $0x8] sm:$0xf]
          %v1104 = vld [vmem:[%s1100 + $0xc] sm:$0xf]
          %s1105 = scalar_lea.vmem %s7, 1
          %v1106 = vld [vmem:[%s1105] sm:$0x1]
          %v1108 = vlaneseq
          %v1109 = vshrl.u32 %v1108, 7
          %v1110 = vsub.s32 0, %v1109
          %v1111 = vrot.slane %v1106, %v1110
          %v1117 = vunpack.c.l.b16 %v1101
          %v1118 = vunpack.c.l.b16 %v1102
          %v1119 = vunpack.c.l.b16 %v1103
          %v1120 = vunpack.c.l.b16 %v1104
          %v1121 = vpack.c.b16 %v1118, %v1117
          %v1122 = vpack.c.b16 %v1120, %v1119
          %1125 = vmatprep.subr.bf16.mxu0 0
          %1126 = vmatpush1.bf16.msra.mxu0 %v1121
          %1127 = vmatprep.subr.bf16.mxu0 0
          %1128 = vmatpush1.bf16.msra.mxu0 %v1122
          %1129 = vmatprep.subr.bf16.mxu0 0
          %1130 = vmatpush1.bf16.msra.mxu0 0
          %1131 = vmatprep.subr.bf16.mxu0 0
          %1132 = vmatpush1.bf16.msra.mxu0 0
          %1133 = vmatprep.subr.bf16.mxu0 0
          %1134 = vmatpush1.bf16.msra.mxu0 0
          %1135 = vmatprep.subr.bf16.mxu0 0
          %1136 = vmatpush1.bf16.msra.mxu0 0
          %1137 = vmatprep.subr.bf16.mxu0 0
          %1138 = vmatpush1.bf16.msra.mxu0 0
          %1139 = vmatprep.subr.bf16.mxu0 0
          %1140 = vmatpush1.bf16.msra.mxu0 0
          %1141 = vmatprep.subr.bf16.mxu0 0
          %1142 = vmatpush1.bf16.msra.mxu0 0
          %1143 = vmatprep.subr.bf16.mxu0 0
          %1144 = vmatpush1.bf16.msra.mxu0 0
          %1145 = vmatprep.subr.bf16.mxu0 0
          %1146 = vmatpush1.bf16.msra.mxu0 0
          %1147 = vmatprep.subr.bf16.mxu0 0
          %1148 = vmatpush1.bf16.msra.mxu0 0
          %1149 = vmatprep.subr.bf16.mxu0 0
          %1150 = vmatpush1.bf16.msra.mxu0 0
          %1151 = vmatprep.subr.bf16.mxu0 0
          %1152 = vmatpush1.bf16.msra.mxu0 0
          %1153 = vmatprep.subr.bf16.mxu0 0
          %1154 = vmatpush1.bf16.msra.mxu0 0
          %1155 = vmatprep.subr.bf16.mxu0 0
          %1156 = vmatpush1.bf16.msra.mxu0 0
          %1157 = vmatprep.mubr.bf16.mxu0 0
          %1158 = vmatmul.mubr.bf16.gmra.mrb[0].mxu0 %v818
          %v1159 = vpop.f32.mrb[0].mxu0
          %v1160 = vadd.f32 %v1111, %v1159
          %v1161 = vpop.f32.mrb[0].mxu0
          %v1162 = vpop.f32.mrb[0].mxu0
          %v1163 = vpop.f32.mrb[0].mxu0
          %1164 = vdwg.mxu0
          %s1165 = scalar_lea.vmem %s8, 16
          %v1166 = vld [vmem:[%s1165] sm:$0xf]
          %v1167 = vld [vmem:[%s1165 + $0x4] sm:$0xf]
          %v1168 = vld [vmem:[%s1165 + $0x8] sm:$0xf]
          %v1169 = vld [vmem:[%s1165 + $0xc] sm:$0xf]
          %s1170 = scalar_lea.vmem %s9, 1
          %v1171 = vld [vmem:[%s1170] sm:$0x1]
          %v1173 = vlaneseq
          %v1174 = vshrl.u32 %v1173, 7
          %v1175 = vsub.s32 0, %v1174
          %v1176 = vrot.slane %v1171, %v1175
          %v1182 = vunpack.c.l.b16 %v1166
          %v1183 = vunpack.c.l.b16 %v1167
          %v1184 = vunpack.c.l.b16 %v1168
          %v1185 = vunpack.c.l.b16 %v1169
          %v1186 = vpack.c.b16 %v1183, %v1182
          %v1187 = vpack.c.b16 %v1185, %v1184
          %1190 = vmatprep.subr.bf16.mxu0 0
          %1191 = vmatpush1.bf16.msra.mxu0 %v1186
          %1192 = vmatprep.subr.bf16.mxu0 0
          %1193 = vmatpush1.bf16.msra.mxu0 %v1187
          %1194 = vmatprep.subr.bf16.mxu0 0
          %1195 = vmatpush1.bf16.msra.mxu0 0
          %1196 = vmatprep.subr.bf16.mxu0 0
          %1197 = vmatpush1.bf16.msra.mxu0 0
          %1198 = vmatprep.subr.bf16.mxu0 0
          %1199 = vmatpush1.bf16.msra.mxu0 0
          %1200 = vmatprep.subr.bf16.mxu0 0
          %1201 = vmatpush1.bf16.msra.mxu0 0
          %1202 = vmatprep.subr.bf16.mxu0 0
          %1203 = vmatpush1.bf16.msra.mxu0 0
          %1204 = vmatprep.subr.bf16.mxu0 0
          %1205 = vmatpush1.bf16.msra.mxu0 0
          %1206 = vmatprep.subr.bf16.mxu0 0
          %1207 = vmatpush1.bf16.msra.mxu0 0
          %1208 = vmatprep.subr.bf16.mxu0 0
          %1209 = vmatpush1.bf16.msra.mxu0 0
          %1210 = vmatprep.subr.bf16.mxu0 0
          %1211 = vmatpush1.bf16.msra.mxu0 0
          %1212 = vmatprep.subr.bf16.mxu0 0
          %1213 = vmatpush1.bf16.msra.mxu0 0
          %1214 = vmatprep.subr.bf16.mxu0 0
          %1215 = vmatpush1.bf16.msra.mxu0 0
          %1216 = vmatprep.subr.bf16.mxu0 0
          %1217 = vmatpush1.bf16.msra.mxu0 0
          %1218 = vmatprep.subr.bf16.mxu0 0
          %1219 = vmatpush1.bf16.msra.mxu0 0
          %1220 = vmatprep.subr.bf16.mxu0 0
          %1221 = vmatpush1.bf16.msra.mxu0 0
          %1222 = vmatprep.mubr.bf16.mxu0 0
          %1223 = vmatmul.mubr.bf16.gmra.mrb[0].mxu0 %v818
          %v1224 = vpop.f32.mrb[0].mxu0
          %v1225 = vadd.f32 %v1176, %v1224
          %v1226 = vpop.f32.mrb[0].mxu0
          %v1227 = vpop.f32.mrb[0].mxu0
          %v1228 = vpop.f32.mrb[0].mxu0
          %1229 = vdwg.mxu0
          %v1230 = vpack.c.bf16 %v1095, %v1095
          %v1231 = vpack.c.bf16 %v1160, %v1160
          %v1233 = vsel %vm925, %v1230, 0
          %v1236 = vsel %vm925, %v1231, 0
          %1238 = vmatprep.subr.bf16.mxu0 0
          %1239 = vmatpush1.bf16.xpose.msra.mxu0 %v1236
          %1240 = vmatprep.subr.bf16.mxu0 0
          %1241 = vmatpush1.bf16.xpose.msra.mxu0 0
          %1242 = vmatprep.subr.bf16.mxu0 0
          %1243 = vmatpush1.bf16.xpose.msra.mxu0 0
          %1244 = vmatprep.subr.bf16.mxu0 0
          %1245 = vmatpush1.bf16.xpose.msra.mxu0 0
          %1246 = vmatprep.subr.bf16.mxu0 0
          %1247 = vmatpush1.bf16.xpose.msra.mxu0 0
          %1248 = vmatprep.subr.bf16.mxu0 0
          %1249 = vmatpush1.bf16.xpose.msra.mxu0 0
          %1250 = vmatprep.subr.bf16.mxu0 0
          %1251 = vmatpush1.bf16.xpose.msra.mxu0 0
          %1252 = vmatprep.subr.bf16.mxu0 0
          %1253 = vmatpush1.bf16.xpose.msra.mxu0 0
          %1254 = vmatprep.subr.bf16.mxu0 0
          %1255 = vmatpush1.bf16.xpose.msra.mxu0 0
          %1256 = vmatprep.subr.bf16.mxu0 0
          %1257 = vmatpush1.bf16.xpose.msra.mxu0 0
          %1258 = vmatprep.subr.bf16.mxu0 0
          %1259 = vmatpush1.bf16.xpose.msra.mxu0 0
          %1260 = vmatprep.subr.bf16.mxu0 0
          %1261 = vmatpush1.bf16.xpose.msra.mxu0 0
          %1262 = vmatprep.subr.bf16.mxu0 0
          %1263 = vmatpush1.bf16.xpose.msra.mxu0 0
          %1264 = vmatprep.subr.bf16.mxu0 0
          %1265 = vmatpush1.bf16.xpose.msra.mxu0 0
          %1266 = vmatprep.subr.bf16.mxu0 0
          %1267 = vmatpush1.bf16.xpose.msra.mxu0 0
          %1268 = vmatprep.subr.bf16.mxu0 0
          %1269 = vmatpush1.bf16.xpose.msra.mxu0 0
          %1270 = vmatprep.mubr.bf16.mxu0 0
          %1271 = vmatmul.mubr.bf16.gmra.mrb[0].mxu0 %v1233
          %v1272 = vpop.f32.mrb[0].mxu0
          %v1273 = vadd.f32 0.0, %v1272
          %v1274 = vpop.f32.mrb[0].mxu0
          %v1275 = vpop.f32.mrb[0].mxu0
          %v1276 = vpop.f32.mrb[0].mxu0
          %1277 = vdwg.mxu0
          %v1278 = vmul.f32 %v1273, 0.35355338
          %v1279 = vsel %vm925, %v1278, -inf
          %1280 = vmax.xlane.f32.xlu0 %v1279
          %v1281 = vpop.xlane.xlu0 %1280
          %v1282 = vsub.f32 %v1278, %v1281
          %v1283 = vmul.f32 %v1282, 1.442695
          %v1284 = vpow.pop %v1283
          %v1285 = vsel %vm925, %v1284, 0.0
          %1286 = vadd.xlane.f32.xlu0 %v1285
          %v1287 = vpop.xlane.xlu0 %1286
          %v1288 = vrcp.pop %v1287
          %v1289 = vmul.f32 %v1284, %v1288
          %v1290 = vpack.c.bf16 %v1289, %v1289
          %v1291 = vpack.c.bf16 %v1225, %v1225
          %v1293 = vsel %vm925, %v1290, 0
          %v1296 = vsel %vm989, %v1291, 0
          %1298 = vmatprep.subr.bf16.mxu0 0
          %1299 = vmatpush1.bf16.msra.mxu0 %v1296
          %1300 = vmatprep.subr.bf16.mxu0 0
          %1301 = vmatpush1.bf16.msra.mxu0 0
          %1302 = vmatprep.subr.bf16.mxu0 0
          %1303 = vmatpush1.bf16.msra.mxu0 0
          %1304 = vmatprep.subr.bf16.mxu0 0
          %1305 = vmatpush1.bf16.msra.mxu0 0
          %1306 = vmatprep.subr.bf16.mxu0 0
          %1307 = vmatpush1.bf16.msra.mxu0 0
          %1308 = vmatprep.subr.bf16.mxu0 0
          %1309 = vmatpush1.bf16.msra.mxu0 0
          %1310 = vmatprep.subr.bf16.mxu0 0
          %1311 = vmatpush1.bf16.msra.mxu0 0
          %1312 = vmatprep.subr.bf16.mxu0 0
          %1313 = vmatpush1.bf16.msra.mxu0 0
          %1314 = vmatprep.subr.bf16.mxu0 0
          %1315 = vmatpush1.bf16.msra.mxu0 0
          %1316 = vmatprep.subr.bf16.mxu0 0
          %1317 = vmatpush1.bf16.msra.mxu0 0
          %1318 = vmatprep.subr.bf16.mxu0 0
          %1319 = vmatpush1.bf16.msra.mxu0 0
          %1320 = vmatprep.subr.bf16.mxu0 0
          %1321 = vmatpush1.bf16.msra.mxu0 0
          %1322 = vmatprep.subr.bf16.mxu0 0
          %1323 = vmatpush1.bf16.msra.mxu0 0
          %1324 = vmatprep.subr.bf16.mxu0 0
          %1325 = vmatpush1.bf16.msra.mxu0 0
          %1326 = vmatprep.subr.bf16.mxu0 0
          %1327 = vmatpush1.bf16.msra.mxu0 0
          %1328 = vmatprep.subr.bf16.mxu0 0
          %1329 = vmatpush1.bf16.msra.mxu0 0
          %1330 = vmatprep.mubr.bf16.mxu0 0
          %1331 = vmatmul.mubr.bf16.gmra.mrb[0].mxu0 %v1293
          %v1332 = vpop.f32.mrb[0].mxu0
          %v1333 = vadd.f32 0.0, %v1332
          %v1334 = vpop.f32.mrb[0].mxu0
          %v1335 = vpop.f32.mrb[0].mxu0
          %v1336 = vpop.f32.mrb[0].mxu0
          %1337 = vdwg.mxu0
          %v1338 = vpack.c.bf16 %v1333, %v1333
          %s1339 = scalar_lea.vmem %s10, 4
          %v1340 = vld [vmem:[%s1339] sm:$0xf]
          %v1342 = vsel %vm925, %v1338, 0
          %v1345 = vsel %vm989, %v1340, 0
          %1347 = vmatprep.subr.bf16.mxu0 0
          %1348 = vmatpush1.bf16.msra.mxu0 %v1345
          %1349 = vmatprep.subr.bf16.mxu0 0
          %1350 = vmatpush1.bf16.msra.mxu0 0
          %1351 = vmatprep.subr.bf16.mxu0 0
          %1352 = vmatpush1.bf16.msra.mxu0 0
          %1353 = vmatprep.subr.bf16.mxu0 0
          %1354 = vmatpush1.bf16.msra.mxu0 0
          %1355 = vmatprep.subr.bf16.mxu0 0
          %1356 = vmatpush1.bf16.msra.mxu0 0
          %1357 = vmatprep.subr.bf16.mxu0 0
          %1358 = vmatpush1.bf16.msra.mxu0 0
          %1359 = vmatprep.subr.bf16.mxu0 0
          %1360 = vmatpush1.bf16.msra.mxu0 0
          %1361 = vmatprep.subr.bf16.mxu0 0
          %1362 = vmatpush1.bf16.msra.mxu0 0
          %1363 = vmatprep.subr.bf16.mxu0 0
          %1364 = vmatpush1.bf16.msra.mxu0 0
          %1365 = vmatprep.subr.bf16.mxu0 0
          %1366 = vmatpush1.bf16.msra.mxu0 0
          %1367 = vmatprep.subr.bf16.mxu0 0
          %1368 = vmatpush1.bf16.msra.mxu0 0
          %1369 = vmatprep.subr.bf16.mxu0 0
          %1370 = vmatpush1.bf16.msra.mxu0 0
          %1371 = vmatprep.subr.bf16.mxu0 0
          %1372 = vmatpush1.bf16.msra.mxu0 0
          %1373 = vmatprep.subr.bf16.mxu0 0
          %1374 = vmatpush1.bf16.msra.mxu0 0
          %1375 = vmatprep.subr.bf16.mxu0 0
          %1376 = vmatpush1.bf16.msra.mxu0 0
          %1377 = vmatprep.subr.bf16.mxu0 0
          %1378 = vmatpush1.bf16.msra.mxu0 0
          %1379 = vmatprep.mubr.bf16.mxu0 0
          %1380 = vmatmul.mubr.bf16.gmra.mrb[0].mxu0 %v1342
          %v1381 = vpop.f32.mrb[0].mxu0
          %v1382 = vadd.f32 0.0, %v1381
          %v1383 = vpop.f32.mrb[0].mxu0
          %v1384 = vpop.f32.mrb[0].mxu0
          %v1385 = vpop.f32.mrb[0].mxu0
          %1386 = vdwg.mxu0
          %v1388 = vsel %vm925, %v1033, 0
          %v1391 = vsel %vm989, %v1034, 0
          %1393 = vmatprep.subr.bf16.mxu0 0
          %1394 = vmatpush1.bf16.msra.mxu0 %v1391
          %1395 = vmatprep.subr.bf16.mxu0 0
          %1396 = vmatpush1.bf16.msra.mxu0 0
          %1397 = vmatprep.subr.bf16.mxu0 0
          %1398 = vmatpush1.bf16.msra.mxu0 0
          %1399 = vmatprep.subr.bf16.mxu0 0
          %1400 = vmatpush1.bf16.msra.mxu0 0
          %1401 = vmatprep.subr.bf16.mxu0 0
          %1402 = vmatpush1.bf16.msra.mxu0 0
          %1403 = vmatprep.subr.bf16.mxu0 0
          %1404 = vmatpush1.bf16.msra.mxu0 0
          %1405 = vmatprep.subr.bf16.mxu0 0
          %1406 = vmatpush1.bf16.msra.mxu0 0
          %1407 = vmatprep.subr.bf16.mxu0 0
          %1408 = vmatpush1.bf16.msra.mxu0 0
          %1409 = vmatprep.subr.bf16.mxu0 0
          %1410 = vmatpush1.bf16.msra.mxu0 0
          %1411 = vmatprep.subr.bf16.mxu0 0
          %1412 = vmatpush1.bf16.msra.mxu0 0
          %1413 = vmatprep.subr.bf16.mxu0 0
          %1414 = vmatpush1.bf16.msra.mxu0 0
          %1415 = vmatprep.subr.bf16.mxu0 0
          %1416 = vmatpush1.bf16.msra.mxu0 0
          %1417 = vmatprep.subr.bf16.mxu0 0
          %1418 = vmatpush1.bf16.msra.mxu0 0
          %1419 = vmatprep.subr.bf16.mxu0 0
          %1420 = vmatpush1.bf16.msra.mxu0 0
          %1421 = vmatprep.subr.bf16.mxu0 0
          %1422 = vmatpush1.bf16.msra.mxu0 0
          %1423 = vmatprep.subr.bf16.mxu0 0
          %1424 = vmatpush1.bf16.msra.mxu0 0
          %1425 = vmatprep.mubr.bf16.mxu0 0
          %1426 = vmatmul.mubr.bf16.gmra.mrb[0].mxu0 %v1388
          %v1427 = vpop.f32.mrb[0].mxu0
          %v1428 = vadd.f32 %v1382, %v1427
          %v1429 = vpop.f32.mrb[0].mxu0
          %v1430 = vpop.f32.mrb[0].mxu0
          %v1431 = vpop.f32.mrb[0].mxu0
          %1432 = vdwg.mxu0
          %s1433 = scalar_lea.vmem %s4, 32
          %v1434 = vld [vmem:[%s1433] sm:$0xf]
          %v1435 = vld [vmem:[%s1433 + $0x4] sm:$0xf]
          %v1436 = vld [vmem:[%s1433 + $0x8] sm:$0xf]
          %v1437 = vld [vmem:[%s1433 + $0xc] sm:$0xf]
          %s1438 = scalar_lea.vmem %s5, 2
          %v1439 = vld [vmem:[%s1438] sm:$0x1]
          %v1441 = vlaneseq
          %v1442 = vshrl.u32 %v1441, 7
          %v1443 = vsub.s32 0, %v1442
          %v1444 = vrot.slane %v1439, %v1443
          %v1450 = vunpack.c.l.b16 %v1434
          %v1451 = vunpack.c.l.b16 %v1435
          %v1452 = vunpack.c.l.b16 %v1436
          %v1453 = vunpack.c.l.b16 %v1437
          %v1454 = vpack.c.b16 %v1451, %v1450
          %v1455 = vpack.c.b16 %v1453, %v1452
          %1458 = vmatprep.subr.bf16.mxu0 0
          %1459 = vmatpush1.bf16.msra.mxu0 %v1454
          %1460 = vmatprep.subr.bf16.mxu0 0
          %1461 = vmatpush1.bf16.msra.mxu0 %v1455
          %1462 = vmatprep.subr.bf16.mxu0 0
          %1463 = vmatpush1.bf16.msra.mxu0 0
          %1464 = vmatprep.subr.bf16.mxu0 0
          %1465 = vmatpush1.bf16.msra.mxu0 0
          %1466 = vmatprep.subr.bf16.mxu0 0
          %1467 = vmatpush1.bf16.msra.mxu0 0
          %1468 = vmatprep.subr.bf16.mxu0 0
          %1469 = vmatpush1.bf16.msra.mxu0 0
          %1470 = vmatprep.subr.bf16.mxu0 0
          %1471 = vmatpush1.bf16.msra.mxu0 0
          %1472 = vmatprep.subr.bf16.mxu0 0
          %1473 = vmatpush1.bf16.msra.mxu0 0
          %1474 = vmatprep.subr.bf16.mxu0 0
          %1475 = vmatpush1.bf16.msra.mxu0 0
          %1476 = vmatprep.subr.bf16.mxu0 0
          %1477 = vmatpush1.bf16.msra.mxu0 0
          %1478 = vmatprep.subr.bf16.mxu0 0
          %1479 = vmatpush1.bf16.msra.mxu0 0
          %1480 = vmatprep.subr.bf16.mxu0 0
          %1481 = vmatpush1.bf16.msra.mxu0 0
          %1482 = vmatprep.subr.bf16.mxu0 0
          %1483 = vmatpush1.bf16.msra.mxu0 0
          %1484 = vmatprep.subr.bf16.mxu0 0
          %1485 = vmatpush1.bf16.msra.mxu0 0
          %1486 = vmatprep.subr.bf16.mxu0 0
          %1487 = vmatpush1.bf16.msra.mxu0 0
          %1488 = vmatprep.subr.bf16.mxu0 0
          %1489 = vmatpush1.bf16.msra.mxu0 0
          %1490 = vmatprep.mubr.bf16.mxu0 0
          %1491 = vmatmul.mubr.bf16.gmra.mrb[0].mxu0 %v752
          %v1492 = vpop.f32.mrb[0].mxu0
          %v1493 = vadd.f32 %v1444, %v1492
          %v1494 = vpop.f32.mrb[0].mxu0
          %v1495 = vpop.f32.mrb[0].mxu0
          %v1496 = vpop.f32.mrb[0].mxu0
          %1497 = vdwg.mxu0
          %s1498 = scalar_lea.vmem %s6, 32
          %v1499 = vld [vmem:[%s1498] sm:$0xf]
          %v1500 = vld [vmem:[%s1498 + $0x4] sm:$0xf]
          %v1501 = vld [vmem:[%s1498 + $0x8] sm:$0xf]
          %v1502 = vld [vmem:[%s1498 + $0xc] sm:$0xf]
          %s1503 = scalar_lea.vmem %s7, 2
          %v1504 = vld [vmem:[%s1503] sm:$0x1]
          %v1506 = vlaneseq
          %v1507 = vshrl.u32 %v1506, 7
          %v1508 = vsub.s32 0, %v1507
          %v1509 = vrot.slane %v1504, %v1508
          %v1515 = vunpack.c.l.b16 %v1499
          %v1516 = vunpack.c.l.b16 %v1500
          %v1517 = vunpack.c.l.b16 %v1501
          %v1518 = vunpack.c.l.b16 %v1502
          %v1519 = vpack.c.b16 %v1516, %v1515
          %v1520 = vpack.c.b16 %v1518, %v1517
          %1523 = vmatprep.subr.bf16.mxu0 0
          %1524 = vmatpush1.bf16.msra.mxu0 %v1519
          %1525 = vmatprep.subr.bf16.mxu0 0
          %1526 = vmatpush1.bf16.msra.mxu0 %v1520
          %1527 = vmatprep.subr.bf16.mxu0 0
          %1528 = vmatpush1.bf16.msra.mxu0 0
          %1529 = vmatprep.subr.bf16.mxu0 0
          %1530 = vmatpush1.bf16.msra.mxu0 0
          %1531 = vmatprep.subr.bf16.mxu0 0
          %1532 = vmatpush1.bf16.msra.mxu0 0
          %1533 = vmatprep.subr.bf16.mxu0 0
          %1534 = vmatpush1.bf16.msra.mxu0 0
          %1535 = vmatprep.subr.bf16.mxu0 0
          %1536 = vmatpush1.bf16.msra.mxu0 0
          %1537 = vmatprep.subr.bf16.mxu0 0
          %1538 = vmatpush1.bf16.msra.mxu0 0
          %1539 = vmatprep.subr.bf16.mxu0 0
          %1540 = vmatpush1.bf16.msra.mxu0 0
          %1541 = vmatprep.subr.bf16.mxu0 0
          %1542 = vmatpush1.bf16.msra.mxu0 0
          %1543 = vmatprep.subr.bf16.mxu0 0
          %1544 = vmatpush1.bf16.msra.mxu0 0
          %1545 = vmatprep.subr.bf16.mxu0 0
          %1546 = vmatpush1.bf16.msra.mxu0 0
          %1547 = vmatprep.subr.bf16.mxu0 0
          %1548 = vmatpush1.bf16.msra.mxu0 0
          %1549 = vmatprep.subr.bf16.mxu0 0
          %1550 = vmatpush1.bf16.msra.mxu0 0
          %1551 = vmatprep.subr.bf16.mxu0 0
          %1552 = vmatpush1.bf16.msra.mxu0 0
          %1553 = vmatprep.subr.bf16.mxu0 0
          %1554 = vmatpush1.bf16.msra.mxu0 0
          %1555 = vmatprep.mubr.bf16.mxu0 0
          %1556 = vmatmul.mubr.bf16.gmra.mrb[0].mxu0 %v818
          %v1557 = vpop.f32.mrb[0].mxu0
          %v1558 = vadd.f32 %v1509, %v1557
          %v1559 = vpop.f32.mrb[0].mxu0
          %v1560 = vpop.f32.mrb[0].mxu0
          %v1561 = vpop.f32.mrb[0].mxu0
          %1562 = vdwg.mxu0
          %s1563 = scalar_lea.vmem %s8, 32
          %v1564 = vld [vmem:[%s1563] sm:$0xf]
          %v1565 = vld [vmem:[%s1563 + $0x4] sm:$0xf]
          %v1566 = vld [vmem:[%s1563 + $0x8] sm:$0xf]
          %v1567 = vld [vmem:[%s1563 + $0xc] sm:$0xf]
          %s1568 = scalar_lea.vmem %s9, 2
          %v1569 = vld [vmem:[%s1568] sm:$0x1]
          %v1571 = vlaneseq
          %v1572 = vshrl.u32 %v1571, 7
          %v1573 = vsub.s32 0, %v1572
          %v1574 = vrot.slane %v1569, %v1573
          %v1580 = vunpack.c.l.b16 %v1564
          %v1581 = vunpack.c.l.b16 %v1565
          %v1582 = vunpack.c.l.b16 %v1566
          %v1583 = vunpack.c.l.b16 %v1567
          %v1584 = vpack.c.b16 %v1581, %v1580
          %v1585 = vpack.c.b16 %v1583, %v1582
          %1588 = vmatprep.subr.bf16.mxu0 0
          %1589 = vmatpush1.bf16.msra.mxu0 %v1584
          %1590 = vmatprep.subr.bf16.mxu0 0
          %1591 = vmatpush1.bf16.msra.mxu0 %v1585
          %1592 = vmatprep.subr.bf16.mxu0 0
          %1593 = vmatpush1.bf16.msra.mxu0 0
          %1594 = vmatprep.subr.bf16.mxu0 0
          %1595 = vmatpush1.bf16.msra.mxu0 0
          %1596 = vmatprep.subr.bf16.mxu0 0
          %1597 = vmatpush1.bf16.msra.mxu0 0
          %1598 = vmatprep.subr.bf16.mxu0 0
          %1599 = vmatpush1.bf16.msra.mxu0 0
          %1600 = vmatprep.subr.bf16.mxu0 0
          %1601 = vmatpush1.bf16.msra.mxu0 0
          %1602 = vmatprep.subr.bf16.mxu0 0
          %1603 = vmatpush1.bf16.msra.mxu0 0
          %1604 = vmatprep.subr.bf16.mxu0 0
          %1605 = vmatpush1.bf16.msra.mxu0 0
          %1606 = vmatprep.subr.bf16.mxu0 0
          %1607 = vmatpush1.bf16.msra.mxu0 0
          %1608 = vmatprep.subr.bf16.mxu0 0
          %1609 = vmatpush1.bf16.msra.mxu0 0
          %1610 = vmatprep.subr.bf16.mxu0 0
          %1611 = vmatpush1.bf16.msra.mxu0 0
          %1612 = vmatprep.subr.bf16.mxu0 0
          %1613 = vmatpush1.bf16.msra.mxu0 0
          %1614 = vmatprep.subr.bf16.mxu0 0
          %1615 = vmatpush1.bf16.msra.mxu0 0
          %1616 = vmatprep.subr.bf16.mxu0 0
          %1617 = vmatpush1.bf16.msra.mxu0 0
          %1618 = vmatprep.subr.bf16.mxu0 0
          %1619 = vmatpush1.bf16.msra.mxu0 0
          %1620 = vmatprep.mubr.bf16.mxu0 0
          %1621 = vmatmul.mubr.bf16.gmra.mrb[0].mxu0 %v818
          %v1622 = vpop.f32.mrb[0].mxu0
          %v1623 = vadd.f32 %v1574, %v1622
          %v1624 = vpop.f32.mrb[0].mxu0
          %v1625 = vpop.f32.mrb[0].mxu0
          %v1626 = vpop.f32.mrb[0].mxu0
          %1627 = vdwg.mxu0
          %v1628 = vpack.c.bf16 %v1493, %v1493
          %v1629 = vpack.c.bf16 %v1558, %v1558
          %v1631 = vsel %vm925, %v1628, 0
          %v1634 = vsel %vm925, %v1629, 0
          %1636 = vmatprep.subr.bf16.mxu0 0
          %1637 = vmatpush1.bf16.xpose.msra.mxu0 %v1634
          %1638 = vmatprep.subr.bf16.mxu0 0
          %1639 = vmatpush1.bf16.xpose.msra.mxu0 0
          %1640 = vmatprep.subr.bf16.mxu0 0
          %1641 = vmatpush1.bf16.xpose.msra.mxu0 0
          %1642 = vmatprep.subr.bf16.mxu0 0
          %1643 = vmatpush1.bf16.xpose.msra.mxu0 0
          %1644 = vmatprep.subr.bf16.mxu0 0
          %1645 = vmatpush1.bf16.xpose.msra.mxu0 0
          %1646 = vmatprep.subr.bf16.mxu0 0
          %1647 = vmatpush1.bf16.xpose.msra.mxu0 0
          %1648 = vmatprep.subr.bf16.mxu0 0
          %1649 = vmatpush1.bf16.xpose.msra.mxu0 0
          %1650 = vmatprep.subr.bf16.mxu0 0
          %1651 = vmatpush1.bf16.xpose.msra.mxu0 0
          %1652 = vmatprep.subr.bf16.mxu0 0
          %1653 = vmatpush1.bf16.xpose.msra.mxu0 0
          %1654 = vmatprep.subr.bf16.mxu0 0
          %1655 = vmatpush1.bf16.xpose.msra.mxu0 0
          %1656 = vmatprep.subr.bf16.mxu0 0
          %1657 = vmatpush1.bf16.xpose.msra.mxu0 0
          %1658 = vmatprep.subr.bf16.mxu0 0
          %1659 = vmatpush1.bf16.xpose.msra.mxu0 0
          %1660 = vmatprep.subr.bf16.mxu0 0
          %1661 = vmatpush1.bf16.xpose.msra.mxu0 0
          %1662 = vmatprep.subr.bf16.mxu0 0
          %1663 = vmatpush1.bf16.xpose.msra.mxu0 0
          %1664 = vmatprep.subr.bf16.mxu0 0
          %1665 = vmatpush1.bf16.xpose.msra.mxu0 0
          %1666 = vmatprep.subr.bf16.mxu0 0
          %1667 = vmatpush1.bf16.xpose.msra.mxu0 0
          %1668 = vmatprep.mubr.bf16.mxu0 0
          %1669 = vmatmul.mubr.bf16.gmra.mrb[0].mxu0 %v1631
          %v1670 = vpop.f32.mrb[0].mxu0
          %v1671 = vadd.f32 0.0, %v1670
          %v1672 = vpop.f32.mrb[0].mxu0
          %v1673 = vpop.f32.mrb[0].mxu0
          %v1674 = vpop.f32.mrb[0].mxu0
          %1675 = vdwg.mxu0
          %v1676 = vmul.f32 %v1671, 0.35355338
          %v1677 = vsel %vm925, %v1676, -inf
          %1678 = vmax.xlane.f32.xlu0 %v1677
          %v1679 = vpop.xlane.xlu0 %1678
          %v1680 = vsub.f32 %v1676, %v1679
          %v1681 = vmul.f32 %v1680, 1.442695
          %v1682 = vpow.pop %v1681
          %v1683 = vsel %vm925, %v1682, 0.0
          %1684 = vadd.xlane.f32.xlu0 %v1683
          %v1685 = vpop.xlane.xlu0 %1684
          %v1686 = vrcp.pop %v1685
          %v1687 = vmul.f32 %v1682, %v1686
          %v1688 = vpack.c.bf16 %v1687, %v1687
          %v1689 = vpack.c.bf16 %v1623, %v1623
          %v1691 = vsel %vm925, %v1688, 0
          %v1694 = vsel %vm989, %v1689, 0
          %1696 = vmatprep.subr.bf16.mxu0 0
          %1697 = vmatpush1.bf16.msra.mxu0 %v1694
          %1698 = vmatprep.subr.bf16.mxu0 0
          %1699 = vmatpush1.bf16.msra.mxu0 0
          %1700 = vmatprep.subr.bf16.mxu0 0
          %1701 = vmatpush1.bf16.msra.mxu0 0
          %1702 = vmatprep.subr.bf16.mxu0 0
          %1703 = vmatpush1.bf16.msra.mxu0 0
          %1704 = vmatprep.subr.bf16.mxu0 0
          %1705 = vmatpush1.bf16.msra.mxu0 0
          %1706 = vmatprep.subr.bf16.mxu0 0
          %1707 = vmatpush1.bf16.msra.mxu0 0
          %1708 = vmatprep.subr.bf16.mxu0 0
          %1709 = vmatpush1.bf16.msra.mxu0 0
          %1710 = vmatprep.subr.bf16.mxu0 0
          %1711 = vmatpush1.bf16.msra.mxu0 0
          %1712 = vmatprep.subr.bf16.mxu0 0
          %1713 = vmatpush1.bf16.msra.mxu0 0
          %1714 = vmatprep.subr.bf16.mxu0 0
          %1715 = vmatpush1.bf16.msra.mxu0 0
          %1716 = vmatprep.subr.bf16.mxu0 0
          %1717 = vmatpush1.bf16.msra.mxu0 0
          %1718 = vmatprep.subr.bf16.mxu0 0
          %1719 = vmatpush1.bf16.msra.mxu0 0
          %1720 = vmatprep.subr.bf16.mxu0 0
          %1721 = vmatpush1.bf16.msra.mxu0 0
          %1722 = vmatprep.subr.bf16.mxu0 0
          %1723 = vmatpush1.bf16.msra.mxu0 0
          %1724 = vmatprep.subr.bf16.mxu0 0
          %1725 = vmatpush1.bf16.msra.mxu0 0
          %1726 = vmatprep.subr.bf16.mxu0 0
          %1727 = vmatpush1.bf16.msra.mxu0 0
          %1728 = vmatprep.mubr.bf16.mxu0 0
          %1729 = vmatmul.mubr.bf16.gmra.mrb[0].mxu0 %v1691
          %v1730 = vpop.f32.mrb[0].mxu0
          %v1731 = vadd.f32 0.0, %v1730
          %v1732 = vpop.f32.mrb[0].mxu0
          %v1733 = vpop.f32.mrb[0].mxu0
          %v1734 = vpop.f32.mrb[0].mxu0
          %1735 = vdwg.mxu0
          %v1736 = vpack.c.bf16 %v1731, %v1731
          %s1737 = scalar_lea.vmem %s10, 8
          %v1738 = vld [vmem:[%s1737] sm:$0xf]
          %v1740 = vsel %vm925, %v1736, 0
          %v1743 = vsel %vm989, %v1738, 0
          %1745 = vmatprep.subr.bf16.mxu0 0
          %1746 = vmatpush1.bf16.msra.mxu0 %v1743
          %1747 = vmatprep.subr.bf16.mxu0 0
          %1748 = vmatpush1.bf16.msra.mxu0 0
          %1749 = vmatprep.subr.bf16.mxu0 0
          %1750 = vmatpush1.bf16.msra.mxu0 0
          %1751 = vmatprep.subr.bf16.mxu0 0
          %1752 = vmatpush1.bf16.msra.mxu0 0
          %1753 = vmatprep.subr.bf16.mxu0 0
          %1754 = vmatpush1.bf16.msra.mxu0 0
          %1755 = vmatprep.subr.bf16.mxu0 0
          %1756 = vmatpush1.bf16.msra.mxu0 0
          %1757 = vmatprep.subr.bf16.mxu0 0
          %1758 = vmatpush1.bf16.msra.mxu0 0
          %1759 = vmatprep.subr.bf16.mxu0 0
          %1760 = vmatpush1.bf16.msra.mxu0 0
          %1761 = vmatprep.subr.bf16.mxu0 0
          %1762 = vmatpush1.bf16.msra.mxu0 0
          %1763 = vmatprep.subr.bf16.mxu0 0
          %1764 = vmatpush1.bf16.msra.mxu0 0
          %1765 = vmatprep.subr.bf16.mxu0 0
          %1766 = vmatpush1.bf16.msra.mxu0 0
          %1767 = vmatprep.subr.bf16.mxu0 0
          %1768 = vmatpush1.bf16.msra.mxu0 0
          %1769 = vmatprep.subr.bf16.mxu0 0
          %1770 = vmatpush1.bf16.msra.mxu0 0
          %1771 = vmatprep.subr.bf16.mxu0 0
          %1772 = vmatpush1.bf16.msra.mxu0 0
          %1773 = vmatprep.subr.bf16.mxu0 0
          %1774 = vmatpush1.bf16.msra.mxu0 0
          %1775 = vmatprep.subr.bf16.mxu0 0
          %1776 = vmatpush1.bf16.msra.mxu0 0
          %1777 = vmatprep.mubr.bf16.mxu0 0
          %1778 = vmatmul.mubr.bf16.gmra.mrb[0].mxu0 %v1740
          %v1779 = vpop.f32.mrb[0].mxu0
          %v1780 = vadd.f32 0.0, %v1779
          %v1781 = vpop.f32.mrb[0].mxu0
          %v1782 = vpop.f32.mrb[0].mxu0
          %v1783 = vpop.f32.mrb[0].mxu0
          %1784 = vdwg.mxu0
          %v1785 = vadd.f32 %v1428, %v1780
          %s1786 = scalar_lea.vmem %s4, 48
          %v1787 = vld [vmem:[%s1786] sm:$0xf]
          %v1788 = vld [vmem:[%s1786 + $0x4] sm:$0xf]
          %v1789 = vld [vmem:[%s1786 + $0x8] sm:$0xf]
          %v1790 = vld [vmem:[%s1786 + $0xc] sm:$0xf]
          %s1791 = scalar_lea.vmem %s5, 3
          %v1792 = vld [vmem:[%s1791] sm:$0x1]
          %v1794 = vlaneseq
          %v1795 = vshrl.u32 %v1794, 7
          %v1796 = vsub.s32 0, %v1795
          %v1797 = vrot.slane %v1792, %v1796
          %v1803 = vunpack.c.l.b16 %v1787
          %v1804 = vunpack.c.l.b16 %v1788
          %v1805 = vunpack.c.l.b16 %v1789
          %v1806 = vunpack.c.l.b16 %v1790
          %v1807 = vpack.c.b16 %v1804, %v1803
          %v1808 = vpack.c.b16 %v1806, %v1805
          %1811 = vmatprep.subr.bf16.mxu0 0
          %1812 = vmatpush1.bf16.msra.mxu0 %v1807
          %1813 = vmatprep.subr.bf16.mxu0 0
          %1814 = vmatpush1.bf16.msra.mxu0 %v1808
          %1815 = vmatprep.subr.bf16.mxu0 0
          %1816 = vmatpush1.bf16.msra.mxu0 0
          %1817 = vmatprep.subr.bf16.mxu0 0
          %1818 = vmatpush1.bf16.msra.mxu0 0
          %1819 = vmatprep.subr.bf16.mxu0 0
          %1820 = vmatpush1.bf16.msra.mxu0 0
          %1821 = vmatprep.subr.bf16.mxu0 0
          %1822 = vmatpush1.bf16.msra.mxu0 0
          %1823 = vmatprep.subr.bf16.mxu0 0
          %1824 = vmatpush1.bf16.msra.mxu0 0
          %1825 = vmatprep.subr.bf16.mxu0 0
          %1826 = vmatpush1.bf16.msra.mxu0 0
          %1827 = vmatprep.subr.bf16.mxu0 0
          %1828 = vmatpush1.bf16.msra.mxu0 0
          %1829 = vmatprep.subr.bf16.mxu0 0
          %1830 = vmatpush1.bf16.msra.mxu0 0
          %1831 = vmatprep.subr.bf16.mxu0 0
          %1832 = vmatpush1.bf16.msra.mxu0 0
          %1833 = vmatprep.subr.bf16.mxu0 0
          %1834 = vmatpush1.bf16.msra.mxu0 0
          %1835 = vmatprep.subr.bf16.mxu0 0
          %1836 = vmatpush1.bf16.msra.mxu0 0
          %1837 = vmatprep.subr.bf16.mxu0 0
          %1838 = vmatpush1.bf16.msra.mxu0 0
          %1839 = vmatprep.subr.bf16.mxu0 0
          %1840 = vmatpush1.bf16.msra.mxu0 0
          %1841 = vmatprep.subr.bf16.mxu0 0
          %1842 = vmatpush1.bf16.msra.mxu0 0
          %1843 = vmatprep.mubr.bf16.mxu0 0
          %1844 = vmatmul.mubr.bf16.gmra.mrb[0].mxu0 %v752
          %v1845 = vpop.f32.mrb[0].mxu0
          %v1846 = vadd.f32 %v1797, %v1845
          %v1847 = vpop.f32.mrb[0].mxu0
          %v1848 = vpop.f32.mrb[0].mxu0
          %v1849 = vpop.f32.mrb[0].mxu0
          %1850 = vdwg.mxu0
          %s1851 = scalar_lea.vmem %s6, 48
          %v1852 = vld [vmem:[%s1851] sm:$0xf]
          %v1853 = vld [vmem:[%s1851 + $0x4] sm:$0xf]
          %v1854 = vld [vmem:[%s1851 + $0x8] sm:$0xf]
          %v1855 = vld [vmem:[%s1851 + $0xc] sm:$0xf]
          %s1856 = scalar_lea.vmem %s7, 3
          %v1857 = vld [vmem:[%s1856] sm:$0x1]
          %v1859 = vlaneseq
          %v1860 = vshrl.u32 %v1859, 7
          %v1861 = vsub.s32 0, %v1860
          %v1862 = vrot.slane %v1857, %v1861
          %v1868 = vunpack.c.l.b16 %v1852
          %v1869 = vunpack.c.l.b16 %v1853
          %v1870 = vunpack.c.l.b16 %v1854
          %v1871 = vunpack.c.l.b16 %v1855
          %v1872 = vpack.c.b16 %v1869, %v1868
          %v1873 = vpack.c.b16 %v1871, %v1870
          %1876 = vmatprep.subr.bf16.mxu0 0
          %1877 = vmatpush1.bf16.msra.mxu0 %v1872
          %1878 = vmatprep.subr.bf16.mxu0 0
          %1879 = vmatpush1.bf16.msra.mxu0 %v1873
          %1880 = vmatprep.subr.bf16.mxu0 0
          %1881 = vmatpush1.bf16.msra.mxu0 0
          %1882 = vmatprep.subr.bf16.mxu0 0
          %1883 = vmatpush1.bf16.msra.mxu0 0
          %1884 = vmatprep.subr.bf16.mxu0 0
          %1885 = vmatpush1.bf16.msra.mxu0 0
          %1886 = vmatprep.subr.bf16.mxu0 0
          %1887 = vmatpush1.bf16.msra.mxu0 0
          %1888 = vmatprep.subr.bf16.mxu0 0
          %1889 = vmatpush1.bf16.msra.mxu0 0
          %1890 = vmatprep.subr.bf16.mxu0 0
          %1891 = vmatpush1.bf16.msra.mxu0 0
          %1892 = vmatprep.subr.bf16.mxu0 0
          %1893 = vmatpush1.bf16.msra.mxu0 0
          %1894 = vmatprep.subr.bf16.mxu0 0
          %1895 = vmatpush1.bf16.msra.mxu0 0
          %1896 = vmatprep.subr.bf16.mxu0 0
          %1897 = vmatpush1.bf16.msra.mxu0 0
          %1898 = vmatprep.subr.bf16.mxu0 0
          %1899 = vmatpush1.bf16.msra.mxu0 0
          %1900 = vmatprep.subr.bf16.mxu0 0
          %1901 = vmatpush1.bf16.msra.mxu0 0
          %1902 = vmatprep.subr.bf16.mxu0 0
          %1903 = vmatpush1.bf16.msra.mxu0 0
          %1904 = vmatprep.subr.bf16.mxu0 0
          %1905 = vmatpush1.bf16.msra.mxu0 0
          %1906 = vmatprep.subr.bf16.mxu0 0
          %1907 = vmatpush1.bf16.msra.mxu0 0
          %1908 = vmatprep.mubr.bf16.mxu0 0
          %1909 = vmatmul.mubr.bf16.gmra.mrb[0].mxu0 %v818
          %v1910 = vpop.f32.mrb[0].mxu0
          %v1911 = vadd.f32 %v1862, %v1910
          %v1912 = vpop.f32.mrb[0].mxu0
          %v1913 = vpop.f32.mrb[0].mxu0
          %v1914 = vpop.f32.mrb[0].mxu0
          %1915 = vdwg.mxu0
          %s1916 = scalar_lea.vmem %s8, 48
          %v1917 = vld [vmem:[%s1916] sm:$0xf]
          %v1918 = vld [vmem:[%s1916 + $0x4] sm:$0xf]
          %v1919 = vld [vmem:[%s1916 + $0x8] sm:$0xf]
          %v1920 = vld [vmem:[%s1916 + $0xc] sm:$0xf]
          %s1921 = scalar_lea.vmem %s9, 3
          %v1922 = vld [vmem:[%s1921] sm:$0x1]
          %v1924 = vlaneseq
          %v1925 = vshrl.u32 %v1924, 7
          %v1926 = vsub.s32 0, %v1925
          %v1927 = vrot.slane %v1922, %v1926
          %v1933 = vunpack.c.l.b16 %v1917
          %v1934 = vunpack.c.l.b16 %v1918
          %v1935 = vunpack.c.l.b16 %v1919
          %v1936 = vunpack.c.l.b16 %v1920
          %v1937 = vpack.c.b16 %v1934, %v1933
          %v1938 = vpack.c.b16 %v1936, %v1935
          %1941 = vmatprep.subr.bf16.mxu0 0
          %1942 = vmatpush1.bf16.msra.mxu0 %v1937
          %1943 = vmatprep.subr.bf16.mxu0 0
          %1944 = vmatpush1.bf16.msra.mxu0 %v1938
          %1945 = vmatprep.subr.bf16.mxu0 0
          %1946 = vmatpush1.bf16.msra.mxu0 0
          %1947 = vmatprep.subr.bf16.mxu0 0
          %1948 = vmatpush1.bf16.msra.mxu0 0
          %1949 = vmatprep.subr.bf16.mxu0 0
          %1950 = vmatpush1.bf16.msra.mxu0 0
          %1951 = vmatprep.subr.bf16.mxu0 0
          %1952 = vmatpush1.bf16.msra.mxu0 0
          %1953 = vmatprep.subr.bf16.mxu0 0
          %1954 = vmatpush1.bf16.msra.mxu0 0
          %1955 = vmatprep.subr.bf16.mxu0 0
          %1956 = vmatpush1.bf16.msra.mxu0 0
          %1957 = vmatprep.subr.bf16.mxu0 0
          %1958 = vmatpush1.bf16.msra.mxu0 0
          %1959 = vmatprep.subr.bf16.mxu0 0
          %1960 = vmatpush1.bf16.msra.mxu0 0
          %1961 = vmatprep.subr.bf16.mxu0 0
          %1962 = vmatpush1.bf16.msra.mxu0 0
          %1963 = vmatprep.subr.bf16.mxu0 0
          %1964 = vmatpush1.bf16.msra.mxu0 0
          %1965 = vmatprep.subr.bf16.mxu0 0
          %1966 = vmatpush1.bf16.msra.mxu0 0
          %1967 = vmatprep.subr.bf16.mxu0 0
          %1968 = vmatpush1.bf16.msra.mxu0 0
          %1969 = vmatprep.subr.bf16.mxu0 0
          %1970 = vmatpush1.bf16.msra.mxu0 0
          %1971 = vmatprep.subr.bf16.mxu0 0
          %1972 = vmatpush1.bf16.msra.mxu0 0
          %1973 = vmatprep.mubr.bf16.mxu0 0
          %1974 = vmatmul.mubr.bf16.gmra.mrb[0].mxu0 %v818
          %v1975 = vpop.f32.mrb[0].mxu0
          %v1976 = vadd.f32 %v1927, %v1975
          %v1977 = vpop.f32.mrb[0].mxu0
          %v1978 = vpop.f32.mrb[0].mxu0
          %v1979 = vpop.f32.mrb[0].mxu0
          %1980 = vdwg.mxu0
          %v1981 = vpack.c.bf16 %v1846, %v1846
          %v1982 = vpack.c.bf16 %v1911, %v1911
          %v1984 = vsel %vm925, %v1981, 0
          %v1987 = vsel %vm925, %v1982, 0
          %1989 = vmatprep.subr.bf16.mxu0 0
          %1990 = vmatpush1.bf16.xpose.msra.mxu0 %v1987
          %1991 = vmatprep.subr.bf16.mxu0 0
          %1992 = vmatpush1.bf16.xpose.msra.mxu0 0
          %1993 = vmatprep.subr.bf16.mxu0 0
          %1994 = vmatpush1.bf16.xpose.msra.mxu0 0
          %1995 = vmatprep.subr.bf16.mxu0 0
          %1996 = vmatpush1.bf16.xpose.msra.mxu0 0
          %1997 = vmatprep.subr.bf16.mxu0 0
          %1998 = vmatpush1.bf16.xpose.msra.mxu0 0
          %1999 = vmatprep.subr.bf16.mxu0 0
          %2000 = vmatpush1.bf16.xpose.msra.mxu0 0
          %2001 = vmatprep.subr.bf16.mxu0 0
          %2002 = vmatpush1.bf16.xpose.msra.mxu0 0
          %2003 = vmatprep.subr.bf16.mxu0 0
          %2004 = vmatpush1.bf16.xpose.msra.mxu0 0
          %2005 = vmatprep.subr.bf16.mxu0 0
          %2006 = vmatpush1.bf16.xpose.msra.mxu0 0
          %2007 = vmatprep.subr.bf16.mxu0 0
          %2008 = vmatpush1.bf16.xpose.msra.mxu0 0
          %2009 = vmatprep.subr.bf16.mxu0 0
          %2010 = vmatpush1.bf16.xpose.msra.mxu0 0
          %2011 = vmatprep.subr.bf16.mxu0 0
          %2012 = vmatpush1.bf16.xpose.msra.mxu0 0
          %2013 = vmatprep.subr.bf16.mxu0 0
          %2014 = vmatpush1.bf16.xpose.msra.mxu0 0
          %2015 = vmatprep.subr.bf16.mxu0 0
          %2016 = vmatpush1.bf16.xpose.msra.mxu0 0
          %2017 = vmatprep.subr.bf16.mxu0 0
          %2018 = vmatpush1.bf16.xpose.msra.mxu0 0
          %2019 = vmatprep.subr.bf16.mxu0 0
          %2020 = vmatpush1.bf16.xpose.msra.mxu0 0
          %2021 = vmatprep.mubr.bf16.mxu0 0
          %2022 = vmatmul.mubr.bf16.gmra.mrb[0].mxu0 %v1984
          %v2023 = vpop.f32.mrb[0].mxu0
          %v2024 = vadd.f32 0.0, %v2023
          %v2025 = vpop.f32.mrb[0].mxu0
          %v2026 = vpop.f32.mrb[0].mxu0
          %v2027 = vpop.f32.mrb[0].mxu0
          %2028 = vdwg.mxu0
          %v2029 = vmul.f32 %v2024, 0.35355338
          %v2030 = vsel %vm925, %v2029, -inf
          %2031 = vmax.xlane.f32.xlu0 %v2030
          %v2032 = vpop.xlane.xlu0 %2031
          %v2033 = vsub.f32 %v2029, %v2032
          %v2034 = vmul.f32 %v2033, 1.442695
          %v2035 = vpow.pop %v2034
          %v2036 = vsel %vm925, %v2035, 0.0
          %2037 = vadd.xlane.f32.xlu0 %v2036
          %v2038 = vpop.xlane.xlu0 %2037
          %v2039 = vrcp.pop %v2038
          %v2040 = vmul.f32 %v2035, %v2039
          %v2041 = vpack.c.bf16 %v2040, %v2040
          %v2042 = vpack.c.bf16 %v1976, %v1976
          %v2044 = vsel %vm925, %v2041, 0
          %v2047 = vsel %vm989, %v2042, 0
          %2049 = vmatprep.subr.bf16.mxu0 0
          %2050 = vmatpush1.bf16.msra.mxu0 %v2047
          %2051 = vmatprep.subr.bf16.mxu0 0
          %2052 = vmatpush1.bf16.msra.mxu0 0
          %2053 = vmatprep.subr.bf16.mxu0 0
          %2054 = vmatpush1.bf16.msra.mxu0 0
          %2055 = vmatprep.subr.bf16.mxu0 0
          %2056 = vmatpush1.bf16.msra.mxu0 0
          %2057 = vmatprep.subr.bf16.mxu0 0
          %2058 = vmatpush1.bf16.msra.mxu0 0
          %2059 = vmatprep.subr.bf16.mxu0 0
          %2060 = vmatpush1.bf16.msra.mxu0 0
          %2061 = vmatprep.subr.bf16.mxu0 0
          %2062 = vmatpush1.bf16.msra.mxu0 0
          %2063 = vmatprep.subr.bf16.mxu0 0
          %2064 = vmatpush1.bf16.msra.mxu0 0
          %2065 = vmatprep.subr.bf16.mxu0 0
          %2066 = vmatpush1.bf16.msra.mxu0 0
          %2067 = vmatprep.subr.bf16.mxu0 0
          %2068 = vmatpush1.bf16.msra.mxu0 0
          %2069 = vmatprep.subr.bf16.mxu0 0
          %2070 = vmatpush1.bf16.msra.mxu0 0
          %2071 = vmatprep.subr.bf16.mxu0 0
          %2072 = vmatpush1.bf16.msra.mxu0 0
          %2073 = vmatprep.subr.bf16.mxu0 0
          %2074 = vmatpush1.bf16.msra.mxu0 0
          %2075 = vmatprep.subr.bf16.mxu0 0
          %2076 = vmatpush1.bf16.msra.mxu0 0
          %2077 = vmatprep.subr.bf16.mxu0 0
          %2078 = vmatpush1.bf16.msra.mxu0 0
          %2079 = vmatprep.subr.bf16.mxu0 0
          %2080 = vmatpush1.bf16.msra.mxu0 0
          %2081 = vmatprep.mubr.bf16.mxu0 0
          %2082 = vmatmul.mubr.bf16.gmra.mrb[0].mxu0 %v2044
          %v2083 = vpop.f32.mrb[0].mxu0
          %v2084 = vadd.f32 0.0, %v2083
          %v2085 = vpop.f32.mrb[0].mxu0
          %v2086 = vpop.f32.mrb[0].mxu0
          %v2087 = vpop.f32.mrb[0].mxu0
          %2088 = vdwg.mxu0
          %v2089 = vpack.c.bf16 %v2084, %v2084
          %s2090 = scalar_lea.vmem %s10, 12
          %v2091 = vld [vmem:[%s2090] sm:$0xf]
          %v2093 = vsel %vm925, %v2089, 0
          %v2096 = vsel %vm989, %v2091, 0
          %2098 = vmatprep.subr.bf16.mxu0 0
          %2099 = vmatpush1.bf16.msra.mxu0 %v2096
          %2100 = vmatprep.subr.bf16.mxu0 0
          %2101 = vmatpush1.bf16.msra.mxu0 0
          %2102 = vmatprep.subr.bf16.mxu0 0
          %2103 = vmatpush1.bf16.msra.mxu0 0
          %2104 = vmatprep.subr.bf16.mxu0 0
          %2105 = vmatpush1.bf16.msra.mxu0 0
          %2106 = vmatprep.subr.bf16.mxu0 0
          %2107 = vmatpush1.bf16.msra.mxu0 0
          %2108 = vmatprep.subr.bf16.mxu0 0
          %2109 = vmatpush1.bf16.msra.mxu0 0
          %2110 = vmatprep.subr.bf16.mxu0 0
          %2111 = vmatpush1.bf16.msra.mxu0 0
          %2112 = vmatprep.subr.bf16.mxu0 0
          %2113 = vmatpush1.bf16.msra.mxu0 0
          %2114 = vmatprep.subr.bf16.mxu0 0
          %2115 = vmatpush1.bf16.msra.mxu0 0
          %2116 = vmatprep.subr.bf16.mxu0 0
          %2117 = vmatpush1.bf16.msra.mxu0 0
          %2118 = vmatprep.subr.bf16.mxu0 0
          %2119 = vmatpush1.bf16.msra.mxu0 0
          %2120 = vmatprep.subr.bf16.mxu0 0
          %2121 = vmatpush1.bf16.msra.mxu0 0
          %2122 = vmatprep.subr.bf16.mxu0 0
          %2123 = vmatpush1.bf16.msra.mxu0 0
          %2124 = vmatprep.subr.bf16.mxu0 0
          %2125 = vmatpush1.bf16.msra.mxu0 0
          %2126 = vmatprep.subr.bf16.mxu0 0
          %2127 = vmatpush1.bf16.msra.mxu0 0
          %2128 = vmatprep.subr.bf16.mxu0 0
          %2129 = vmatpush1.bf16.msra.mxu0 0
          %2130 = vmatprep.mubr.bf16.mxu0 0
          %2131 = vmatmul.mubr.bf16.gmra.mrb[0].mxu0 %v2093
          %v2132 = vpop.f32.mrb[0].mxu0
          %v2133 = vadd.f32 0.0, %v2132
          %v2134 = vpop.f32.mrb[0].mxu0
          %v2135 = vpop.f32.mrb[0].mxu0
          %v2136 = vpop.f32.mrb[0].mxu0
          %2137 = vdwg.mxu0
          %v2138 = vadd.f32 %v1785, %v2133
          %v2139 = vld [vmem:[%s11] sm:$0x1]
          %v2141 = vlaneseq
          %v2142 = vshrl.u32 %v2141, 7
          %v2143 = vsub.s32 0, %v2142
          %v2144 = vrot.slane %v2139, %v2143
          %v2146 = vadd.f32 %v2138, %v2144
          %v2147 = vadd.f32 %v678, %v2146
          %2148 = vst.msk [vmem:[#allocation2] sm:$0xff] %vm682, %v2147
          %v2149 = vld [vmem:[%s12] sm:$0x1]
          %v2150 = vld [vmem:[%s13] sm:$0x1]
          %v2151 = vsel %vm682, %v2147, 0.0
          %2152 = vadd.xlane.f32.xlu0 %v2151
          %v2153 = vpop.xlane.xlu0 %2152
          %v2154 = vmul.f32 %v2153, %v686
          %v2155 = vsub.f32 %v2147, %v2154
          %v2156 = vmul.f32 %v2155, %v2155
          %v2157 = vsel %vm682, %v2156, 0.0
          %2158 = vadd.xlane.f32.xlu0 %v2157
          %v2159 = vpop.xlane.xlu0 %2158
          %v2160 = vmul.f32 %v2159, %v686
          %v2161 = vadd.f32 %v2160, 1e-05
          %v2162 = vrsqrt.pop %v2161
          %v2163 = vmul.f32 %v2155, %v2162
          %v2165 = vlaneseq
          %v2166 = vshrl.u32 %v2165, 7
          %v2167 = vsub.s32 0, %v2166
          %v2168 = vrot.slane %v2149, %v2167
          %v2170 = vmul.f32 %v2163, %v2168
          %v2172 = vlaneseq
          %v2173 = vshrl.u32 %v2172, 7
          %v2174 = vsub.s32 0, %v2173
          %v2175 = vrot.slane %v2150, %v2174
          %v2177 = vadd.f32 %v2170, %v2175
          %v2178 = vpack.c.bf16 %v2177, %v2177
          %vm2179 = vcmask 257024
          %2180 = vst.msk [vmem:[#allocation3] sm:$0xf] %vm2179, %v2178
          %2181 = vst.msk [vmem:[#allocation4] sm:$0xff] %vm682, 0.0
        $region96: #{tpu_custom_call.1} parent=91 // pred_fallthru
          _
        %v2182 = vld [vmem:[#allocation3] sm:$0xf]
        %v2183 = vld [vmem:[%s663] sm:$0xf]
        %v2184 = vld [vmem:[%s663 + $0x4] sm:$0xf]
        %v2185 = vld [vmem:[%s663 + $0x8] sm:$0xf]
        %v2186 = vld [vmem:[%s663 + $0xc] sm:$0xf]
        %v2187 = vld [vmem:[%s666] sm:$0x1]
        %v2189 = vlaneseq
        %v2190 = vshrl.u32 %v2189, 7
        %v2191 = vsub.s32 0, %v2190
        %v2192 = vrot.slane %v2187, %v2191
        %v2198 = vunpack.c.l.b16 %v2183
        %v2199 = vunpack.c.l.b16 %v2184
        %v2200 = vunpack.c.l.b16 %v2185
        %v2201 = vunpack.c.l.b16 %v2186
        %v2202 = vpack.c.b16 %v2199, %v2198
        %v2203 = vpack.c.b16 %v2201, %v2200
        %vm2206 = vcmask 261120
        %v2208 = vsel %vm2206, %v2182, 0
        %2210 = vmatprep.subr.bf16.mxu0 0
        %2211 = vmatpush1.bf16.msra.mxu0 %v2202
        %2212 = vmatprep.subr.bf16.mxu0 0
        %2213 = vmatpush1.bf16.msra.mxu0 %v2203
        %2214 = vmatprep.subr.bf16.mxu0 0
        %2215 = vmatpush1.bf16.msra.mxu0 0
        %2216 = vmatprep.subr.bf16.mxu0 0
        %2217 = vmatpush1.bf16.msra.mxu0 0
        %2218 = vmatprep.subr.bf16.mxu0 0
        %2219 = vmatpush1.bf16.msra.mxu0 0
        %2220 = vmatprep.subr.bf16.mxu0 0
        %2221 = vmatpush1.bf16.msra.mxu0 0
        %2222 = vmatprep.subr.bf16.mxu0 0
        %2223 = vmatpush1.bf16.msra.mxu0 0
        %2224 = vmatprep.subr.bf16.mxu0 0
        %2225 = vmatpush1.bf16.msra.mxu0 0
        %2226 = vmatprep.subr.bf16.mxu0 0
        %2227 = vmatpush1.bf16.msra.mxu0 0
        %2228 = vmatprep.subr.bf16.mxu0 0
        %2229 = vmatpush1.bf16.msra.mxu0 0
        %2230 = vmatprep.subr.bf16.mxu0 0
        %2231 = vmatpush1.bf16.msra.mxu0 0
        %2232 = vmatprep.subr.bf16.mxu0 0
        %2233 = vmatpush1.bf16.msra.mxu0 0
        %2234 = vmatprep.subr.bf16.mxu0 0
        %2235 = vmatpush1.bf16.msra.mxu0 0
        %2236 = vmatprep.subr.bf16.mxu0 0
        %2237 = vmatpush1.bf16.msra.mxu0 0
        %2238 = vmatprep.subr.bf16.mxu0 0
        %2239 = vmatpush1.bf16.msra.mxu0 0
        %2240 = vmatprep.subr.bf16.mxu0 0
        %2241 = vmatpush1.bf16.msra.mxu0 0
        %2242 = vmatprep.mubr.bf16.mxu0 0
        %2243 = vmatmul.mubr.bf16.gmra.mrb[0].mxu0 %v2208
        %v2244 = vpop.f32.mrb[0].mxu0
        %v2245 = vadd.f32 %v2192, %v2244
        %v2246 = vpop.f32.mrb[0].mxu0
        %v2247 = vpop.f32.mrb[0].mxu0
        %v2248 = vpop.f32.mrb[0].mxu0
        %2249 = vdwg.mxu0
        %v2250 = vmul.f32 %v2245, 0.5
        %v2251 = vmul.f32 %v2245, 0.70710677
        %v2252 = verf.f32.pop %v2251
        %v2253 = vadd.f32 %v2252, 1.0
        %v2254 = vmul.f32 %v2250, %v2253
        %v2255 = vld [vmem:[#allocation4] sm:$0xff]
        %v2256 = vpack.c.bf16 %v2254, %v2254
        %v2257 = vld [vmem:[%s671] sm:$0xf]
        %v2258 = vld [vmem:[%s671 + $0x4] sm:$0xf]
        %v2259 = vld [vmem:[%s671 + $0x8] sm:$0xf]
        %v2260 = vld [vmem:[%s671 + $0xc] sm:$0xf]
        %v2261 = vld [vmem:[%s671 + $0x10] sm:$0xf]
        %v2262 = vld [vmem:[%s671 + $0x14] sm:$0xf]
        %v2263 = vld [vmem:[%s671 + $0x18] sm:$0xf]
        %v2264 = vld [vmem:[%s671 + $0x1c] sm:$0xf]
        %v2273 = vunpack.c.l.b16 %v2257
        %v2274 = vunpack.c.l.b16 %v2258
        %v2275 = vunpack.c.l.b16 %v2259
        %v2276 = vunpack.c.l.b16 %v2260
        %v2277 = vunpack.c.l.b16 %v2261
        %v2278 = vunpack.c.l.b16 %v2262
        %v2279 = vunpack.c.l.b16 %v2263
        %v2280 = vunpack.c.l.b16 %v2264
        %v2281 = vpack.c.b16 %v2274, %v2273
        %v2282 = vpack.c.b16 %v2276, %v2275
        %v2283 = vpack.c.b16 %v2278, %v2277
        %v2284 = vpack.c.b16 %v2280, %v2279
        %vm2289 = vcmask 523264
        %v2291 = vsel %vm2289, %v2256, 0
        %2293 = vmatprep.subr.bf16.mxu0 0
        %2294 = vmatpush1.bf16.msra.mxu0 %v2281
        %2295 = vmatprep.subr.bf16.mxu0 0
        %2296 = vmatpush1.bf16.msra.mxu0 %v2282
        %2297 = vmatprep.subr.bf16.mxu0 0
        %2298 = vmatpush1.bf16.msra.mxu0 %v2283
        %2299 = vmatprep.subr.bf16.mxu0 0
        %2300 = vmatpush1.bf16.msra.mxu0 %v2284
        %2301 = vmatprep.subr.bf16.mxu0 0
        %2302 = vmatpush1.bf16.msra.mxu0 0
        %2303 = vmatprep.subr.bf16.mxu0 0
        %2304 = vmatpush1.bf16.msra.mxu0 0
        %2305 = vmatprep.subr.bf16.mxu0 0
        %2306 = vmatpush1.bf16.msra.mxu0 0
        %2307 = vmatprep.subr.bf16.mxu0 0
        %2308 = vmatpush1.bf16.msra.mxu0 0
        %2309 = vmatprep.subr.bf16.mxu0 0
        %2310 = vmatpush1.bf16.msra.mxu0 0
        %2311 = vmatprep.subr.bf16.mxu0 0
        %2312 = vmatpush1.bf16.msra.mxu0 0
        %2313 = vmatprep.subr.bf16.mxu0 0
        %2314 = vmatpush1.bf16.msra.mxu0 0
        %2315 = vmatprep.subr.bf16.mxu0 0
        %2316 = vmatpush1.bf16.msra.mxu0 0
        %2317 = vmatprep.subr.bf16.mxu0 0
        %2318 = vmatpush1.bf16.msra.mxu0 0
        %2319 = vmatprep.subr.bf16.mxu0 0
        %2320 = vmatpush1.bf16.msra.mxu0 0
        %2321 = vmatprep.subr.bf16.mxu0 0
        %2322 = vmatpush1.bf16.msra.mxu0 0
        %2323 = vmatprep.subr.bf16.mxu0 0
        %2324 = vmatpush1.bf16.msra.mxu0 0
        %2325 = vmatprep.mubr.bf16.mxu0 0
        %2326 = vmatmul.mubr.bf16.gmra.mrb[0].mxu0 %v2291
        %v2327 = vpop.f32.mrb[0].mxu0
        %v2328 = vadd.f32 0.0, %v2327
        %v2329 = vpop.f32.mrb[0].mxu0
        %v2330 = vpop.f32.mrb[0].mxu0
        %v2331 = vpop.f32.mrb[0].mxu0
        %2332 = vdwg.mxu0
        %v2333 = vadd.f32 %v2255, %v2328
        %2334 = vst.msk [vmem:[#allocation4] sm:$0xff] %vm2206, %v2333
        // Predicated region
        $region97: #{tpu_custom_call.1} parent=91 // pred_check
          %p2335 = pneg %p674
        $region98: #{tpu_custom_call.1} parent=91 // pred_check_branch
          %2337 = sbr.rel (%p2335) target = $region100
        $region99: #{tpu_custom_call.1} parent=91 // pred_region
          %v2338 = vld [vmem:[#allocation2] sm:$0xff]
          %v2339 = vld [vmem:[#allocation4] sm:$0xff]
          %v2340 = vadd.f32 %v2338, %v2339
          %v2341 = vld [vmem:[%s17] sm:$0x1]
          %v2343 = vlaneseq
          %v2344 = vshrl.u32 %v2343, 7
          %v2345 = vsub.s32 0, %v2344
          %v2346 = vrot.slane %v2341, %v2345
          %v2348 = vadd.f32 %v2340, %v2346
          %2349 = vst.msk [vmem:[%s648] sm:$0xff] %vm2206, %v2348
        $region100: #{tpu_custom_call.1} parent=91 // pred_fallthru
          _
        %s2350 = sand.u32 %s466, 1
        %s2351 = scalar_lea.sflag [#allocation6], %s2350
        %s2352 = sand.u32 %s466, 1
        %s2353 = smul.addr %s2352, 8
        %s2354 = scalar_lea.vmem [#allocation5], %s2353
        // Predicated region
        $region101: #{tpu_custom_call.1} parent=91 // pred_check
          %p2355 = pneg %p476
        $region102: #{tpu_custom_call.1} parent=91 // pred_check_branch
          %2357 = sbr.rel (%p2355) target = $region104
        $region103: #{tpu_custom_call.1} parent=91 // pred_region
          %s2359 = ssub.s32 128, 128
          %2360 = vsyncadd %s2351, %s2359
          %s2361 = sadd.s32 %s38, %s37
          %s2362 = smul.addr %s2361, 128
          %s2363 = scalar_lea.hbm %s18, %s2362
          %s2365 = sshll.u32 %s2354, 4
          %s2366 = int_to_ptr.vmem [resolvable:$true] %s2365
          %2368 = dma.vmem_to_hbm [thread:$0]  %s2366, 128, %s2363, %s2351
        $region104: #{tpu_custom_call.1} parent=91 // pred_fallthru
          _
      $region92: #{tpu_custom_call.1} parent=5 // pred_fallthru
        _
      %p2369 = scmp.le.s32.totalorder 2, %s27
      // Predicated region
      $region105: #{tpu_custom_call.1} parent=5 // pred_check
        %p2370 = pneg %p2369
      $region106: #{tpu_custom_call.1} parent=5 // pred_check_branch
        %2372 = sbr.rel (%p2370) target = $region108
      $region107: #{tpu_custom_call.1} parent=5 // pred_region
        %s2373 = ssub.s32 %s27, 2
        // Predicated region
        $region109: #{tpu_custom_call.1} parent=107 // pred_check
          %p2374 = pneg %p482
        $region110: #{tpu_custom_call.1} parent=107 // pred_check_branch
          %2376 = sbr.rel (%p2374) target = $region112
        $region111: #{tpu_custom_call.1} parent=107 // pred_region
          %s2377 = sand.u32 %s467, 1
          %s2378 = scalar_lea.sflag [#allocation6], %s2377
          %s2379 = sand.u32 %s467, 1
          %s2380 = smul.addr %s2379, 8
          %s2381 = scalar_lea.vmem [#allocation5], %s2380
          %2382 = dma.done %s2378, 128
        $region112: #{tpu_custom_call.1} parent=107 // pred_fallthru
          _
      $region108: #{tpu_custom_call.1} parent=5 // pred_fallthru
        _
    $region6: #{tpu_custom_call.1} parent=1 // loop_footer
      %s31 = sadd.s32 1, %s27
    $region7: #{tpu_custom_call.1} parent=1 // loop_footer_branch
      %26 = sbr.rel target = $region3
    $region8: #{tpu_custom_call.1} parent=1 // loop_exit
      _
    %2383 = vsyncpa [#allocation6], 1
    %s2384 = scalar_lea.sflag [#allocation6], 1
    %2385 = vsyncpa %s2384, 1

</llo_original>
